<compile_context>
chip_gen: v7x
topology: tpu7x:2x2x1
jax: 0.10.0
libtpu: 0.0.40
codegen_flags: <defaults>
</compile_context>

<pallas_src>
import jax
import jax.numpy as jnp
from jax.experimental import pallas as pl
from jax.experimental.pallas import tpu as pltpu


def bottleneck_kernel(x_ref, w1_ref, s1_ref, b1_ref,
                      w2_ref, s2_ref, b2_ref,
                      w3_ref, s3_ref, b3_ref,
                      fw1_ref, fb1_ref, fw2_ref, fb2_ref,
                      o_ref, pad_ref):
    _, H, W, Cin = x_ref.shape
    P = w1_ref.shape[1]            # planes
    C4 = w3_ref.shape[1]           # planes * 4 (== Cin for the residual add)
    N = H * W

    # ---- conv1 (1x1, no bias) + bn1 + relu ----  bf16 MXU, f32 accumulate.
    x2d = x_ref[0].reshape(N, Cin).astype(jnp.bfloat16)
    h1 = jnp.dot(x2d, w1_ref[...], preferred_element_type=jnp.float32)
    h1 = jnp.maximum(h1 * s1_ref[...] + b1_ref[...], 0.0)            # (N, P)

    # ---- conv2 (3x3, stride=1, pad=1, no bias) + bn2 + relu ----
    # Zero only the 1-pixel halo of the padded scratch, store the interior,
    # then build the im2col matrix and do ONE (N, 9P) @ (9P, P) MXU matmul.
    pad_ref[0:1, :, :] = jnp.zeros((1, W + 2, P), jnp.float32)
    pad_ref[H + 1:H + 2, :, :] = jnp.zeros((1, W + 2, P), jnp.float32)
    pad_ref[:, 0:1, :] = jnp.zeros((H + 2, 1, P), jnp.float32)
    pad_ref[:, W + 1:W + 2, :] = jnp.zeros((H + 2, 1, P), jnp.float32)
    pad_ref[1:H + 1, 1:W + 1, :] = h1.reshape(H, W, P)

    taps = [pad_ref[ky:ky + H, kx:kx + W, :]
            for ky in range(3) for kx in range(3)]
    patches = jnp.concatenate(taps, axis=-1).reshape(N, 9 * P)        # (N, 9P)
    h2 = jnp.dot(patches.astype(jnp.bfloat16), w2_ref[...],
                 preferred_element_type=jnp.float32)
    h2 = jnp.maximum(h2 * s2_ref[...] + b2_ref[...], 0.0)             # (N, P)

    # ---- conv3 (1x1, no bias) + bn3 ----
    h3 = jnp.dot(h2.astype(jnp.bfloat16), w3_ref[...],
                 preferred_element_type=jnp.float32)
    h3 = h3 * s3_ref[...] + b3_ref[...]                               # (N, C4)

    # ---- SE block: global avg pool -> fc -> relu -> fc -> sigmoid ----
    pooled = jnp.mean(h3, axis=0, keepdims=True)                      # (1, C4)
    z = jnp.dot(pooled, fw1_ref[...], preferred_element_type=jnp.float32)
    z = jnp.maximum(z + fb1_ref[...], 0.0)                            # (1, R)
    g = jnp.dot(z, fw2_ref[...], preferred_element_type=jnp.float32)
    gate = jax.nn.sigmoid(g + fb2_ref[...])                           # (1, C4)

    # ---- gate * out + residual, final relu ----
    # Re-read x here (instead of keeping it live across the whole body).
    res = x_ref[0].reshape(N, Cin)
    out = jnp.maximum(h3 * gate + res, 0.0)
    o_ref[...] = out.reshape(1, H, W, C4).astype(o_ref.dtype)


def bottleneck_forward(x_nchw, params):
    x = jnp.transpose(x_nchw, (0, 2, 3, 1)).astype(jnp.float32)   # NCHW -> NHWC
    B, H, W, Cin = x.shape
    P = params["w1"].shape[1]
    C4 = params["w3"].shape[1]
    R = params["fw1"].shape[1]
    assert Cin == C4, "downsample=None requires inplanes == planes * 4"

    weight_args = (params["w1"], params["s1"], params["b1"],
                   params["w2"], params["s2"], params["b2"],
                   params["w3"], params["s3"], params["b3"],
                   params["fw1"], params["fb1"], params["fw2"], params["fb2"])

    in_specs = [pl.BlockSpec((1, H, W, Cin), lambda b: (b, 0, 0, 0))]
    # Weights: full-array blocks with constant index_maps -> VMEM-resident,
    # fetched once, not re-DMA'd per grid step.
    in_specs += [pl.BlockSpec(w.shape, lambda b, nd=w.ndim: (0,) * nd)
                 for w in weight_args]

    N = H * W
    flops = int(B * (2 * N * Cin * P            # conv1
                     + 2 * N * 9 * P * P        # conv2 (im2col)
                     + 2 * N * P * C4           # conv3
                     + 2 * C4 * R + 2 * R * C4  # SE fc layers
                     + 4 * N * C4))             # bn/gate/residual/relu
    bytes_accessed = int(x.size * x.dtype.itemsize
                         + B * H * W * C4 * 4
                         + sum(int(w.size) * w.dtype.itemsize
                               for w in weight_args))
    cost = pl.CostEstimate(flops=flops,
                           transcendentals=int(B * C4),
                           bytes_accessed=bytes_accessed)

    out = pl.pallas_call(
        bottleneck_kernel,
        out_shape=jax.ShapeDtypeStruct((B, H, W, C4), jnp.float32),
        grid=(B,),
        in_specs=in_specs,
        out_specs=pl.BlockSpec((1, H, W, C4), lambda b: (b, 0, 0, 0)),
        scratch_shapes=[pltpu.VMEM((H + 2, W + 2, P), jnp.float32)],
        compiler_params=pltpu.CompilerParams(
            # Batch axis is independent -> shard across v7x's two TensorCores.
            dimension_semantics=("parallel",),
            # Fits v7x's 64 MiB VMEM with headroom; raises v5e's 16 MiB default.
            vmem_limit_bytes=48 * 1024 * 1024),
        cost_estimate=cost,
    )(x, *weight_args)
    return jnp.transpose(out, (0, 3, 1, 2))   # NHWC -> NCHW


def make_params(key, inplanes, planes, reduction):
    """Deterministic synthetic parameters, built in PyTorch layouts then
    transposed / cast into the kernel's MXU-friendly (bf16) layouts."""
    c4 = planes * 4
    ks = jax.random.split(key, 10)
    conv1_w = 0.05 * jax.random.normal(ks[0], (planes, inplanes, 1, 1), jnp.float32)
    conv2_w = 0.05 * jax.random.normal(ks[1], (planes, planes, 3, 3), jnp.float32)
    conv3_w = 0.05 * jax.random.normal(ks[2], (c4, planes, 1, 1), jnp.float32)

    def bn_fold(k, c):
        k1, k2, k3, k4 = jax.random.split(k, 4)
        gamma = 1.0 + 0.1 * jax.random.normal(k1, (c,), jnp.float32)
        beta = 0.1 * jax.random.normal(k2, (c,), jnp.float32)
        mean = 0.1 * jax.random.normal(k3, (c,), jnp.float32)
        var = jnp.abs(jax.random.normal(k4, (c,), jnp.float32)) + 0.5
        scale = gamma / jnp.sqrt(var + 1e-5)
        shift = beta - mean * scale
        return scale.reshape(1, -1), shift.reshape(1, -1)

    s1, b1 = bn_fold(ks[3], planes)
    s2, b2 = bn_fold(ks[4], planes)
    s3, b3 = bn_fold(ks[5], c4)

    fc1_w = 0.05 * jax.random.normal(ks[6], (reduction, c4), jnp.float32)  # (out,in)
    fc1_b = 0.05 * jax.random.normal(ks[7], (reduction,), jnp.float32)
    fc2_w = 0.05 * jax.random.normal(ks[8], (c4, reduction), jnp.float32)
    fc2_b = 0.05 * jax.random.normal(ks[9], (c4,), jnp.float32)

    w2_im2col = (jnp.transpose(conv2_w, (2, 3, 1, 0))          # (ky, kx, Ci, Co)
                 .reshape(9 * planes, planes))                 # rows: ky-major, kx, Ci

    return {
        # conv weights in matmul layout, bf16 for the MXU (f32 accumulate).
        "w1": jnp.transpose(conv1_w[:, :, 0, 0]).astype(jnp.bfloat16),   # (Cin, P)
        "w2": w2_im2col.astype(jnp.bfloat16),                            # (9P, P)
        "w3": jnp.transpose(conv3_w[:, :, 0, 0]).astype(jnp.bfloat16),   # (P, 4P)
        "s1": s1, "b1": b1, "s2": s2, "b2": b2, "s3": s3, "b3": b3,
        "fw1": jnp.transpose(fc1_w), "fb1": fc1_b.reshape(1, -1),        # (4P, R), (1, R)
        "fw2": jnp.transpose(fc2_w), "fb2": fc2_b.reshape(1, -1),        # (R, 4P), (1, 4P)
    }


def reference_forward(x_nchw, params):
    """Pure-JAX f32 reference mirroring the PyTorch forward (eval-mode BN)."""
    w1 = params["w1"].astype(jnp.float32)
    w3 = params["w3"].astype(jnp.float32)
    P = w1.shape[1]
    w2 = params["w2"].astype(jnp.float32).reshape(3, 3, P, P)
    x = jnp.transpose(x_nchw, (0, 2, 3, 1))
    B, H, W, _ = x.shape
    h1 = jnp.maximum(jnp.einsum("bhwc,cp->bhwp", x, w1)
                     * params["s1"][0] + params["b1"][0], 0.0)
    h1p = jnp.pad(h1, ((0, 0), (1, 1), (1, 1), (0, 0)))
    acc = jnp.zeros((B, H, W, P), jnp.float32)
    for ky in range(3):
        for kx in range(3):
            acc = acc + jnp.einsum("bhwc,cp->bhwp",
                                   h1p[:, ky:ky + H, kx:kx + W, :], w2[ky, kx])
    h2 = jnp.maximum(acc * params["s2"][0] + params["b2"][0], 0.0)
    h3 = jnp.einsum("bhwc,cp->bhwp", h2, w3) * params["s3"][0] + params["b3"][0]
    pooled = jnp.mean(h3, axis=(1, 2))
    z = jnp.maximum(pooled @ params["fw1"] + params["fb1"][0], 0.0)
    gate = jax.nn.sigmoid(z @ params["fw2"] + params["fb2"][0])
    out = jnp.maximum(h3 * gate[:, None, None, :] + x, 0.0)
    return jnp.transpose(out, (0, 3, 1, 2))


if __name__ == "__main__":
    # Real-ResNet-like, lane-dense channels; inplanes == planes*4 (no downsample).
    B, planes, H, W, reduction = 2, 64, 16, 16, 16
    inplanes = planes * 4
    key = jax.random.PRNGKey(0)
    kx_, kp = jax.random.split(key)
    x = jax.random.normal(kx_, (B, inplanes, H, W), jnp.float32)   # NCHW, like PyTorch
    params = make_params(kp, inplanes, planes, reduction)

    out = jax.block_until_ready(bottleneck_forward(x, params))
    ref = reference_forward(x, params)

    assert out.shape == (B, planes * 4, H, W)
    assert bool(jnp.all(jnp.isfinite(out)))
    assert jnp.allclose(out, ref, atol=5e-2, rtol=5e-2)
    print("KERNEL_OK")
</pallas_src>

<mosaic_0001>
module attributes {stable_mosaic.version = 11 : i64} {
  func.func @bottleneck_kernel(%arg0: i32, %arg1: memref<1x16x16x256xf32, #tpu.memory_space<vmem>>, %arg2: memref<256x64xbf16, #tpu.memory_space<vmem>>, %arg3: memref<1x64xf32, #tpu.memory_space<vmem>>, %arg4: memref<1x64xf32, #tpu.memory_space<vmem>>, %arg5: memref<576x64xbf16, #tpu.memory_space<vmem>>, %arg6: memref<1x64xf32, #tpu.memory_space<vmem>>, %arg7: memref<1x64xf32, #tpu.memory_space<vmem>>, %arg8: memref<64x256xbf16, #tpu.memory_space<vmem>>, %arg9: memref<1x256xf32, #tpu.memory_space<vmem>>, %arg10: memref<1x256xf32, #tpu.memory_space<vmem>>, %arg11: memref<256x16xf32, #tpu.memory_space<vmem>>, %arg12: memref<1x16xf32, #tpu.memory_space<vmem>>, %arg13: memref<16x256xf32, #tpu.memory_space<vmem>>, %arg14: memref<1x256xf32, #tpu.memory_space<vmem>>, %arg15: memref<1x16x16x256xf32, #tpu.memory_space<vmem>>, %arg16: memref<18x18x64xf32, #tpu.memory_space<vmem>>) attributes {dimension_semantics = [#tpu.dimension_semantics<parallel>], iteration_bounds = array<i64: 2>, scalar_prefetch = 0 : i64, scratch_operands = 1 : i64, tpu.core_type = #tpu.core_type<tc>, window_params = [{transform_indices = @transform_0, window_bounds = array<i64: 1, 16, 16, 256>}, {pipeline_mode = #tpu.pipeline_mode<synchronous>, transform_indices = @transform_1, window_bounds = array<i64: 256, 64>}, {pipeline_mode = #tpu.pipeline_mode<synchronous>, transform_indices = @transform_2, window_bounds = array<i64: 1, 64>}, {pipeline_mode = #tpu.pipeline_mode<synchronous>, transform_indices = @transform_3, window_bounds = array<i64: 1, 64>}, {pipeline_mode = #tpu.pipeline_mode<synchronous>, transform_indices = @transform_4, window_bounds = array<i64: 576, 64>}, {pipeline_mode = #tpu.pipeline_mode<synchronous>, transform_indices = @transform_5, window_bounds = array<i64: 1, 64>}, {pipeline_mode = #tpu.pipeline_mode<synchronous>, transform_indices = @transform_6, window_bounds = array<i64: 1, 64>}, {pipeline_mode = #tpu.pipeline_mode<synchronous>, transform_indices = @transform_7, window_bounds = array<i64: 64, 256>}, {pipeline_mode = #tpu.pipeline_mode<synchronous>, transform_indices = @transform_8, window_bounds = array<i64: 1, 256>}, {pipeline_mode = #tpu.pipeline_mode<synchronous>, transform_indices = @transform_9, window_bounds = array<i64: 1, 256>}, {pipeline_mode = #tpu.pipeline_mode<synchronous>, transform_indices = @transform_10, window_bounds = array<i64: 256, 16>}, {pipeline_mode = #tpu.pipeline_mode<synchronous>, transform_indices = @transform_11, window_bounds = array<i64: 1, 16>}, {pipeline_mode = #tpu.pipeline_mode<synchronous>, transform_indices = @transform_12, window_bounds = array<i64: 16, 256>}, {pipeline_mode = #tpu.pipeline_mode<synchronous>, transform_indices = @transform_13, window_bounds = array<i64: 1, 256>}, {transform_indices = @transform_14, window_bounds = array<i64: 1, 16, 16, 256>}]} {
    %c0 = arith.constant 0 : index
    %c0_0 = arith.constant 0 : index
    %c0_1 = arith.constant 0 : index
    %c0_2 = arith.constant 0 : index
    %0 = vector.load %arg1[%c0, %c0_0, %c0_1, %c0_2] : memref<1x16x16x256xf32, #tpu.memory_space<vmem>>, vector<1x16x16x256xf32>
    %1 = vector.shape_cast %0 : vector<1x16x16x256xf32> to vector<16x16x256xf32>
    %2 = vector.shape_cast %1 : vector<16x16x256xf32> to vector<256x256xf32>
    %3 = arith.truncf %2 : vector<256x256xf32> to vector<256x256xbf16>
    %c0_3 = arith.constant 0 : index
    %c0_4 = arith.constant 0 : index
    %4 = vector.load %arg2[%c0_3, %c0_4] : memref<256x64xbf16, #tpu.memory_space<vmem>>, vector<256x64xbf16>
    %cst = arith.constant dense<0.000000e+00> : vector<256x64xf32>
    %5 = tpu.matmul %3, %4, %cst {dimension_numbers = #tpu.dot_dimension_numbers<[1], [0], [0], [1], [0, 0, 1, 1], [], []>} : vector<256x256xbf16>, vector<256x64xbf16>, vector<256x64xf32> -> vector<256x64xf32>
    %c0_5 = arith.constant 0 : index
    %c0_6 = arith.constant 0 : index
    %6 = vector.load %arg3[%c0_5, %c0_6] : memref<1x64xf32, #tpu.memory_space<vmem>>, vector<1x64xf32>
    %7 = vector.broadcast %6 : vector<1x64xf32> to vector<256x64xf32>
    %8 = arith.mulf %5, %7 : vector<256x64xf32>
    %c0_7 = arith.constant 0 : index
    %c0_8 = arith.constant 0 : index
    %9 = vector.load %arg4[%c0_7, %c0_8] : memref<1x64xf32, #tpu.memory_space<vmem>>, vector<1x64xf32>
    %10 = vector.broadcast %9 : vector<1x64xf32> to vector<256x64xf32>
    %11 = arith.addf %8, %10 : vector<256x64xf32>
    %cst_9 = arith.constant 0.000000e+00 : f32
    %12 = vector.broadcast %cst_9 : f32 to vector<256x64xf32>
    %13 = arith.maximumf %11, %12 : vector<256x64xf32>
    %cst_10 = arith.constant 0.000000e+00 : f32
    %14 = vector.broadcast %cst_10 : f32 to vector<1x18x64xf32>
    %c0_11 = arith.constant 0 : index
    %c0_12 = arith.constant 0 : index
    %c0_13 = arith.constant 0 : index
    %15 = vector.load %arg16[%c0_11, %c0_12, %c0_13] : memref<18x18x64xf32, #tpu.memory_space<vmem>>, vector<1x18x64xf32>
    tpu.vector_store %arg16[%c0_11, %c0_12, %c0_13], %14 {strides = array<i32>} : memref<18x18x64xf32, #tpu.memory_space<vmem>>, vector<1x18x64xf32>,
    %cst_14 = arith.constant 0.000000e+00 : f32
    %16 = vector.broadcast %cst_14 : f32 to vector<1x18x64xf32>
    %c17 = arith.constant 17 : index
    %c0_15 = arith.constant 0 : index
    %c0_16 = arith.constant 0 : index
    %17 = vector.load %arg16[%c17, %c0_15, %c0_16] : memref<18x18x64xf32, #tpu.memory_space<vmem>>, vector<1x18x64xf32>
    tpu.vector_store %arg16[%c17, %c0_15, %c0_16], %16 {strides = array<i32>} : memref<18x18x64xf32, #tpu.memory_space<vmem>>, vector<1x18x64xf32>,
    %cst_17 = arith.constant 0.000000e+00 : f32
    %18 = vector.broadcast %cst_17 : f32 to vector<18x1x64xf32>
    %c0_18 = arith.constant 0 : index
    %c0_19 = arith.constant 0 : index
    %c0_20 = arith.constant 0 : index
    %19 = vector.load %arg16[%c0_18, %c0_19, %c0_20] : memref<18x18x64xf32, #tpu.memory_space<vmem>>, vector<18x1x64xf32>
    tpu.vector_store %arg16[%c0_18, %c0_19, %c0_20], %18 {strides = array<i32>} : memref<18x18x64xf32, #tpu.memory_space<vmem>>, vector<18x1x64xf32>,
    %cst_21 = arith.constant 0.000000e+00 : f32
    %20 = vector.broadcast %cst_21 : f32 to vector<18x1x64xf32>
    %c0_22 = arith.constant 0 : index
    %c17_23 = arith.constant 17 : index
    %c0_24 = arith.constant 0 : index
    %21 = vector.load %arg16[%c0_22, %c17_23, %c0_24] : memref<18x18x64xf32, #tpu.memory_space<vmem>>, vector<18x1x64xf32>
    tpu.vector_store %arg16[%c0_22, %c17_23, %c0_24], %20 {strides = array<i32>} : memref<18x18x64xf32, #tpu.memory_space<vmem>>, vector<18x1x64xf32>,
    %22 = vector.shape_cast %13 : vector<256x64xf32> to vector<16x16x64xf32>
    %c1 = arith.constant 1 : index
    %c1_25 = arith.constant 1 : index
    %c0_26 = arith.constant 0 : index
    %23 = vector.load %arg16[%c1, %c1_25, %c0_26] : memref<18x18x64xf32, #tpu.memory_space<vmem>>, vector<16x16x64xf32>
    tpu.vector_store %arg16[%c1, %c1_25, %c0_26], %22 {strides = array<i32>} : memref<18x18x64xf32, #tpu.memory_space<vmem>>, vector<16x16x64xf32>,
    %c0_27 = arith.constant 0 : index
    %c0_28 = arith.constant 0 : index
    %c0_29 = arith.constant 0 : index
    %24 = vector.load %arg16[%c0_27, %c0_28, %c0_29] : memref<18x18x64xf32, #tpu.memory_space<vmem>>, vector<16x16x64xf32>
    %c0_30 = arith.constant 0 : index
    %c1_31 = arith.constant 1 : index
    %c0_32 = arith.constant 0 : index
    %25 = vector.load %arg16[%c0_30, %c1_31, %c0_32] : memref<18x18x64xf32, #tpu.memory_space<vmem>>, vector<16x16x64xf32>
    %c0_33 = arith.constant 0 : index
    %c2 = arith.constant 2 : index
    %c0_34 = arith.constant 0 : index
    %26 = vector.load %arg16[%c0_33, %c2, %c0_34] : memref<18x18x64xf32, #tpu.memory_space<vmem>>, vector<16x16x64xf32>
    %c1_35 = arith.constant 1 : index
    %c0_36 = arith.constant 0 : index
    %c0_37 = arith.constant 0 : index
    %27 = vector.load %arg16[%c1_35, %c0_36, %c0_37] : memref<18x18x64xf32, #tpu.memory_space<vmem>>, vector<16x16x64xf32>
    %c1_38 = arith.constant 1 : index
    %c1_39 = arith.constant 1 : index
    %c0_40 = arith.constant 0 : index
    %28 = vector.load %arg16[%c1_38, %c1_39, %c0_40] : memref<18x18x64xf32, #tpu.memory_space<vmem>>, vector<16x16x64xf32>
    %c1_41 = arith.constant 1 : index
    %c2_42 = arith.constant 2 : index
    %c0_43 = arith.constant 0 : index
    %29 = vector.load %arg16[%c1_41, %c2_42, %c0_43] : memref<18x18x64xf32, #tpu.memory_space<vmem>>, vector<16x16x64xf32>
    %c2_44 = arith.constant 2 : index
    %c0_45 = arith.constant 0 : index
    %c0_46 = arith.constant 0 : index
    %30 = vector.load %arg16[%c2_44, %c0_45, %c0_46] : memref<18x18x64xf32, #tpu.memory_space<vmem>>, vector<16x16x64xf32>
    %c2_47 = arith.constant 2 : index
    %c1_48 = arith.constant 1 : index
    %c0_49 = arith.constant 0 : index
    %31 = vector.load %arg16[%c2_47, %c1_48, %c0_49] : memref<18x18x64xf32, #tpu.memory_space<vmem>>, vector<16x16x64xf32>
    %c2_50 = arith.constant 2 : index
    %c2_51 = arith.constant 2 : index
    %c0_52 = arith.constant 0 : index
    %32 = vector.load %arg16[%c2_50, %c2_51, %c0_52] : memref<18x18x64xf32, #tpu.memory_space<vmem>>, vector<16x16x64xf32>
    %33 = tpu.concatenate %24, %25, %26, %27, %28, %29, %30, %31, %32 in 2 : vector<16x16x64xf32>, vector<16x16x64xf32>, vector<16x16x64xf32>, vector<16x16x64xf32>, vector<16x16x64xf32>, vector<16x16x64xf32>, vector<16x16x64xf32>, vector<16x16x64xf32>, vector<16x16x64xf32> -> vector<16x16x576xf32>
    %34 = vector.shape_cast %33 : vector<16x16x576xf32> to vector<256x576xf32>
    %35 = arith.truncf %34 : vector<256x576xf32> to vector<256x576xbf16>
    %c0_53 = arith.constant 0 : index
    %c0_54 = arith.constant 0 : index
    %36 = vector.load %arg5[%c0_53, %c0_54] : memref<576x64xbf16, #tpu.memory_space<vmem>>, vector<576x64xbf16>
    %cst_55 = arith.constant dense<0.000000e+00> : vector<256x64xf32>
    %37 = tpu.matmul %35, %36, %cst_55 {dimension_numbers = #tpu.dot_dimension_numbers<[1], [0], [0], [1], [0, 0, 1, 1], [], []>} : vector<256x576xbf16>, vector<576x64xbf16>, vector<256x64xf32> -> vector<256x64xf32>
    %c0_56 = arith.constant 0 : index
    %c0_57 = arith.constant 0 : index
    %38 = vector.load %arg6[%c0_56, %c0_57] : memref<1x64xf32, #tpu.memory_space<vmem>>, vector<1x64xf32>
    %39 = vector.broadcast %38 : vector<1x64xf32> to vector<256x64xf32>
    %40 = arith.mulf %37, %39 : vector<256x64xf32>
    %c0_58 = arith.constant 0 : index
    %c0_59 = arith.constant 0 : index
    %41 = vector.load %arg7[%c0_58, %c0_59] : memref<1x64xf32, #tpu.memory_space<vmem>>, vector<1x64xf32>
    %42 = vector.broadcast %41 : vector<1x64xf32> to vector<256x64xf32>
    %43 = arith.addf %40, %42 : vector<256x64xf32>
    %cst_60 = arith.constant 0.000000e+00 : f32
    %44 = vector.broadcast %cst_60 : f32 to vector<256x64xf32>
    %45 = arith.maximumf %43, %44 : vector<256x64xf32>
    %46 = arith.truncf %45 : vector<256x64xf32> to vector<256x64xbf16>
    %c0_61 = arith.constant 0 : index
    %c0_62 = arith.constant 0 : index
    %47 = vector.load %arg8[%c0_61, %c0_62] : memref<64x256xbf16, #tpu.memory_space<vmem>>, vector<64x256xbf16>
    %cst_63 = arith.constant dense<0.000000e+00> : vector<256x256xf32>
    %48 = tpu.matmul %46, %47, %cst_63 {dimension_numbers = #tpu.dot_dimension_numbers<[1], [0], [0], [1], [0, 0, 1, 1], [], []>} : vector<256x64xbf16>, vector<64x256xbf16>, vector<256x256xf32> -> vector<256x256xf32>
    %c0_64 = arith.constant 0 : index
    %c0_65 = arith.constant 0 : index
    %49 = vector.load %arg9[%c0_64, %c0_65] : memref<1x256xf32, #tpu.memory_space<vmem>>, vector<1x256xf32>
    %50 = vector.broadcast %49 : vector<1x256xf32> to vector<256x256xf32>
    %51 = arith.mulf %48, %50 : vector<256x256xf32>
    %c0_66 = arith.constant 0 : index
    %c0_67 = arith.constant 0 : index
    %52 = vector.load %arg10[%c0_66, %c0_67] : memref<1x256xf32, #tpu.memory_space<vmem>>, vector<1x256xf32>
    %53 = vector.broadcast %52 : vector<1x256xf32> to vector<256x256xf32>
    %54 = arith.addf %51, %53 : vector<256x256xf32>
    %cst_68 = arith.constant dense<0.000000e+00> : vector<256xf32>
    %55 = vector.multi_reduction <add>, %54, %cst_68 [0] : vector<256x256xf32> to vector<256xf32>
    %56 = vector.shape_cast %55 : vector<256xf32> to vector<1x256xf32>
    %cst_69 = arith.constant 2.560000e+02 : f32
    %57 = vector.broadcast %cst_69 : f32 to vector<1x256xf32>
    %58 = arith.divf %56, %57 : vector<1x256xf32>
    %c0_70 = arith.constant 0 : index
    %c0_71 = arith.constant 0 : index
    %59 = vector.load %arg11[%c0_70, %c0_71] : memref<256x16xf32, #tpu.memory_space<vmem>>, vector<256x16xf32>
    %cst_72 = arith.constant dense<0.000000e+00> : vector<1x16xf32>
    %60 = tpu.matmul %58, %59, %cst_72 {dimension_numbers = #tpu.dot_dimension_numbers<[1], [0], [0], [1], [0, 0, 1, 1], [], []>} : vector<1x256xf32>, vector<256x16xf32>, vector<1x16xf32> -> vector<1x16xf32>
    %c0_73 = arith.constant 0 : index
    %c0_74 = arith.constant 0 : index
    %61 = vector.load %arg12[%c0_73, %c0_74] : memref<1x16xf32, #tpu.memory_space<vmem>>, vector<1x16xf32>
    %62 = arith.addf %60, %61 : vector<1x16xf32>
    %cst_75 = arith.constant 0.000000e+00 : f32
    %63 = vector.broadcast %cst_75 : f32 to vector<1x16xf32>
    %64 = arith.maximumf %62, %63 : vector<1x16xf32>
    %c0_76 = arith.constant 0 : index
    %c0_77 = arith.constant 0 : index
    %65 = vector.load %arg13[%c0_76, %c0_77] : memref<16x256xf32, #tpu.memory_space<vmem>>, vector<16x256xf32>
    %cst_78 = arith.constant dense<0.000000e+00> : vector<1x256xf32>
    %66 = tpu.matmul %64, %65, %cst_78 {dimension_numbers = #tpu.dot_dimension_numbers<[1], [0], [0], [1], [0, 0, 1, 1], [], []>} : vector<1x16xf32>, vector<16x256xf32>, vector<1x256xf32> -> vector<1x256xf32>
    %c0_79 = arith.constant 0 : index
    %c0_80 = arith.constant 0 : index
    %67 = vector.load %arg14[%c0_79, %c0_80] : memref<1x256xf32, #tpu.memory_space<vmem>>, vector<1x256xf32>
    %68 = arith.addf %66, %67 : vector<1x256xf32>
    %69 = arith.negf %68 : vector<1x256xf32>
    %70 = math.exp %69 : vector<1x256xf32>
    %cst_81 = arith.constant 1.000000e+00 : f32
    %71 = vector.broadcast %cst_81 : f32 to vector<1x256xf32>
    %72 = arith.addf %71, %70 : vector<1x256xf32>
    %73 = arith.divf %71, %72 : vector<1x256xf32>
    %c0_82 = arith.constant 0 : index
    %c0_83 = arith.constant 0 : index
    %c0_84 = arith.constant 0 : index
    %c0_85 = arith.constant 0 : index
    %74 = vector.load %arg1[%c0_82, %c0_83, %c0_84, %c0_85] : memref<1x16x16x256xf32, #tpu.memory_space<vmem>>, vector<1x16x16x256xf32>
    %75 = vector.shape_cast %74 : vector<1x16x16x256xf32> to vector<16x16x256xf32>
    %76 = vector.shape_cast %75 : vector<16x16x256xf32> to vector<256x256xf32>
    %77 = vector.broadcast %73 : vector<1x256xf32> to vector<256x256xf32>
    %78 = arith.mulf %54, %77 : vector<256x256xf32>
    %79 = arith.addf %78, %76 : vector<256x256xf32>
    %cst_86 = arith.constant 0.000000e+00 : f32
    %80 = vector.broadcast %cst_86 : f32 to vector<256x256xf32>
    %81 = arith.maximumf %79, %80 : vector<256x256xf32>
    %82 = vector.shape_cast %81 : vector<256x256xf32> to vector<1x16x16x256xf32>
    %c0_87 = arith.constant 0 : index
    %c0_88 = arith.constant 0 : index
    %c0_89 = arith.constant 0 : index
    %c0_90 = arith.constant 0 : index
    %83 = vector.load %arg15[%c0_87, %c0_88, %c0_89, %c0_90] : memref<1x16x16x256xf32, #tpu.memory_space<vmem>>, vector<1x16x16x256xf32>
    tpu.vector_store %arg15[%c0_87, %c0_88, %c0_89, %c0_90], %82 {strides = array<i32>} : memref<1x16x16x256xf32, #tpu.memory_space<vmem>>, vector<1x16x16x256xf32>,
    return
  }
  func.func @transform_0(%arg0: i32) -> (i32, i32, i32, i32) {
    %c0_i32 = arith.constant 0 : i32
    %c0_i32_0 = arith.constant 0 : i32
    %c0_i32_1 = arith.constant 0 : i32
    %c0_i32_2 = arith.constant 0 : i32
    return %arg0, %c0_i32, %c0_i32_0, %c0_i32_1 : i32, i32, i32, i32
  }
  func.func @transform_1(%arg0: i32) -> (i32, i32) {
    %c0_i32 = arith.constant 0 : i32
    %c0_i32_0 = arith.constant 0 : i32
    %c0_i32_1 = arith.constant 0 : i32
    return %c0_i32, %c0_i32_0 : i32, i32
  }
  func.func @transform_2(%arg0: i32) -> (i32, i32) {
    %c0_i32 = arith.constant 0 : i32
    %c0_i32_0 = arith.constant 0 : i32
    %c0_i32_1 = arith.constant 0 : i32
    return %c0_i32, %c0_i32_0 : i32, i32
  }
  func.func @transform_3(%arg0: i32) -> (i32, i32) {
    %c0_i32 = arith.constant 0 : i32
    %c0_i32_0 = arith.constant 0 : i32
    %c0_i32_1 = arith.constant 0 : i32
    return %c0_i32, %c0_i32_0 : i32, i32
  }
  func.func @transform_4(%arg0: i32) -> (i32, i32) {
    %c0_i32 = arith.constant 0 : i32
    %c0_i32_0 = arith.constant 0 : i32
    %c0_i32_1 = arith.constant 0 : i32
    return %c0_i32, %c0_i32_0 : i32, i32
  }
  func.func @transform_5(%arg0: i32) -> (i32, i32) {
    %c0_i32 = arith.constant 0 : i32
    %c0_i32_0 = arith.constant 0 : i32
    %c0_i32_1 = arith.constant 0 : i32
    return %c0_i32, %c0_i32_0 : i32, i32
  }
  func.func @transform_6(%arg0: i32) -> (i32, i32) {
    %c0_i32 = arith.constant 0 : i32
    %c0_i32_0 = arith.constant 0 : i32
    %c0_i32_1 = arith.constant 0 : i32
    return %c0_i32, %c0_i32_0 : i32, i32
  }
  func.func @transform_7(%arg0: i32) -> (i32, i32) {
    %c0_i32 = arith.constant 0 : i32
    %c0_i32_0 = arith.constant 0 : i32
    %c0_i32_1 = arith.constant 0 : i32
    return %c0_i32, %c0_i32_0 : i32, i32
  }
  func.func @transform_8(%arg0: i32) -> (i32, i32) {
    %c0_i32 = arith.constant 0 : i32
    %c0_i32_0 = arith.constant 0 : i32
    %c0_i32_1 = arith.constant 0 : i32
    return %c0_i32, %c0_i32_0 : i32, i32
  }
  func.func @transform_9(%arg0: i32) -> (i32, i32) {
    %c0_i32 = arith.constant 0 : i32
    %c0_i32_0 = arith.constant 0 : i32
    %c0_i32_1 = arith.constant 0 : i32
    return %c0_i32, %c0_i32_0 : i32, i32
  }
  func.func @transform_10(%arg0: i32) -> (i32, i32) {
    %c0_i32 = arith.constant 0 : i32
    %c0_i32_0 = arith.constant 0 : i32
    %c0_i32_1 = arith.constant 0 : i32
    return %c0_i32, %c0_i32_0 : i32, i32
  }
  func.func @transform_11(%arg0: i32) -> (i32, i32) {
    %c0_i32 = arith.constant 0 : i32
    %c0_i32_0 = arith.constant 0 : i32
    %c0_i32_1 = arith.constant 0 : i32
    return %c0_i32, %c0_i32_0 : i32, i32
  }
  func.func @transform_12(%arg0: i32) -> (i32, i32) {
    %c0_i32 = arith.constant 0 : i32
    %c0_i32_0 = arith.constant 0 : i32
    %c0_i32_1 = arith.constant 0 : i32
    return %c0_i32, %c0_i32_0 : i32, i32
  }
  func.func @transform_13(%arg0: i32) -> (i32, i32) {
    %c0_i32 = arith.constant 0 : i32
    %c0_i32_0 = arith.constant 0 : i32
    %c0_i32_1 = arith.constant 0 : i32
    return %c0_i32, %c0_i32_0 : i32, i32
  }
  func.func @transform_14(%arg0: i32) -> (i32, i32, i32, i32) {
    %c0_i32 = arith.constant 0 : i32
    %c0_i32_0 = arith.constant 0 : i32
    %c0_i32_1 = arith.constant 0 : i32
    %c0_i32_2 = arith.constant 0 : i32
    return %arg0, %c0_i32, %c0_i32_0, %c0_i32_1 : i32, i32, i32, i32
  }
}

</mosaic_0001>

<llo_original>
// kernel: tpu_custom_call.1
$region0: #{tpu_custom_call.1}
  #allocation0 [shape = 'u32[]', space=smem, size = 0x4, offset = 0x4, fixed_abs, tag = 'smem constant byte address 0x4 - core index']
  #allocation1 [shape = 'u32[144,128]{1,0:T(1,128)}', space=vmem, size = 0x12000, scoped, tag = 'internal scratch']
  #allocation2 [shape = 'f32[18,18,64]{2,1,0:T(8,128)}', space=vmem, size = 0x36000, scoped, tag = 'scratch operand']
  %s0 = inlined_call_operand.hbm [shape: f32[2,16,16,256], index: 0, kind: input, shape index: {}]
  %s1 = inlined_call_operand.vmem [shape: bf16[256,64], index: 1, kind: input, shape index: {}]
  %s2 = inlined_call_operand.vmem [shape: f32[1,64], index: 2, kind: input, shape index: {}]
  %s3 = inlined_call_operand.vmem [shape: f32[1,64], index: 3, kind: input, shape index: {}]
  %s4 = inlined_call_operand.vmem [shape: bf16[576,64], index: 4, kind: input, shape index: {}]
  %s5 = inlined_call_operand.vmem [shape: f32[1,64], index: 5, kind: input, shape index: {}]
  %s6 = inlined_call_operand.vmem [shape: f32[1,64], index: 6, kind: input, shape index: {}]
  %s7 = inlined_call_operand.vmem [shape: bf16[64,256], index: 7, kind: input, shape index: {}]
  %s8 = inlined_call_operand.vmem [shape: f32[1,256], index: 8, kind: input, shape index: {}]
  %s9 = inlined_call_operand.vmem [shape: f32[1,256], index: 9, kind: input, shape index: {}]
  %s10 = inlined_call_operand.vmem [shape: f32[256,16], index: 10, kind: input, shape index: {}]
  %s11 = inlined_call_operand.vmem [shape: f32[1,16], index: 11, kind: input, shape index: {}]
  %s12 = inlined_call_operand.vmem [shape: f32[16,256], index: 12, kind: input, shape index: {}]
  %s13 = inlined_call_operand.vmem [shape: f32[1,256], index: 13, kind: input, shape index: {}]
  %s14 = inlined_call_operand.hbm [shape: f32[2,16,16,256], index: 14, kind: output, shape index: {}]
  %s15 = sld [smem:[#allocation0]]
  $region93: #{tpu_custom_call.1} parent=0
    _
  %s17 = ssub.s32 1, %s15
  %s18 = scalar_select 0, %s17, %s15
  $region1: #{tpu_custom_call.1} parent=0
    #allocation3 [shape = 'u8[524288]{0}', space=vmem, size = 0x80000, scoped, tag = 'input window, operand 0']
    #allocation4 [shape = 's32[2]{0}', space=sflag, size = 0x8, scoped, tag = 'scoped memory for tpu_custom_call.1']
    #allocation5 [shape = 's32[2]{0}', space=sflag, size = 0x8, scoped, tag = 'scoped memory for tpu_custom_call.1']
    #allocation6 [shape = 'u8[524288]{0}', space=vmem, size = 0x80000, scoped, tag = 'output window, operand 0']
    %19 = vsyncpa [#allocation4], 0
    %s20 = scalar_lea.sflag [#allocation4], 1
    %21 = vsyncpa %s20, 0
    %22 = vsyncpa [#allocation5], 0
    %s23 = scalar_lea.sflag [#allocation5], 1
    %24 = vsyncpa %s23, 0
    loop: start=0, step=1, limit=4
    $region2: #{tpu_custom_call.1} parent=1 // loop_pre_header
      _
    $region3: #{tpu_custom_call.1} parent=1 // loop_header
      %s26 = sphi 0, %s30
      %p27 = scmp.ge.s32.totalorder %s26, 4
      %s36 = sphi 0, %s38
      %s39 = sphi 0, %s36
      %s40 = sphi 0, %s39
      %s56 = sphi 0, %s40
      %s60 = sphi 0, %s60
      %s62 = sphi 0, %s60
      %s63 = sphi 0, %s62
      %s77 = sphi 0, %s63
      %s81 = sphi 0, %s81
      %s83 = sphi 0, %s81
      %s84 = sphi 0, %s83
      %s98 = sphi 0, %s84
      %s102 = sphi 0, %s102
      %s104 = sphi 0, %s102
      %s105 = sphi 0, %s104
      %s119 = sphi 0, %s105
      %s123 = sphi 0, %s123
      %s125 = sphi 0, %s123
      %s126 = sphi 0, %s125
      %s140 = sphi 0, %s126
      %s144 = sphi 0, %s144
      %s146 = sphi 0, %s144
      %s147 = sphi 0, %s146
      %s161 = sphi 0, %s147
      %s165 = sphi 0, %s165
      %s167 = sphi 0, %s165
      %s168 = sphi 0, %s167
      %s182 = sphi 0, %s168
      %s186 = sphi 0, %s186
      %s188 = sphi 0, %s186
      %s189 = sphi 0, %s188
      %s203 = sphi 0, %s189
      %s207 = sphi 0, %s207
      %s209 = sphi 0, %s207
      %s210 = sphi 0, %s209
      %s224 = sphi 0, %s210
      %s228 = sphi 0, %s228
      %s230 = sphi 0, %s228
      %s231 = sphi 0, %s230
      %s245 = sphi 0, %s231
      %s249 = sphi 0, %s249
      %s251 = sphi 0, %s249
      %s252 = sphi 0, %s251
      %s266 = sphi 0, %s252
      %s270 = sphi 0, %s270
      %s272 = sphi 0, %s270
      %s273 = sphi 0, %s272
      %s287 = sphi 0, %s273
      %s291 = sphi 0, %s291
      %s293 = sphi 0, %s291
      %s294 = sphi 0, %s293
      %s308 = sphi 0, %s294
      %s312 = sphi 0, %s312
      %s314 = sphi 0, %s312
      %s315 = sphi 0, %s314
      %s329 = sphi 0, %s315
      %s335 = sphi 0, %s337
      %s338 = sphi 0, %s335
      %s339 = sphi 0, %s338
      %s355 = sphi 0, %s339
    $region4: #{tpu_custom_call.1} parent=1 // loop_header_branch
      %29 = sbr.rel (%p27) target = $region8
    $region5: #{tpu_custom_call.1} parent=1 // loop_body
      %s31 = ssub.s32 %s26, 1
      %s32 = ssub.s32 %s26, 2
      %s33 = sadd.s32 %s26, 1
      %s34 = ssub.s32 %s26, %s33
      %p35 = scmp.eq.s32.totalorder %s34, 0
      %s37 = sadd.s32 %s36, 1
      %s38 = scalar_select %p35, %s36, %s37
      %p41 = pneg %p35
      %p42 = scmp.eq.s32.totalorder %s26, 1
      %p43 = por %p41, %p42
      %p44 = scmp.ne.s32.totalorder %s36, %s39
      %p45 = scmp.eq.s32.totalorder %s26, 0
      %p46 = por %p44, %p45
      %p47 = scmp.ne.s32.totalorder %s36, %s39
      %p48 = scmp.eq.s32.totalorder %s31, 1
      %p49 = por %p47, %p48
      %p50 = scmp.ne.s32.totalorder %s39, %s40
      %p51 = scmp.eq.s32.totalorder %s31, 0
      %p52 = por %p50, %p51
      %p53 = scmp.ne.s32.totalorder %s39, %s40
      %p54 = scmp.eq.s32.totalorder %s32, 1
      %p55 = por %p53, %p54
      %p57 = scmp.ne.s32.totalorder %s40, %s56
      %p58 = scmp.eq.s32.totalorder %s32, 0
      %p59 = por %p57, %p58
      %s61 = sadd.s32 %s60, 1
      %p64 = scmp.eq.s32.totalorder %s26, 1
      %p65 = scmp.ne.s32.totalorder %s60, %s62
      %p66 = scmp.eq.s32.totalorder %s26, 0
      %p67 = por %p65, %p66
      %p68 = scmp.ne.s32.totalorder %s60, %s62
      %p69 = scmp.eq.s32.totalorder %s31, 1
      %p70 = por %p68, %p69
      %p71 = scmp.ne.s32.totalorder %s62, %s63
      %p72 = scmp.eq.s32.totalorder %s31, 0
      %p73 = por %p71, %p72
      %p74 = scmp.ne.s32.totalorder %s62, %s63
      %p75 = scmp.eq.s32.totalorder %s32, 1
      %p76 = por %p74, %p75
      %p78 = scmp.ne.s32.totalorder %s63, %s77
      %p79 = scmp.eq.s32.totalorder %s32, 0
      %p80 = por %p78, %p79
      %s82 = sadd.s32 %s81, 1
      %p85 = scmp.eq.s32.totalorder %s26, 1
      %p86 = scmp.ne.s32.totalorder %s81, %s83
      %p87 = scmp.eq.s32.totalorder %s26, 0
      %p88 = por %p86, %p87
      %p89 = scmp.ne.s32.totalorder %s81, %s83
      %p90 = scmp.eq.s32.totalorder %s31, 1
      %p91 = por %p89, %p90
      %p92 = scmp.ne.s32.totalorder %s83, %s84
      %p93 = scmp.eq.s32.totalorder %s31, 0
      %p94 = por %p92, %p93
      %p95 = scmp.ne.s32.totalorder %s83, %s84
      %p96 = scmp.eq.s32.totalorder %s32, 1
      %p97 = por %p95, %p96
      %p99 = scmp.ne.s32.totalorder %s84, %s98
      %p100 = scmp.eq.s32.totalorder %s32, 0
      %p101 = por %p99, %p100
      %s103 = sadd.s32 %s102, 1
      %p106 = scmp.eq.s32.totalorder %s26, 1
      %p107 = scmp.ne.s32.totalorder %s102, %s104
      %p108 = scmp.eq.s32.totalorder %s26, 0
      %p109 = por %p107, %p108
      %p110 = scmp.ne.s32.totalorder %s102, %s104
      %p111 = scmp.eq.s32.totalorder %s31, 1
      %p112 = por %p110, %p111
      %p113 = scmp.ne.s32.totalorder %s104, %s105
      %p114 = scmp.eq.s32.totalorder %s31, 0
      %p115 = por %p113, %p114
      %p116 = scmp.ne.s32.totalorder %s104, %s105
      %p117 = scmp.eq.s32.totalorder %s32, 1
      %p118 = por %p116, %p117
      %p120 = scmp.ne.s32.totalorder %s105, %s119
      %p121 = scmp.eq.s32.totalorder %s32, 0
      %p122 = por %p120, %p121
      %s124 = sadd.s32 %s123, 1
      %p127 = scmp.eq.s32.totalorder %s26, 1
      %p128 = scmp.ne.s32.totalorder %s123, %s125
      %p129 = scmp.eq.s32.totalorder %s26, 0
      %p130 = por %p128, %p129
      %p131 = scmp.ne.s32.totalorder %s123, %s125
      %p132 = scmp.eq.s32.totalorder %s31, 1
      %p133 = por %p131, %p132
      %p134 = scmp.ne.s32.totalorder %s125, %s126
      %p135 = scmp.eq.s32.totalorder %s31, 0
      %p136 = por %p134, %p135
      %p137 = scmp.ne.s32.totalorder %s125, %s126
      %p138 = scmp.eq.s32.totalorder %s32, 1
      %p139 = por %p137, %p138
      %p141 = scmp.ne.s32.totalorder %s126, %s140
      %p142 = scmp.eq.s32.totalorder %s32, 0
      %p143 = por %p141, %p142
      %s145 = sadd.s32 %s144, 1
      %p148 = scmp.eq.s32.totalorder %s26, 1
      %p149 = scmp.ne.s32.totalorder %s144, %s146
      %p150 = scmp.eq.s32.totalorder %s26, 0
      %p151 = por %p149, %p150
      %p152 = scmp.ne.s32.totalorder %s144, %s146
      %p153 = scmp.eq.s32.totalorder %s31, 1
      %p154 = por %p152, %p153
      %p155 = scmp.ne.s32.totalorder %s146, %s147
      %p156 = scmp.eq.s32.totalorder %s31, 0
      %p157 = por %p155, %p156
      %p158 = scmp.ne.s32.totalorder %s146, %s147
      %p159 = scmp.eq.s32.totalorder %s32, 1
      %p160 = por %p158, %p159
      %p162 = scmp.ne.s32.totalorder %s147, %s161
      %p163 = scmp.eq.s32.totalorder %s32, 0
      %p164 = por %p162, %p163
      %s166 = sadd.s32 %s165, 1
      %p169 = scmp.eq.s32.totalorder %s26, 1
      %p170 = scmp.ne.s32.totalorder %s165, %s167
      %p171 = scmp.eq.s32.totalorder %s26, 0
      %p172 = por %p170, %p171
      %p173 = scmp.ne.s32.totalorder %s165, %s167
      %p174 = scmp.eq.s32.totalorder %s31, 1
      %p175 = por %p173, %p174
      %p176 = scmp.ne.s32.totalorder %s167, %s168
      %p177 = scmp.eq.s32.totalorder %s31, 0
      %p178 = por %p176, %p177
      %p179 = scmp.ne.s32.totalorder %s167, %s168
      %p180 = scmp.eq.s32.totalorder %s32, 1
      %p181 = por %p179, %p180
      %p183 = scmp.ne.s32.totalorder %s168, %s182
      %p184 = scmp.eq.s32.totalorder %s32, 0
      %p185 = por %p183, %p184
      %s187 = sadd.s32 %s186, 1
      %p190 = scmp.eq.s32.totalorder %s26, 1
      %p191 = scmp.ne.s32.totalorder %s186, %s188
      %p192 = scmp.eq.s32.totalorder %s26, 0
      %p193 = por %p191, %p192
      %p194 = scmp.ne.s32.totalorder %s186, %s188
      %p195 = scmp.eq.s32.totalorder %s31, 1
      %p196 = por %p194, %p195
      %p197 = scmp.ne.s32.totalorder %s188, %s189
      %p198 = scmp.eq.s32.totalorder %s31, 0
      %p199 = por %p197, %p198
      %p200 = scmp.ne.s32.totalorder %s188, %s189
      %p201 = scmp.eq.s32.totalorder %s32, 1
      %p202 = por %p200, %p201
      %p204 = scmp.ne.s32.totalorder %s189, %s203
      %p205 = scmp.eq.s32.totalorder %s32, 0
      %p206 = por %p204, %p205
      %s208 = sadd.s32 %s207, 1
      %p211 = scmp.eq.s32.totalorder %s26, 1
      %p212 = scmp.ne.s32.totalorder %s207, %s209
      %p213 = scmp.eq.s32.totalorder %s26, 0
      %p214 = por %p212, %p213
      %p215 = scmp.ne.s32.totalorder %s207, %s209
      %p216 = scmp.eq.s32.totalorder %s31, 1
      %p217 = por %p215, %p216
      %p218 = scmp.ne.s32.totalorder %s209, %s210
      %p219 = scmp.eq.s32.totalorder %s31, 0
      %p220 = por %p218, %p219
      %p221 = scmp.ne.s32.totalorder %s209, %s210
      %p222 = scmp.eq.s32.totalorder %s32, 1
      %p223 = por %p221, %p222
      %p225 = scmp.ne.s32.totalorder %s210, %s224
      %p226 = scmp.eq.s32.totalorder %s32, 0
      %p227 = por %p225, %p226
      %s229 = sadd.s32 %s228, 1
      %p232 = scmp.eq.s32.totalorder %s26, 1
      %p233 = scmp.ne.s32.totalorder %s228, %s230
      %p234 = scmp.eq.s32.totalorder %s26, 0
      %p235 = por %p233, %p234
      %p236 = scmp.ne.s32.totalorder %s228, %s230
      %p237 = scmp.eq.s32.totalorder %s31, 1
      %p238 = por %p236, %p237
      %p239 = scmp.ne.s32.totalorder %s230, %s231
      %p240 = scmp.eq.s32.totalorder %s31, 0
      %p241 = por %p239, %p240
      %p242 = scmp.ne.s32.totalorder %s230, %s231
      %p243 = scmp.eq.s32.totalorder %s32, 1
      %p244 = por %p242, %p243
      %p246 = scmp.ne.s32.totalorder %s231, %s245
      %p247 = scmp.eq.s32.totalorder %s32, 0
      %p248 = por %p246, %p247
      %s250 = sadd.s32 %s249, 1
      %p253 = scmp.eq.s32.totalorder %s26, 1
      %p254 = scmp.ne.s32.totalorder %s249, %s251
      %p255 = scmp.eq.s32.totalorder %s26, 0
      %p256 = por %p254, %p255
      %p257 = scmp.ne.s32.totalorder %s249, %s251
      %p258 = scmp.eq.s32.totalorder %s31, 1
      %p259 = por %p257, %p258
      %p260 = scmp.ne.s32.totalorder %s251, %s252
      %p261 = scmp.eq.s32.totalorder %s31, 0
      %p262 = por %p260, %p261
      %p263 = scmp.ne.s32.totalorder %s251, %s252
      %p264 = scmp.eq.s32.totalorder %s32, 1
      %p265 = por %p263, %p264
      %p267 = scmp.ne.s32.totalorder %s252, %s266
      %p268 = scmp.eq.s32.totalorder %s32, 0
      %p269 = por %p267, %p268
      %s271 = sadd.s32 %s270, 1
      %p274 = scmp.eq.s32.totalorder %s26, 1
      %p275 = scmp.ne.s32.totalorder %s270, %s272
      %p276 = scmp.eq.s32.totalorder %s26, 0
      %p277 = por %p275, %p276
      %p278 = scmp.ne.s32.totalorder %s270, %s272
      %p279 = scmp.eq.s32.totalorder %s31, 1
      %p280 = por %p278, %p279
      %p281 = scmp.ne.s32.totalorder %s272, %s273
      %p282 = scmp.eq.s32.totalorder %s31, 0
      %p283 = por %p281, %p282
      %p284 = scmp.ne.s32.totalorder %s272, %s273
      %p285 = scmp.eq.s32.totalorder %s32, 1
      %p286 = por %p284, %p285
      %p288 = scmp.ne.s32.totalorder %s273, %s287
      %p289 = scmp.eq.s32.totalorder %s32, 0
      %p290 = por %p288, %p289
      %s292 = sadd.s32 %s291, 1
      %p295 = scmp.eq.s32.totalorder %s26, 1
      %p296 = scmp.ne.s32.totalorder %s291, %s293
      %p297 = scmp.eq.s32.totalorder %s26, 0
      %p298 = por %p296, %p297
      %p299 = scmp.ne.s32.totalorder %s291, %s293
      %p300 = scmp.eq.s32.totalorder %s31, 1
      %p301 = por %p299, %p300
      %p302 = scmp.ne.s32.totalorder %s293, %s294
      %p303 = scmp.eq.s32.totalorder %s31, 0
      %p304 = por %p302, %p303
      %p305 = scmp.ne.s32.totalorder %s293, %s294
      %p306 = scmp.eq.s32.totalorder %s32, 1
      %p307 = por %p305, %p306
      %p309 = scmp.ne.s32.totalorder %s294, %s308
      %p310 = scmp.eq.s32.totalorder %s32, 0
      %p311 = por %p309, %p310
      %s313 = sadd.s32 %s312, 1
      %p316 = scmp.eq.s32.totalorder %s26, 1
      %p317 = scmp.ne.s32.totalorder %s312, %s314
      %p318 = scmp.eq.s32.totalorder %s26, 0
      %p319 = por %p317, %p318
      %p320 = scmp.ne.s32.totalorder %s312, %s314
      %p321 = scmp.eq.s32.totalorder %s31, 1
      %p322 = por %p320, %p321
      %p323 = scmp.ne.s32.totalorder %s314, %s315
      %p324 = scmp.eq.s32.totalorder %s31, 0
      %p325 = por %p323, %p324
      %p326 = scmp.ne.s32.totalorder %s314, %s315
      %p327 = scmp.eq.s32.totalorder %s32, 1
      %p328 = por %p326, %p327
      %p330 = scmp.ne.s32.totalorder %s315, %s329
      %p331 = scmp.eq.s32.totalorder %s32, 0
      %p332 = por %p330, %p331
      %s333 = ssub.s32 %s26, %s33
      %p334 = scmp.eq.s32.totalorder %s333, 0
      %s336 = sadd.s32 %s335, 1
      %s337 = scalar_select %p334, %s335, %s336
      %p340 = pneg %p334
      %p341 = scmp.eq.s32.totalorder %s26, 1
      %p342 = por %p340, %p341
      %p343 = scmp.ne.s32.totalorder %s335, %s338
      %p344 = scmp.eq.s32.totalorder %s26, 0
      %p345 = por %p343, %p344
      %p346 = scmp.ne.s32.totalorder %s335, %s338
      %p347 = scmp.eq.s32.totalorder %s31, 1
      %p348 = por %p346, %p347
      %p349 = scmp.ne.s32.totalorder %s338, %s339
      %p350 = scmp.eq.s32.totalorder %s31, 0
      %p351 = por %p349, %p350
      %p352 = scmp.ne.s32.totalorder %s338, %s339
      %p353 = scmp.eq.s32.totalorder %s32, 1
      %p354 = por %p352, %p353
      %p356 = scmp.ne.s32.totalorder %s339, %s355
      %p357 = scmp.eq.s32.totalorder %s32, 0
      %p358 = por %p356, %p357
      %p359 = scmp.le.s32.totalorder 1, %s26
      %p360 = scmp.lt.s32.totalorder %s26, 3
      %p361 = pnand %p359, %p360
      %p362 = pneg %p361
      // Predicated region
      $region9: #{tpu_custom_call.1} parent=5 // pred_check
        _
      $region10: #{tpu_custom_call.1} parent=5 // pred_check_branch
        %364 = sbr.rel (%p361) target = $region12
      $region11: #{tpu_custom_call.1} parent=5 // pred_region
        %s365 = ssub.s32 %s26, 1
        // Predicated region
        $region13: #{tpu_custom_call.1} parent=11 // pred_check
          %p366 = pneg %p73
        $region14: #{tpu_custom_call.1} parent=11 // pred_check_branch
          %368 = sbr.rel (%p366) target = $region16
        $region15: #{tpu_custom_call.1} parent=11 // pred_region
          _
        $region16: #{tpu_custom_call.1} parent=11 // pred_fallthru
          _
        // Predicated region
        $region17: #{tpu_custom_call.1} parent=11 // pred_check
          %p369 = pneg %p94
        $region18: #{tpu_custom_call.1} parent=11 // pred_check_branch
          %371 = sbr.rel (%p369) target = $region20
        $region19: #{tpu_custom_call.1} parent=11 // pred_region
          _
        $region20: #{tpu_custom_call.1} parent=11 // pred_fallthru
          _
        // Predicated region
        $region21: #{tpu_custom_call.1} parent=11 // pred_check
          %p372 = pneg %p115
        $region22: #{tpu_custom_call.1} parent=11 // pred_check_branch
          %374 = sbr.rel (%p372) target = $region24
        $region23: #{tpu_custom_call.1} parent=11 // pred_region
          _
        $region24: #{tpu_custom_call.1} parent=11 // pred_fallthru
          _
        // Predicated region
        $region25: #{tpu_custom_call.1} parent=11 // pred_check
          %p375 = pneg %p136
        $region26: #{tpu_custom_call.1} parent=11 // pred_check_branch
          %377 = sbr.rel (%p375) target = $region28
        $region27: #{tpu_custom_call.1} parent=11 // pred_region
          _
        $region28: #{tpu_custom_call.1} parent=11 // pred_fallthru
          _
        // Predicated region
        $region29: #{tpu_custom_call.1} parent=11 // pred_check
          %p378 = pneg %p157
        $region30: #{tpu_custom_call.1} parent=11 // pred_check_branch
          %380 = sbr.rel (%p378) target = $region32
        $region31: #{tpu_custom_call.1} parent=11 // pred_region
          _
        $region32: #{tpu_custom_call.1} parent=11 // pred_fallthru
          _
        // Predicated region
        $region33: #{tpu_custom_call.1} parent=11 // pred_check
          %p381 = pneg %p178
        $region34: #{tpu_custom_call.1} parent=11 // pred_check_branch
          %383 = sbr.rel (%p381) target = $region36
        $region35: #{tpu_custom_call.1} parent=11 // pred_region
          _
        $region36: #{tpu_custom_call.1} parent=11 // pred_fallthru
          _
        // Predicated region
        $region37: #{tpu_custom_call.1} parent=11 // pred_check
          %p384 = pneg %p199
        $region38: #{tpu_custom_call.1} parent=11 // pred_check_branch
          %386 = sbr.rel (%p384) target = $region40
        $region39: #{tpu_custom_call.1} parent=11 // pred_region
          _
        $region40: #{tpu_custom_call.1} parent=11 // pred_fallthru
          _
        // Predicated region
        $region41: #{tpu_custom_call.1} parent=11 // pred_check
          %p387 = pneg %p220
        $region42: #{tpu_custom_call.1} parent=11 // pred_check_branch
          %389 = sbr.rel (%p387) target = $region44
        $region43: #{tpu_custom_call.1} parent=11 // pred_region
          _
        $region44: #{tpu_custom_call.1} parent=11 // pred_fallthru
          _
        // Predicated region
        $region45: #{tpu_custom_call.1} parent=11 // pred_check
          %p390 = pneg %p241
        $region46: #{tpu_custom_call.1} parent=11 // pred_check_branch
          %392 = sbr.rel (%p390) target = $region48
        $region47: #{tpu_custom_call.1} parent=11 // pred_region
          _
        $region48: #{tpu_custom_call.1} parent=11 // pred_fallthru
          _
        // Predicated region
        $region49: #{tpu_custom_call.1} parent=11 // pred_check
          %p393 = pneg %p262
        $region50: #{tpu_custom_call.1} parent=11 // pred_check_branch
          %395 = sbr.rel (%p393) target = $region52
        $region51: #{tpu_custom_call.1} parent=11 // pred_region
          _
        $region52: #{tpu_custom_call.1} parent=11 // pred_fallthru
          _
        // Predicated region
        $region53: #{tpu_custom_call.1} parent=11 // pred_check
          %p396 = pneg %p283
        $region54: #{tpu_custom_call.1} parent=11 // pred_check_branch
          %398 = sbr.rel (%p396) target = $region56
        $region55: #{tpu_custom_call.1} parent=11 // pred_region
          _
        $region56: #{tpu_custom_call.1} parent=11 // pred_fallthru
          _
        // Predicated region
        $region57: #{tpu_custom_call.1} parent=11 // pred_check
          %p399 = pneg %p304
        $region58: #{tpu_custom_call.1} parent=11 // pred_check_branch
          %401 = sbr.rel (%p399) target = $region60
        $region59: #{tpu_custom_call.1} parent=11 // pred_region
          _
        $region60: #{tpu_custom_call.1} parent=11 // pred_fallthru
          _
        // Predicated region
        $region61: #{tpu_custom_call.1} parent=11 // pred_check
          %p402 = pneg %p325
        $region62: #{tpu_custom_call.1} parent=11 // pred_check_branch
          %404 = sbr.rel (%p402) target = $region64
        $region63: #{tpu_custom_call.1} parent=11 // pred_region
          _
        $region64: #{tpu_custom_call.1} parent=11 // pred_fallthru
          _
      $region12: #{tpu_custom_call.1} parent=5 // pred_fallthru
        _
      %p405 = scmp.lt.s32.totalorder %s26, 2
      // Predicated region
      $region65: #{tpu_custom_call.1} parent=5 // pred_check
        %p406 = pneg %p405
      $region66: #{tpu_custom_call.1} parent=5 // pred_check_branch
        %408 = sbr.rel (%p406) target = $region68
      $region67: #{tpu_custom_call.1} parent=5 // pred_region
        // Predicated region
        $region69: #{tpu_custom_call.1} parent=67 // pred_check
          %p409 = pneg %p46
        $region70: #{tpu_custom_call.1} parent=67 // pred_check_branch
          %411 = sbr.rel (%p409) target = $region72
        $region71: #{tpu_custom_call.1} parent=67 // pred_region
          %s412 = sand.u32 %s36, 1
          %s413 = scalar_lea.sflag [#allocation4], %s412
          %s414 = sand.u32 %s36, 1
          %s415 = smul.addr %s414, 512
          %s416 = scalar_lea.vmem [#allocation3], %s415
          %s418 = ssub.s32 8192, 8192
          %419 = vsyncadd %s413, %s418
          %s420 = smul.addr %s26, 64
          %s421 = smul.addr %s420, 128
          %s422 = scalar_lea.hbm %s0, %s421
          %s423 = sshll.u32 %s416, 4
          %s424 = int_to_ptr.vmem [resolvable:$true] %s423
          %429 = dma.hbm_to_vmem [thread:$0]  %s422, 8192, %s424, %s413, 256, 256, 16
        $region72: #{tpu_custom_call.1} parent=67 // pred_fallthru
          _
      $region68: #{tpu_custom_call.1} parent=5 // pred_fallthru
        _
      %p430 = scmp.le.s32.totalorder 1, %s26
      %p431 = scmp.lt.s32.totalorder %s26, 3
      %p432 = pnand %p430, %p431
      %p433 = pneg %p432
      // Predicated region
      $region73: #{tpu_custom_call.1} parent=5 // pred_check
        _
      $region74: #{tpu_custom_call.1} parent=5 // pred_check_branch
        %435 = sbr.rel (%p432) target = $region76
      $region75: #{tpu_custom_call.1} parent=5 // pred_region
        %s436 = ssub.s32 %s26, 1
        %s437 = sand.u32 %s39, 1
        %s438 = scalar_lea.sflag [#allocation4], %s437
        %s439 = sand.u32 %s39, 1
        %s440 = smul.addr %s439, 512
        %s441 = scalar_lea.vmem [#allocation3], %s440
        // Predicated region
        $region77: #{tpu_custom_call.1} parent=75 // pred_check
          %p442 = pneg %p52
        $region78: #{tpu_custom_call.1} parent=75 // pred_check_branch
          %444 = sbr.rel (%p442) target = $region80
        $region79: #{tpu_custom_call.1} parent=75 // pred_region
          %445 = dma.done %s438, 8192
        $region80: #{tpu_custom_call.1} parent=75 // pred_fallthru
          _
        %s446 = sand.u32 %s39, 1
        %s447 = scalar_lea.sflag [#allocation4], %s446
        %s448 = sand.u32 %s39, 1
        %s449 = smul.addr %s448, 512
        %s450 = scalar_lea.vmem [#allocation3], %s449
        %p451 = pneg %p52
        %p452 = pneg %p49
        %p453 = pneg %p73
        %p454 = pneg %p70
        %p455 = pneg %p94
        %p456 = pneg %p91
        %p457 = pneg %p115
        %p458 = pneg %p112
        %p459 = pneg %p136
        %p460 = pneg %p133
        %p461 = pneg %p157
        %p462 = pneg %p154
        %p463 = pneg %p178
        %p464 = pneg %p175
        %p465 = pneg %p199
        %p466 = pneg %p196
        %p467 = pneg %p220
        %p468 = pneg %p217
        %p469 = pneg %p241
        %p470 = pneg %p238
        %p471 = pneg %p262
        %p472 = pneg %p259
        %p473 = pneg %p283
        %p474 = pneg %p280
        %p475 = pneg %p304
        %p476 = pneg %p301
        %p477 = pneg %p325
        %p478 = pneg %p322
        %p479 = pneg %p351
        %p480 = pneg %p348
        %s481 = sand.u32 %s338, 1
        %s482 = scalar_lea.sflag [#allocation5], %s481
        %s483 = sand.u32 %s338, 1
        %s484 = smul.addr %s483, 512
        %s485 = scalar_lea.vmem [#allocation6], %s484
        %v487 = vld [vmem:[%s441] sm:$0xff]
        %v488 = vld [vmem:[%s441 + $0x8] sm:$0xff]
        %v489 = vld [vmem:[%s441 + $0x10] sm:$0xff]
        %v490 = vld [vmem:[%s441 + $0x18] sm:$0xff]
        %v491 = vld [vmem:[%s441 + $0x20] sm:$0xff]
        %v492 = vld [vmem:[%s441 + $0x28] sm:$0xff]
        %v493 = vld [vmem:[%s441 + $0x30] sm:$0xff]
        %v494 = vld [vmem:[%s441 + $0x38] sm:$0xff]
        %v495 = vld [vmem:[%s441 + $0x40] sm:$0xff]
        %v496 = vld [vmem:[%s441 + $0x48] sm:$0xff]
        %v497 = vld [vmem:[%s441 + $0x50] sm:$0xff]
        %v498 = vld [vmem:[%s441 + $0x58] sm:$0xff]
        %v499 = vld [vmem:[%s441 + $0x60] sm:$0xff]
        %v500 = vld [vmem:[%s441 + $0x68] sm:$0xff]
        %v501 = vld [vmem:[%s441 + $0x70] sm:$0xff]
        %v502 = vld [vmem:[%s441 + $0x78] sm:$0xff]
        %v503 = vld [vmem:[%s441 + $0x80] sm:$0xff]
        %v504 = vld [vmem:[%s441 + $0x88] sm:$0xff]
        %v505 = vld [vmem:[%s441 + $0x90] sm:$0xff]
        %v506 = vld [vmem:[%s441 + $0x98] sm:$0xff]
        %v507 = vld [vmem:[%s441 + $0xa0] sm:$0xff]
        %v508 = vld [vmem:[%s441 + $0xa8] sm:$0xff]
        %v509 = vld [vmem:[%s441 + $0xb0] sm:$0xff]
        %v510 = vld [vmem:[%s441 + $0xb8] sm:$0xff]
        %v511 = vld [vmem:[%s441 + $0xc0] sm:$0xff]
        %v512 = vld [vmem:[%s441 + $0xc8] sm:$0xff]
        %v513 = vld [vmem:[%s441 + $0xd0] sm:$0xff]
        %v514 = vld [vmem:[%s441 + $0xd8] sm:$0xff]
        %v515 = vld [vmem:[%s441 + $0xe0] sm:$0xff]
        %v516 = vld [vmem:[%s441 + $0xe8] sm:$0xff]
        %v517 = vld [vmem:[%s441 + $0xf0] sm:$0xff]
        %v518 = vld [vmem:[%s441 + $0xf8] sm:$0xff]
        %v519 = vld [vmem:[%s441 + $0x100] sm:$0xff]
        %v520 = vld [vmem:[%s441 + $0x108] sm:$0xff]
        %v521 = vld [vmem:[%s441 + $0x110] sm:$0xff]
        %v522 = vld [vmem:[%s441 + $0x118] sm:$0xff]
        %v523 = vld [vmem:[%s441 + $0x120] sm:$0xff]
        %v524 = vld [vmem:[%s441 + $0x128] sm:$0xff]
        %v525 = vld [vmem:[%s441 + $0x130] sm:$0xff]
        %v526 = vld [vmem:[%s441 + $0x138] sm:$0xff]
        %v527 = vld [vmem:[%s441 + $0x140] sm:$0xff]
        %v528 = vld [vmem:[%s441 + $0x148] sm:$0xff]
        %v529 = vld [vmem:[%s441 + $0x150] sm:$0xff]
        %v530 = vld [vmem:[%s441 + $0x158] sm:$0xff]
        %v531 = vld [vmem:[%s441 + $0x160] sm:$0xff]
        %v532 = vld [vmem:[%s441 + $0x168] sm:$0xff]
        %v533 = vld [vmem:[%s441 + $0x170] sm:$0xff]
        %v534 = vld [vmem:[%s441 + $0x178] sm:$0xff]
        %v535 = vld [vmem:[%s441 + $0x180] sm:$0xff]
        %v536 = vld [vmem:[%s441 + $0x188] sm:$0xff]
        %v537 = vld [vmem:[%s441 + $0x190] sm:$0xff]
        %v538 = vld [vmem:[%s441 + $0x198] sm:$0xff]
        %v539 = vld [vmem:[%s441 + $0x1a0] sm:$0xff]
        %v540 = vld [vmem:[%s441 + $0x1a8] sm:$0xff]
        %v541 = vld [vmem:[%s441 + $0x1b0] sm:$0xff]
        %v542 = vld [vmem:[%s441 + $0x1b8] sm:$0xff]
        %v543 = vld [vmem:[%s441 + $0x1c0] sm:$0xff]
        %v544 = vld [vmem:[%s441 + $0x1c8] sm:$0xff]
        %v545 = vld [vmem:[%s441 + $0x1d0] sm:$0xff]
        %v546 = vld [vmem:[%s441 + $0x1d8] sm:$0xff]
        %v547 = vld [vmem:[%s441 + $0x1e0] sm:$0xff]
        %v548 = vld [vmem:[%s441 + $0x1e8] sm:$0xff]
        %v549 = vld [vmem:[%s441 + $0x1f0] sm:$0xff]
        %v550 = vld [vmem:[%s441 + $0x1f8] sm:$0xff]
        %v551 = vpack.c.bf16 %v489, %v487
        %v552 = vpack.c.bf16 %v490, %v488
        %v553 = vpack.c.bf16 %v493, %v491
        %v554 = vpack.c.bf16 %v494, %v492
        %v555 = vpack.c.bf16 %v497, %v495
        %v556 = vpack.c.bf16 %v498, %v496
        %v557 = vpack.c.bf16 %v501, %v499
        %v558 = vpack.c.bf16 %v502, %v500
        %v559 = vpack.c.bf16 %v505, %v503
        %v560 = vpack.c.bf16 %v506, %v504
        %v561 = vpack.c.bf16 %v509, %v507
        %v562 = vpack.c.bf16 %v510, %v508
        %v563 = vpack.c.bf16 %v513, %v511
        %v564 = vpack.c.bf16 %v514, %v512
        %v565 = vpack.c.bf16 %v517, %v515
        %v566 = vpack.c.bf16 %v518, %v516
        %v567 = vpack.c.bf16 %v521, %v519
        %v568 = vpack.c.bf16 %v522, %v520
        %v569 = vpack.c.bf16 %v525, %v523
        %v570 = vpack.c.bf16 %v526, %v524
        %v571 = vpack.c.bf16 %v529, %v527
        %v572 = vpack.c.bf16 %v530, %v528
        %v573 = vpack.c.bf16 %v533, %v531
        %v574 = vpack.c.bf16 %v534, %v532
        %v575 = vpack.c.bf16 %v537, %v535
        %v576 = vpack.c.bf16 %v538, %v536
        %v577 = vpack.c.bf16 %v541, %v539
        %v578 = vpack.c.bf16 %v542, %v540
        %v579 = vpack.c.bf16 %v545, %v543
        %v580 = vpack.c.bf16 %v546, %v544
        %v581 = vpack.c.bf16 %v549, %v547
        %v582 = vpack.c.bf16 %v550, %v548
        %v583 = vld [vmem:[%s1] sm:$0xf]
        %v584 = vld [vmem:[%s1 + $0x4] sm:$0xf]
        %v585 = vld [vmem:[%s1 + $0x8] sm:$0xf]
        %v586 = vld [vmem:[%s1 + $0xc] sm:$0xf]
        %v587 = vld [vmem:[%s1 + $0x10] sm:$0xf]
        %v588 = vld [vmem:[%s1 + $0x14] sm:$0xf]
        %v589 = vld [vmem:[%s1 + $0x18] sm:$0xf]
        %v590 = vld [vmem:[%s1 + $0x1c] sm:$0xf]
        %v591 = vld [vmem:[%s1 + $0x20] sm:$0xf]
        %v592 = vld [vmem:[%s1 + $0x24] sm:$0xf]
        %v593 = vld [vmem:[%s1 + $0x28] sm:$0xf]
        %v594 = vld [vmem:[%s1 + $0x2c] sm:$0xf]
        %v595 = vld [vmem:[%s1 + $0x30] sm:$0xf]
        %v596 = vld [vmem:[%s1 + $0x34] sm:$0xf]
        %v597 = vld [vmem:[%s1 + $0x38] sm:$0xf]
        %v598 = vld [vmem:[%s1 + $0x3c] sm:$0xf]
        %v599 = vld [vmem:[%s1 + $0x40] sm:$0xf]
        %v600 = vld [vmem:[%s1 + $0x44] sm:$0xf]
        %v601 = vld [vmem:[%s1 + $0x48] sm:$0xf]
        %v602 = vld [vmem:[%s1 + $0x4c] sm:$0xf]
        %v603 = vld [vmem:[%s1 + $0x50] sm:$0xf]
        %v604 = vld [vmem:[%s1 + $0x54] sm:$0xf]
        %v605 = vld [vmem:[%s1 + $0x58] sm:$0xf]
        %v606 = vld [vmem:[%s1 + $0x5c] sm:$0xf]
        %v607 = vld [vmem:[%s1 + $0x60] sm:$0xf]
        %v608 = vld [vmem:[%s1 + $0x64] sm:$0xf]
        %v609 = vld [vmem:[%s1 + $0x68] sm:$0xf]
        %v610 = vld [vmem:[%s1 + $0x6c] sm:$0xf]
        %v611 = vld [vmem:[%s1 + $0x70] sm:$0xf]
        %v612 = vld [vmem:[%s1 + $0x74] sm:$0xf]
        %v613 = vld [vmem:[%s1 + $0x78] sm:$0xf]
        %v614 = vld [vmem:[%s1 + $0x7c] sm:$0xf]
        %v647 = vunpack.c.l.b16 %v583
        %v648 = vunpack.c.l.b16 %v584
        %v649 = vunpack.c.l.b16 %v585
        %v650 = vunpack.c.l.b16 %v586
        %v651 = vunpack.c.l.b16 %v587
        %v652 = vunpack.c.l.b16 %v588
        %v653 = vunpack.c.l.b16 %v589
        %v654 = vunpack.c.l.b16 %v590
        %v655 = vunpack.c.l.b16 %v591
        %v656 = vunpack.c.l.b16 %v592
        %v657 = vunpack.c.l.b16 %v593
        %v658 = vunpack.c.l.b16 %v594
        %v659 = vunpack.c.l.b16 %v595
        %v660 = vunpack.c.l.b16 %v596
        %v661 = vunpack.c.l.b16 %v597
        %v662 = vunpack.c.l.b16 %v598
        %v663 = vunpack.c.l.b16 %v599
        %v664 = vunpack.c.l.b16 %v600
        %v665 = vunpack.c.l.b16 %v601
        %v666 = vunpack.c.l.b16 %v602
        %v667 = vunpack.c.l.b16 %v603
        %v668 = vunpack.c.l.b16 %v604
        %v669 = vunpack.c.l.b16 %v605
        %v670 = vunpack.c.l.b16 %v606
        %v671 = vunpack.c.l.b16 %v607
        %v672 = vunpack.c.l.b16 %v608
        %v673 = vunpack.c.l.b16 %v609
        %v674 = vunpack.c.l.b16 %v610
        %v675 = vunpack.c.l.b16 %v611
        %v676 = vunpack.c.l.b16 %v612
        %v677 = vunpack.c.l.b16 %v613
        %v678 = vunpack.c.l.b16 %v614
        %v679 = vpack.c.b16 %v648, %v647
        %v680 = vpack.c.b16 %v650, %v649
        %v681 = vpack.c.b16 %v652, %v651
        %v682 = vpack.c.b16 %v654, %v653
        %v683 = vpack.c.b16 %v656, %v655
        %v684 = vpack.c.b16 %v658, %v657
        %v685 = vpack.c.b16 %v660, %v659
        %v686 = vpack.c.b16 %v662, %v661
        %v687 = vpack.c.b16 %v664, %v663
        %v688 = vpack.c.b16 %v666, %v665
        %v689 = vpack.c.b16 %v668, %v667
        %v690 = vpack.c.b16 %v670, %v669
        %v691 = vpack.c.b16 %v672, %v671
        %v692 = vpack.c.b16 %v674, %v673
        %v693 = vpack.c.b16 %v676, %v675
        %v694 = vpack.c.b16 %v678, %v677
        %711 = vmatprep.subr.bf16.mxu0 0
        %712 = vmatpush1.bf16.msra.mxu0 %v679
        %713 = vmatprep.subr.bf16.mxu0 0
        %714 = vmatpush1.bf16.msra.mxu0 %v680
        %715 = vmatprep.subr.bf16.mxu0 0
        %716 = vmatpush1.bf16.msra.mxu0 %v681
        %717 = vmatprep.subr.bf16.mxu0 0
        %718 = vmatpush1.bf16.msra.mxu0 %v682
        %719 = vmatprep.subr.bf16.mxu0 0
        %720 = vmatpush1.bf16.msra.mxu0 %v683
        %721 = vmatprep.subr.bf16.mxu0 0
        %722 = vmatpush1.bf16.msra.mxu0 %v684
        %723 = vmatprep.subr.bf16.mxu0 0
        %724 = vmatpush1.bf16.msra.mxu0 %v685
        %725 = vmatprep.subr.bf16.mxu0 0
        %726 = vmatpush1.bf16.msra.mxu0 %v686
        %727 = vmatprep.subr.bf16.mxu0 0
        %728 = vmatpush1.bf16.msra.mxu0 %v687
        %729 = vmatprep.subr.bf16.mxu0 0
        %730 = vmatpush1.bf16.msra.mxu0 %v688
        %731 = vmatprep.subr.bf16.mxu0 0
        %732 = vmatpush1.bf16.msra.mxu0 %v689
        %733 = vmatprep.subr.bf16.mxu0 0
        %734 = vmatpush1.bf16.msra.mxu0 %v690
        %735 = vmatprep.subr.bf16.mxu0 0
        %736 = vmatpush1.bf16.msra.mxu0 %v691
        %737 = vmatprep.subr.bf16.mxu0 0
        %738 = vmatpush1.bf16.msra.mxu0 %v692
        %739 = vmatprep.subr.bf16.mxu0 0
        %740 = vmatpush1.bf16.msra.mxu0 %v693
        %741 = vmatprep.subr.bf16.mxu0 0
        %742 = vmatpush1.bf16.msra.mxu0 %v694
        %743 = vmatprep.mubr.bf16.mxu0 %v552
        %744 = vmatmul.mubr.bf16.gmra.mrb[0].mxu0 %v551
        %v745 = vpop.f32.mrb[0].mxu0
        %v746 = vadd.f32 0.0, %v745
        %v747 = vpop.f32.mrb[0].mxu0
        %v748 = vpop.f32.mrb[0].mxu0
        %v749 = vadd.f32 0.0, %v748
        %v750 = vpop.f32.mrb[0].mxu0
        %751 = vmatprep.mubr.bf16.mxu0 %v554
        %752 = vmatmul.mubr.bf16.gmra.mrb[0].mxu0 %v553
        %v753 = vpop.f32.mrb[0].mxu0
        %v754 = vadd.f32 0.0, %v753
        %v755 = vpop.f32.mrb[0].mxu0
        %v756 = vpop.f32.mrb[0].mxu0
        %v757 = vadd.f32 0.0, %v756
        %v758 = vpop.f32.mrb[0].mxu0
        %759 = vmatprep.mubr.bf16.mxu0 %v556
        %760 = vmatmul.mubr.bf16.gmra.mrb[0].mxu0 %v555
        %v761 = vpop.f32.mrb[0].mxu0
        %v762 = vadd.f32 0.0, %v761
        %v763 = vpop.f32.mrb[0].mxu0
        %v764 = vpop.f32.mrb[0].mxu0
        %v765 = vadd.f32 0.0, %v764
        %v766 = vpop.f32.mrb[0].mxu0
        %767 = vmatprep.mubr.bf16.mxu0 %v558
        %768 = vmatmul.mubr.bf16.gmra.mrb[0].mxu0 %v557
        %v769 = vpop.f32.mrb[0].mxu0
        %v770 = vadd.f32 0.0, %v769
        %v771 = vpop.f32.mrb[0].mxu0
        %v772 = vpop.f32.mrb[0].mxu0
        %v773 = vadd.f32 0.0, %v772
        %v774 = vpop.f32.mrb[0].mxu0
        %775 = vmatprep.mubr.bf16.mxu0 %v560
        %776 = vmatmul.mubr.bf16.gmra.mrb[0].mxu0 %v559
        %v777 = vpop.f32.mrb[0].mxu0
        %v778 = vadd.f32 0.0, %v777
        %v779 = vpop.f32.mrb[0].mxu0
        %v780 = vpop.f32.mrb[0].mxu0
        %v781 = vadd.f32 0.0, %v780
        %v782 = vpop.f32.mrb[0].mxu0
        %783 = vmatprep.mubr.bf16.mxu0 %v562
        %784 = vmatmul.mubr.bf16.gmra.mrb[0].mxu0 %v561
        %v785 = vpop.f32.mrb[0].mxu0
        %v786 = vadd.f32 0.0, %v785
        %v787 = vpop.f32.mrb[0].mxu0
        %v788 = vpop.f32.mrb[0].mxu0
        %v789 = vadd.f32 0.0, %v788
        %v790 = vpop.f32.mrb[0].mxu0
        %791 = vmatprep.mubr.bf16.mxu0 %v564
        %792 = vmatmul.mubr.bf16.gmra.mrb[0].mxu0 %v563
        %v793 = vpop.f32.mrb[0].mxu0
        %v794 = vadd.f32 0.0, %v793
        %v795 = vpop.f32.mrb[0].mxu0
        %v796 = vpop.f32.mrb[0].mxu0
        %v797 = vadd.f32 0.0, %v796
        %v798 = vpop.f32.mrb[0].mxu0
        %799 = vmatprep.mubr.bf16.mxu0 %v566
        %800 = vmatmul.mubr.bf16.gmra.mrb[0].mxu0 %v565
        %v801 = vpop.f32.mrb[0].mxu0
        %v802 = vadd.f32 0.0, %v801
        %v803 = vpop.f32.mrb[0].mxu0
        %v804 = vpop.f32.mrb[0].mxu0
        %v805 = vadd.f32 0.0, %v804
        %v806 = vpop.f32.mrb[0].mxu0
        %807 = vmatprep.mubr.bf16.mxu0 %v568
        %808 = vmatmul.mubr.bf16.gmra.mrb[0].mxu0 %v567
        %v809 = vpop.f32.mrb[0].mxu0
        %v810 = vadd.f32 0.0, %v809
        %v811 = vpop.f32.mrb[0].mxu0
        %v812 = vpop.f32.mrb[0].mxu0
        %v813 = vadd.f32 0.0, %v812
        %v814 = vpop.f32.mrb[0].mxu0
        %815 = vmatprep.mubr.bf16.mxu0 %v570
        %816 = vmatmul.mubr.bf16.gmra.mrb[0].mxu0 %v569
        %v817 = vpop.f32.mrb[0].mxu0
        %v818 = vadd.f32 0.0, %v817
        %v819 = vpop.f32.mrb[0].mxu0
        %v820 = vpop.f32.mrb[0].mxu0
        %v821 = vadd.f32 0.0, %v820
        %v822 = vpop.f32.mrb[0].mxu0
        %823 = vmatprep.mubr.bf16.mxu0 %v572
        %824 = vmatmul.mubr.bf16.gmra.mrb[0].mxu0 %v571
        %v825 = vpop.f32.mrb[0].mxu0
        %v826 = vadd.f32 0.0, %v825
        %v827 = vpop.f32.mrb[0].mxu0
        %v828 = vpop.f32.mrb[0].mxu0
        %v829 = vadd.f32 0.0, %v828
        %v830 = vpop.f32.mrb[0].mxu0
        %831 = vmatprep.mubr.bf16.mxu0 %v574
        %832 = vmatmul.mubr.bf16.gmra.mrb[0].mxu0 %v573
        %v833 = vpop.f32.mrb[0].mxu0
        %v834 = vadd.f32 0.0, %v833
        %v835 = vpop.f32.mrb[0].mxu0
        %v836 = vpop.f32.mrb[0].mxu0
        %v837 = vadd.f32 0.0, %v836
        %v838 = vpop.f32.mrb[0].mxu0
        %839 = vmatprep.mubr.bf16.mxu0 %v576
        %840 = vmatmul.mubr.bf16.gmra.mrb[0].mxu0 %v575
        %v841 = vpop.f32.mrb[0].mxu0
        %v842 = vadd.f32 0.0, %v841
        %v843 = vpop.f32.mrb[0].mxu0
        %v844 = vpop.f32.mrb[0].mxu0
        %v845 = vadd.f32 0.0, %v844
        %v846 = vpop.f32.mrb[0].mxu0
        %847 = vmatprep.mubr.bf16.mxu0 %v578
        %848 = vmatmul.mubr.bf16.gmra.mrb[0].mxu0 %v577
        %v849 = vpop.f32.mrb[0].mxu0
        %v850 = vadd.f32 0.0, %v849
        %v851 = vpop.f32.mrb[0].mxu0
        %v852 = vpop.f32.mrb[0].mxu0
        %v853 = vadd.f32 0.0, %v852
        %v854 = vpop.f32.mrb[0].mxu0
        %855 = vmatprep.mubr.bf16.mxu0 %v580
        %856 = vmatmul.mubr.bf16.gmra.mrb[0].mxu0 %v579
        %v857 = vpop.f32.mrb[0].mxu0
        %v858 = vadd.f32 0.0, %v857
        %v859 = vpop.f32.mrb[0].mxu0
        %v860 = vpop.f32.mrb[0].mxu0
        %v861 = vadd.f32 0.0, %v860
        %v862 = vpop.f32.mrb[0].mxu0
        %863 = vmatprep.mubr.bf16.mxu0 %v582
        %864 = vmatmul.mubr.bf16.gmra.mrb[0].mxu0 %v581
        %v865 = vpop.f32.mrb[0].mxu0
        %v866 = vadd.f32 0.0, %v865
        %v867 = vpop.f32.mrb[0].mxu0
        %v868 = vpop.f32.mrb[0].mxu0
        %v869 = vadd.f32 0.0, %v868
        %v870 = vpop.f32.mrb[0].mxu0
        %871 = vdwg.mxu0
        %v872 = vld [vmem:[%s2] sm:$0x1]
        %v874 = vlaneseq
        %v875 = vshrl.u32 %v874, 7
        %v876 = vsub.s32 0, %v875
        %v877 = vrot.slane %v872, %v876
        %v879 = vmul.f32 %v746, %v877
        %v880 = vmul.f32 %v749, %v877
        %v881 = vmul.f32 %v754, %v877
        %v882 = vmul.f32 %v757, %v877
        %v883 = vmul.f32 %v762, %v877
        %v884 = vmul.f32 %v765, %v877
        %v885 = vmul.f32 %v770, %v877
        %v886 = vmul.f32 %v773, %v877
        %v887 = vmul.f32 %v778, %v877
        %v888 = vmul.f32 %v781, %v877
        %v889 = vmul.f32 %v786, %v877
        %v890 = vmul.f32 %v789, %v877
        %v891 = vmul.f32 %v794, %v877
        %v892 = vmul.f32 %v797, %v877
        %v893 = vmul.f32 %v802, %v877
        %v894 = vmul.f32 %v805, %v877
        %v895 = vmul.f32 %v810, %v877
        %v896 = vmul.f32 %v813, %v877
        %v897 = vmul.f32 %v818, %v877
        %v898 = vmul.f32 %v821, %v877
        %v899 = vmul.f32 %v826, %v877
        %v900 = vmul.f32 %v829, %v877
        %v901 = vmul.f32 %v834, %v877
        %v902 = vmul.f32 %v837, %v877
        %v903 = vmul.f32 %v842, %v877
        %v904 = vmul.f32 %v845, %v877
        %v905 = vmul.f32 %v850, %v877
        %v906 = vmul.f32 %v853, %v877
        %v907 = vmul.f32 %v858, %v877
        %v908 = vmul.f32 %v861, %v877
        %v909 = vmul.f32 %v866, %v877
        %v910 = vmul.f32 %v869, %v877
        %v911 = vld [vmem:[%s3] sm:$0x1]
        %v913 = vlaneseq
        %v914 = vshrl.u32 %v913, 7
        %v915 = vsub.s32 0, %v914
        %v916 = vrot.slane %v911, %v915
        %v918 = vadd.f32 %v879, %v916
        %v919 = vadd.f32 %v880, %v916
        %v920 = vadd.f32 %v881, %v916
        %v921 = vadd.f32 %v882, %v916
        %v922 = vadd.f32 %v883, %v916
        %v923 = vadd.f32 %v884, %v916
        %v924 = vadd.f32 %v885, %v916
        %v925 = vadd.f32 %v886, %v916
        %v926 = vadd.f32 %v887, %v916
        %v927 = vadd.f32 %v888, %v916
        %v928 = vadd.f32 %v889, %v916
        %v929 = vadd.f32 %v890, %v916
        %v930 = vadd.f32 %v891, %v916
        %v931 = vadd.f32 %v892, %v916
        %v932 = vadd.f32 %v893, %v916
        %v933 = vadd.f32 %v894, %v916
        %v934 = vadd.f32 %v895, %v916
        %v935 = vadd.f32 %v896, %v916
        %v936 = vadd.f32 %v897, %v916
        %v937 = vadd.f32 %v898, %v916
        %v938 = vadd.f32 %v899, %v916
        %v939 = vadd.f32 %v900, %v916
        %v940 = vadd.f32 %v901, %v916
        %v941 = vadd.f32 %v902, %v916
        %v942 = vadd.f32 %v903, %v916
        %v943 = vadd.f32 %v904, %v916
        %v944 = vadd.f32 %v905, %v916
        %v945 = vadd.f32 %v906, %v916
        %v946 = vadd.f32 %v907, %v916
        %v947 = vadd.f32 %v908, %v916
        %v948 = vadd.f32 %v909, %v916
        %v949 = vadd.f32 %v910, %v916
        %v950 = vmax.f32 %v918, 0.0
        %v951 = vmax.f32 %v919, 0.0
        %v952 = vmax.f32 %v920, 0.0
        %v953 = vmax.f32 %v921, 0.0
        %v954 = vmax.f32 %v922, 0.0
        %v955 = vmax.f32 %v923, 0.0
        %v956 = vmax.f32 %v924, 0.0
        %v957 = vmax.f32 %v925, 0.0
        %v958 = vmax.f32 %v926, 0.0
        %v959 = vmax.f32 %v927, 0.0
        %v960 = vmax.f32 %v928, 0.0
        %v961 = vmax.f32 %v929, 0.0
        %v962 = vmax.f32 %v930, 0.0
        %v963 = vmax.f32 %v931, 0.0
        %v964 = vmax.f32 %v932, 0.0
        %v965 = vmax.f32 %v933, 0.0
        %v966 = vmax.f32 %v934, 0.0
        %v967 = vmax.f32 %v935, 0.0
        %v968 = vmax.f32 %v936, 0.0
        %v969 = vmax.f32 %v937, 0.0
        %v970 = vmax.f32 %v938, 0.0
        %v971 = vmax.f32 %v939, 0.0
        %v972 = vmax.f32 %v940, 0.0
        %v973 = vmax.f32 %v941, 0.0
        %v974 = vmax.f32 %v942, 0.0
        %v975 = vmax.f32 %v943, 0.0
        %v976 = vmax.f32 %v944, 0.0
        %v977 = vmax.f32 %v945, 0.0
        %v978 = vmax.f32 %v946, 0.0
        %v979 = vmax.f32 %v947, 0.0
        %v980 = vmax.f32 %v948, 0.0
        %v981 = vmax.f32 %v949, 0.0
        %vm982 = vcmask 523264
        %983 = vst.msk [vmem:[#allocation2] sm:$0xff] %vm982, 0.0
        %984 = vst.msk [vmem:[#allocation2 + $0x8] sm:$0xff] %vm982, 0.0
        %vm985 = vcmask 517120
        %986 = vst.msk [vmem:[#allocation2 + $0x10] sm:$0x3] %vm985, 0.0
        %s987 = scalar_lea.vmem [#allocation2], 408
        %988 = vst.msk [vmem:[%s987] sm:$0xff] %vm982, 0.0
        %989 = vst.msk [vmem:[%s987 + $0x8] sm:$0xff] %vm982, 0.0
        %990 = vst.msk [vmem:[%s987 + $0x10] sm:$0x3] %vm985, 0.0
        %vm991 = vcmask 516096
        %992 = vst.msk [vmem:[#allocation2] sm:$0x1] %vm991, 0.0
        %993 = vst.msk [vmem:[#allocation2 + $0x18] sm:$0x1] %vm991, 0.0
        %994 = vst.msk [vmem:[#allocation2 + $0x30] sm:$0x1] %vm991, 0.0
        %995 = vst.msk [vmem:[#allocation2 + $0x48] sm:$0x1] %vm991, 0.0
        %996 = vst.msk [vmem:[#allocation2 + $0x60] sm:$0x1] %vm991, 0.0
        %997 = vst.msk [vmem:[#allocation2 + $0x78] sm:$0x1] %vm991, 0.0
        %998 = vst.msk [vmem:[#allocation2 + $0x90] sm:$0x1] %vm991, 0.0
        %999 = vst.msk [vmem:[#allocation2 + $0xa8] sm:$0x1] %vm991, 0.0
        %1000 = vst.msk [vmem:[#allocation2 + $0xc0] sm:$0x1] %vm991, 0.0
        %1001 = vst.msk [vmem:[#allocation2 + $0xd8] sm:$0x1] %vm991, 0.0
        %1002 = vst.msk [vmem:[#allocation2 + $0xf0] sm:$0x1] %vm991, 0.0
        %1003 = vst.msk [vmem:[#allocation2 + $0x108] sm:$0x1] %vm991, 0.0
        %1004 = vst.msk [vmem:[#allocation2 + $0x120] sm:$0x1] %vm991, 0.0
        %1005 = vst.msk [vmem:[#allocation2 + $0x138] sm:$0x1] %vm991, 0.0
        %1006 = vst.msk [vmem:[#allocation2 + $0x150] sm:$0x1] %vm991, 0.0
        %1007 = vst.msk [vmem:[#allocation2 + $0x168] sm:$0x1] %vm991, 0.0
        %1008 = vst.msk [vmem:[#allocation2 + $0x180] sm:$0x1] %vm991, 0.0
        %1009 = vst.msk [vmem:[#allocation2 + $0x198] sm:$0x1] %vm991, 0.0
        %1010 = vst.msk [vmem:[#allocation2 + $0x11] sm:$0x1] %vm991, 0.0
        %1011 = vst.msk [vmem:[#allocation2 + $0x29] sm:$0x1] %vm991, 0.0
        %1012 = vst.msk [vmem:[#allocation2 + $0x41] sm:$0x1] %vm991, 0.0
        %1013 = vst.msk [vmem:[#allocation2 + $0x59] sm:$0x1] %vm991, 0.0
        %1014 = vst.msk [vmem:[#allocation2 + $0x71] sm:$0x1] %vm991, 0.0
        %1015 = vst.msk [vmem:[#allocation2 + $0x89] sm:$0x1] %vm991, 0.0
        %1016 = vst.msk [vmem:[#allocation2 + $0xa1] sm:$0x1] %vm991, 0.0
        %1017 = vst.msk [vmem:[#allocation2 + $0xb9] sm:$0x1] %vm991, 0.0
        %1018 = vst.msk [vmem:[#allocation2 + $0xd1] sm:$0x1] %vm991, 0.0
        %1019 = vst.msk [vmem:[#allocation2 + $0xe9] sm:$0x1] %vm991, 0.0
        %1020 = vst.msk [vmem:[#allocation2 + $0x101] sm:$0x1] %vm991, 0.0
        %1021 = vst.msk [vmem:[#allocation2 + $0x119] sm:$0x1] %vm991, 0.0
        %1022 = vst.msk [vmem:[#allocation2 + $0x131] sm:$0x1] %vm991, 0.0
        %1023 = vst.msk [vmem:[#allocation2 + $0x149] sm:$0x1] %vm991, 0.0
        %1024 = vst.msk [vmem:[#allocation2 + $0x161] sm:$0x1] %vm991, 0.0
        %1025 = vst.msk [vmem:[#allocation2 + $0x179] sm:$0x1] %vm991, 0.0
        %1026 = vst.msk [vmem:[#allocation2 + $0x191] sm:$0x1] %vm991, 0.0
        %1027 = vst.msk [vmem:[#allocation2 + $0x1a9] sm:$0x1] %vm991, 0.0
        %s1028 = scalar_lea.vmem [#allocation2], 24
        %1029 = vst.msk [vmem:[%s1028 + $0x1] sm:$0xff] %vm982, %v950
        %1030 = vst.msk [vmem:[%s1028 + $0x9] sm:$0xff] %vm982, %v951
        %1031 = vst.msk [vmem:[%s1028 + $0x19] sm:$0xff] %vm982, %v952
        %1032 = vst.msk [vmem:[%s1028 + $0x21] sm:$0xff] %vm982, %v953
        %1033 = vst.msk [vmem:[%s1028 + $0x31] sm:$0xff] %vm982, %v954
        %1034 = vst.msk [vmem:[%s1028 + $0x39] sm:$0xff] %vm982, %v955
        %1035 = vst.msk [vmem:[%s1028 + $0x49] sm:$0xff] %vm982, %v956
        %1036 = vst.msk [vmem:[%s1028 + $0x51] sm:$0xff] %vm982, %v957
        %1037 = vst.msk [vmem:[%s1028 + $0x61] sm:$0xff] %vm982, %v958
        %1038 = vst.msk [vmem:[%s1028 + $0x69] sm:$0xff] %vm982, %v959
        %1039 = vst.msk [vmem:[%s1028 + $0x79] sm:$0xff] %vm982, %v960
        %1040 = vst.msk [vmem:[%s1028 + $0x81] sm:$0xff] %vm982, %v961
        %1041 = vst.msk [vmem:[%s1028 + $0x91] sm:$0xff] %vm982, %v962
        %1042 = vst.msk [vmem:[%s1028 + $0x99] sm:$0xff] %vm982, %v963
        %1043 = vst.msk [vmem:[%s1028 + $0xa9] sm:$0xff] %vm982, %v964
        %1044 = vst.msk [vmem:[%s1028 + $0xb1] sm:$0xff] %vm982, %v965
        %1045 = vst.msk [vmem:[%s1028 + $0xc1] sm:$0xff] %vm982, %v966
        %1046 = vst.msk [vmem:[%s1028 + $0xc9] sm:$0xff] %vm982, %v967
        %1047 = vst.msk [vmem:[%s1028 + $0xd9] sm:$0xff] %vm982, %v968
        %1048 = vst.msk [vmem:[%s1028 + $0xe1] sm:$0xff] %vm982, %v969
        %1049 = vst.msk [vmem:[%s1028 + $0xf1] sm:$0xff] %vm982, %v970
        %1050 = vst.msk [vmem:[%s1028 + $0xf9] sm:$0xff] %vm982, %v971
        %1051 = vst.msk [vmem:[%s1028 + $0x109] sm:$0xff] %vm982, %v972
        %1052 = vst.msk [vmem:[%s1028 + $0x111] sm:$0xff] %vm982, %v973
        %1053 = vst.msk [vmem:[%s1028 + $0x121] sm:$0xff] %vm982, %v974
        %1054 = vst.msk [vmem:[%s1028 + $0x129] sm:$0xff] %vm982, %v975
        %1055 = vst.msk [vmem:[%s1028 + $0x139] sm:$0xff] %vm982, %v976
        %1056 = vst.msk [vmem:[%s1028 + $0x141] sm:$0xff] %vm982, %v977
        %1057 = vst.msk [vmem:[%s1028 + $0x151] sm:$0xff] %vm982, %v978
        %1058 = vst.msk [vmem:[%s1028 + $0x159] sm:$0xff] %vm982, %v979
        %1059 = vst.msk [vmem:[%s1028 + $0x169] sm:$0xff] %vm982, %v980
        %1060 = vst.msk [vmem:[%s1028 + $0x171] sm:$0xff] %vm982, %v981
        %v1061 = vld [vmem:[#allocation2] sm:$0xff]
        %v1062 = vld [vmem:[#allocation2 + $0x8] sm:$0xff]
        %v1063 = vld [vmem:[#allocation2 + $0x18] sm:$0xff]
        %v1064 = vld [vmem:[#allocation2 + $0x20] sm:$0xff]
        %v1065 = vld [vmem:[#allocation2 + $0x30] sm:$0xff]
        %v1066 = vld [vmem:[#allocation2 + $0x38] sm:$0xff]
        %v1067 = vld [vmem:[#allocation2 + $0x48] sm:$0xff]
        %v1068 = vld [vmem:[#allocation2 + $0x50] sm:$0xff]
        %v1069 = vld [vmem:[#allocation2 + $0x60] sm:$0xff]
        %v1070 = vld [vmem:[#allocation2 + $0x68] sm:$0xff]
        %v1071 = vld [vmem:[#allocation2 + $0x78] sm:$0xff]
        %v1072 = vld [vmem:[#allocation2 + $0x80] sm:$0xff]
        %v1073 = vld [vmem:[#allocation2 + $0x90] sm:$0xff]
        %v1074 = vld [vmem:[#allocation2 + $0x98] sm:$0xff]
        %v1075 = vld [vmem:[#allocation2 + $0xa8] sm:$0xff]
        %v1076 = vld [vmem:[#allocation2 + $0xb0] sm:$0xff]
        %v1077 = vld [vmem:[#allocation2 + $0xc0] sm:$0xff]
        %v1078 = vld [vmem:[#allocation2 + $0xc8] sm:$0xff]
        %v1079 = vld [vmem:[#allocation2 + $0xd8] sm:$0xff]
        %v1080 = vld [vmem:[#allocation2 + $0xe0] sm:$0xff]
        %v1081 = vld [vmem:[#allocation2 + $0xf0] sm:$0xff]
        %v1082 = vld [vmem:[#allocation2 + $0xf8] sm:$0xff]
        %v1083 = vld [vmem:[#allocation2 + $0x108] sm:$0xff]
        %v1084 = vld [vmem:[#allocation2 + $0x110] sm:$0xff]
        %v1085 = vld [vmem:[#allocation2 + $0x120] sm:$0xff]
        %v1086 = vld [vmem:[#allocation2 + $0x128] sm:$0xff]
        %v1087 = vld [vmem:[#allocation2 + $0x138] sm:$0xff]
        %v1088 = vld [vmem:[#allocation2 + $0x140] sm:$0xff]
        %v1089 = vld [vmem:[#allocation2 + $0x150] sm:$0xff]
        %v1090 = vld [vmem:[#allocation2 + $0x158] sm:$0xff]
        %v1091 = vld [vmem:[#allocation2 + $0x168] sm:$0xff]
        %v1092 = vld [vmem:[#allocation2 + $0x170] sm:$0xff]
        %v1093 = vld [vmem:[#allocation2 + $0x1] sm:$0xff]
        %v1094 = vld [vmem:[#allocation2 + $0x9] sm:$0xff]
        %v1095 = vld [vmem:[#allocation2 + $0x19] sm:$0xff]
        %v1096 = vld [vmem:[#allocation2 + $0x21] sm:$0xff]
        %v1097 = vld [vmem:[#allocation2 + $0x31] sm:$0xff]
        %v1098 = vld [vmem:[#allocation2 + $0x39] sm:$0xff]
        %v1099 = vld [vmem:[#allocation2 + $0x49] sm:$0xff]
        %v1100 = vld [vmem:[#allocation2 + $0x51] sm:$0xff]
        %v1101 = vld [vmem:[#allocation2 + $0x61] sm:$0xff]
        %v1102 = vld [vmem:[#allocation2 + $0x69] sm:$0xff]
        %v1103 = vld [vmem:[#allocation2 + $0x79] sm:$0xff]
        %v1104 = vld [vmem:[#allocation2 + $0x81] sm:$0xff]
        %v1105 = vld [vmem:[#allocation2 + $0x91] sm:$0xff]
        %v1106 = vld [vmem:[#allocation2 + $0x99] sm:$0xff]
        %v1107 = vld [vmem:[#allocation2 + $0xa9] sm:$0xff]
        %v1108 = vld [vmem:[#allocation2 + $0xb1] sm:$0xff]
        %v1109 = vld [vmem:[#allocation2 + $0xc1] sm:$0xff]
        %v1110 = vld [vmem:[#allocation2 + $0xc9] sm:$0xff]
        %v1111 = vld [vmem:[#allocation2 + $0xd9] sm:$0xff]
        %v1112 = vld [vmem:[#allocation2 + $0xe1] sm:$0xff]
        %v1113 = vld [vmem:[#allocation2 + $0xf1] sm:$0xff]
        %v1114 = vld [vmem:[#allocation2 + $0xf9] sm:$0xff]
        %v1115 = vld [vmem:[#allocation2 + $0x109] sm:$0xff]
        %v1116 = vld [vmem:[#allocation2 + $0x111] sm:$0xff]
        %v1117 = vld [vmem:[#allocation2 + $0x121] sm:$0xff]
        %v1118 = vld [vmem:[#allocation2 + $0x129] sm:$0xff]
        %v1119 = vld [vmem:[#allocation2 + $0x139] sm:$0xff]
        %v1120 = vld [vmem:[#allocation2 + $0x141] sm:$0xff]
        %v1121 = vld [vmem:[#allocation2 + $0x151] sm:$0xff]
        %v1122 = vld [vmem:[#allocation2 + $0x159] sm:$0xff]
        %v1123 = vld [vmem:[#allocation2 + $0x169] sm:$0xff]
        %v1124 = vld [vmem:[#allocation2 + $0x171] sm:$0xff]
        %v1125 = vld [vmem:[#allocation2 + $0x2] sm:$0xff]
        %v1126 = vld [vmem:[#allocation2 + $0xa] sm:$0xff]
        %v1127 = vld [vmem:[#allocation2 + $0x1a] sm:$0xff]
        %v1128 = vld [vmem:[#allocation2 + $0x22] sm:$0xff]
        %v1129 = vld [vmem:[#allocation2 + $0x32] sm:$0xff]
        %v1130 = vld [vmem:[#allocation2 + $0x3a] sm:$0xff]
        %v1131 = vld [vmem:[#allocation2 + $0x4a] sm:$0xff]
        %v1132 = vld [vmem:[#allocation2 + $0x52] sm:$0xff]
        %v1133 = vld [vmem:[#allocation2 + $0x62] sm:$0xff]
        %v1134 = vld [vmem:[#allocation2 + $0x6a] sm:$0xff]
        %v1135 = vld [vmem:[#allocation2 + $0x7a] sm:$0xff]
        %v1136 = vld [vmem:[#allocation2 + $0x82] sm:$0xff]
        %v1137 = vld [vmem:[#allocation2 + $0x92] sm:$0xff]
        %v1138 = vld [vmem:[#allocation2 + $0x9a] sm:$0xff]
        %v1139 = vld [vmem:[#allocation2 + $0xaa] sm:$0xff]
        %v1140 = vld [vmem:[#allocation2 + $0xb2] sm:$0xff]
        %v1141 = vld [vmem:[#allocation2 + $0xc2] sm:$0xff]
        %v1142 = vld [vmem:[#allocation2 + $0xca] sm:$0xff]
        %v1143 = vld [vmem:[#allocation2 + $0xda] sm:$0xff]
        %v1144 = vld [vmem:[#allocation2 + $0xe2] sm:$0xff]
        %v1145 = vld [vmem:[#allocation2 + $0xf2] sm:$0xff]
        %v1146 = vld [vmem:[#allocation2 + $0xfa] sm:$0xff]
        %v1147 = vld [vmem:[#allocation2 + $0x10a] sm:$0xff]
        %v1148 = vld [vmem:[#allocation2 + $0x112] sm:$0xff]
        %v1149 = vld [vmem:[#allocation2 + $0x122] sm:$0xff]
        %v1150 = vld [vmem:[#allocation2 + $0x12a] sm:$0xff]
        %v1151 = vld [vmem:[#allocation2 + $0x13a] sm:$0xff]
        %v1152 = vld [vmem:[#allocation2 + $0x142] sm:$0xff]
        %v1153 = vld [vmem:[#allocation2 + $0x152] sm:$0xff]
        %v1154 = vld [vmem:[#allocation2 + $0x15a] sm:$0xff]
        %v1155 = vld [vmem:[#allocation2 + $0x16a] sm:$0xff]
        %v1156 = vld [vmem:[#allocation2 + $0x172] sm:$0xff]
        %v1157 = vld [vmem:[%s1028] sm:$0xff]
        %v1158 = vld [vmem:[%s1028 + $0x8] sm:$0xff]
        %v1159 = vld [vmem:[%s1028 + $0x18] sm:$0xff]
        %v1160 = vld [vmem:[%s1028 + $0x20] sm:$0xff]
        %v1161 = vld [vmem:[%s1028 + $0x30] sm:$0xff]
        %v1162 = vld [vmem:[%s1028 + $0x38] sm:$0xff]
        %v1163 = vld [vmem:[%s1028 + $0x48] sm:$0xff]
        %v1164 = vld [vmem:[%s1028 + $0x50] sm:$0xff]
        %v1165 = vld [vmem:[%s1028 + $0x60] sm:$0xff]
        %v1166 = vld [vmem:[%s1028 + $0x68] sm:$0xff]
        %v1167 = vld [vmem:[%s1028 + $0x78] sm:$0xff]
        %v1168 = vld [vmem:[%s1028 + $0x80] sm:$0xff]
        %v1169 = vld [vmem:[%s1028 + $0x90] sm:$0xff]
        %v1170 = vld [vmem:[%s1028 + $0x98] sm:$0xff]
        %v1171 = vld [vmem:[%s1028 + $0xa8] sm:$0xff]
        %v1172 = vld [vmem:[%s1028 + $0xb0] sm:$0xff]
        %v1173 = vld [vmem:[%s1028 + $0xc0] sm:$0xff]
        %v1174 = vld [vmem:[%s1028 + $0xc8] sm:$0xff]
        %v1175 = vld [vmem:[%s1028 + $0xd8] sm:$0xff]
        %v1176 = vld [vmem:[%s1028 + $0xe0] sm:$0xff]
        %v1177 = vld [vmem:[%s1028 + $0xf0] sm:$0xff]
        %v1178 = vld [vmem:[%s1028 + $0xf8] sm:$0xff]
        %v1179 = vld [vmem:[%s1028 + $0x108] sm:$0xff]
        %v1180 = vld [vmem:[%s1028 + $0x110] sm:$0xff]
        %v1181 = vld [vmem:[%s1028 + $0x120] sm:$0xff]
        %v1182 = vld [vmem:[%s1028 + $0x128] sm:$0xff]
        %v1183 = vld [vmem:[%s1028 + $0x138] sm:$0xff]
        %v1184 = vld [vmem:[%s1028 + $0x140] sm:$0xff]
        %v1185 = vld [vmem:[%s1028 + $0x150] sm:$0xff]
        %v1186 = vld [vmem:[%s1028 + $0x158] sm:$0xff]
        %v1187 = vld [vmem:[%s1028 + $0x168] sm:$0xff]
        %v1188 = vld [vmem:[%s1028 + $0x170] sm:$0xff]
        %v1189 = vld [vmem:[%s1028 + $0x1] sm:$0xff]
        %v1190 = vld [vmem:[%s1028 + $0x9] sm:$0xff]
        %v1191 = vld [vmem:[%s1028 + $0x19] sm:$0xff]
        %v1192 = vld [vmem:[%s1028 + $0x21] sm:$0xff]
        %v1193 = vld [vmem:[%s1028 + $0x31] sm:$0xff]
        %v1194 = vld [vmem:[%s1028 + $0x39] sm:$0xff]
        %v1195 = vld [vmem:[%s1028 + $0x49] sm:$0xff]
        %v1196 = vld [vmem:[%s1028 + $0x51] sm:$0xff]
        %v1197 = vld [vmem:[%s1028 + $0x61] sm:$0xff]
        %v1198 = vld [vmem:[%s1028 + $0x69] sm:$0xff]
        %v1199 = vld [vmem:[%s1028 + $0x79] sm:$0xff]
        %v1200 = vld [vmem:[%s1028 + $0x81] sm:$0xff]
        %v1201 = vld [vmem:[%s1028 + $0x91] sm:$0xff]
        %v1202 = vld [vmem:[%s1028 + $0x99] sm:$0xff]
        %v1203 = vld [vmem:[%s1028 + $0xa9] sm:$0xff]
        %v1204 = vld [vmem:[%s1028 + $0xb1] sm:$0xff]
        %v1205 = vld [vmem:[%s1028 + $0xc1] sm:$0xff]
        %v1206 = vld [vmem:[%s1028 + $0xc9] sm:$0xff]
        %v1207 = vld [vmem:[%s1028 + $0xd9] sm:$0xff]
        %v1208 = vld [vmem:[%s1028 + $0xe1] sm:$0xff]
        %v1209 = vld [vmem:[%s1028 + $0xf1] sm:$0xff]
        %v1210 = vld [vmem:[%s1028 + $0xf9] sm:$0xff]
        %v1211 = vld [vmem:[%s1028 + $0x109] sm:$0xff]
        %v1212 = vld [vmem:[%s1028 + $0x111] sm:$0xff]
        %v1213 = vld [vmem:[%s1028 + $0x121] sm:$0xff]
        %v1214 = vld [vmem:[%s1028 + $0x129] sm:$0xff]
        %v1215 = vld [vmem:[%s1028 + $0x139] sm:$0xff]
        %v1216 = vld [vmem:[%s1028 + $0x141] sm:$0xff]
        %v1217 = vld [vmem:[%s1028 + $0x151] sm:$0xff]
        %v1218 = vld [vmem:[%s1028 + $0x159] sm:$0xff]
        %v1219 = vld [vmem:[%s1028 + $0x169] sm:$0xff]
        %v1220 = vld [vmem:[%s1028 + $0x171] sm:$0xff]
        %v1221 = vld [vmem:[%s1028 + $0x2] sm:$0xff]
        %v1222 = vld [vmem:[%s1028 + $0xa] sm:$0xff]
        %v1223 = vld [vmem:[%s1028 + $0x1a] sm:$0xff]
        %v1224 = vld [vmem:[%s1028 + $0x22] sm:$0xff]
        %v1225 = vld [vmem:[%s1028 + $0x32] sm:$0xff]
        %v1226 = vld [vmem:[%s1028 + $0x3a] sm:$0xff]
        %v1227 = vld [vmem:[%s1028 + $0x4a] sm:$0xff]
        %v1228 = vld [vmem:[%s1028 + $0x52] sm:$0xff]
        %v1229 = vld [vmem:[%s1028 + $0x62] sm:$0xff]
        %v1230 = vld [vmem:[%s1028 + $0x6a] sm:$0xff]
        %v1231 = vld [vmem:[%s1028 + $0x7a] sm:$0xff]
        %v1232 = vld [vmem:[%s1028 + $0x82] sm:$0xff]
        %v1233 = vld [vmem:[%s1028 + $0x92] sm:$0xff]
        %v1234 = vld [vmem:[%s1028 + $0x9a] sm:$0xff]
        %v1235 = vld [vmem:[%s1028 + $0xaa] sm:$0xff]
        %v1236 = vld [vmem:[%s1028 + $0xb2] sm:$0xff]
        %v1237 = vld [vmem:[%s1028 + $0xc2] sm:$0xff]
        %v1238 = vld [vmem:[%s1028 + $0xca] sm:$0xff]
        %v1239 = vld [vmem:[%s1028 + $0xda] sm:$0xff]
        %v1240 = vld [vmem:[%s1028 + $0xe2] sm:$0xff]
        %v1241 = vld [vmem:[%s1028 + $0xf2] sm:$0xff]
        %v1242 = vld [vmem:[%s1028 + $0xfa] sm:$0xff]
        %v1243 = vld [vmem:[%s1028 + $0x10a] sm:$0xff]
        %v1244 = vld [vmem:[%s1028 + $0x112] sm:$0xff]
        %v1245 = vld [vmem:[%s1028 + $0x122] sm:$0xff]
        %v1246 = vld [vmem:[%s1028 + $0x12a] sm:$0xff]
        %v1247 = vld [vmem:[%s1028 + $0x13a] sm:$0xff]
        %v1248 = vld [vmem:[%s1028 + $0x142] sm:$0xff]
        %v1249 = vld [vmem:[%s1028 + $0x152] sm:$0xff]
        %v1250 = vld [vmem:[%s1028 + $0x15a] sm:$0xff]
        %v1251 = vld [vmem:[%s1028 + $0x16a] sm:$0xff]
        %v1252 = vld [vmem:[%s1028 + $0x172] sm:$0xff]
        %s1253 = scalar_lea.vmem [#allocation2], 48
        %v1254 = vld [vmem:[%s1253] sm:$0xff]
        %v1255 = vld [vmem:[%s1253 + $0x8] sm:$0xff]
        %v1256 = vld [vmem:[%s1253 + $0x18] sm:$0xff]
        %v1257 = vld [vmem:[%s1253 + $0x20] sm:$0xff]
        %v1258 = vld [vmem:[%s1253 + $0x30] sm:$0xff]
        %v1259 = vld [vmem:[%s1253 + $0x38] sm:$0xff]
        %v1260 = vld [vmem:[%s1253 + $0x48] sm:$0xff]
        %v1261 = vld [vmem:[%s1253 + $0x50] sm:$0xff]
        %v1262 = vld [vmem:[%s1253 + $0x60] sm:$0xff]
        %v1263 = vld [vmem:[%s1253 + $0x68] sm:$0xff]
        %v1264 = vld [vmem:[%s1253 + $0x78] sm:$0xff]
        %v1265 = vld [vmem:[%s1253 + $0x80] sm:$0xff]
        %v1266 = vld [vmem:[%s1253 + $0x90] sm:$0xff]
        %v1267 = vld [vmem:[%s1253 + $0x98] sm:$0xff]
        %v1268 = vld [vmem:[%s1253 + $0xa8] sm:$0xff]
        %v1269 = vld [vmem:[%s1253 + $0xb0] sm:$0xff]
        %v1270 = vld [vmem:[%s1253 + $0xc0] sm:$0xff]
        %v1271 = vld [vmem:[%s1253 + $0xc8] sm:$0xff]
        %v1272 = vld [vmem:[%s1253 + $0xd8] sm:$0xff]
        %v1273 = vld [vmem:[%s1253 + $0xe0] sm:$0xff]
        %v1274 = vld [vmem:[%s1253 + $0xf0] sm:$0xff]
        %v1275 = vld [vmem:[%s1253 + $0xf8] sm:$0xff]
        %v1276 = vld [vmem:[%s1253 + $0x108] sm:$0xff]
        %v1277 = vld [vmem:[%s1253 + $0x110] sm:$0xff]
        %v1278 = vld [vmem:[%s1253 + $0x120] sm:$0xff]
        %v1279 = vld [vmem:[%s1253 + $0x128] sm:$0xff]
        %v1280 = vld [vmem:[%s1253 + $0x138] sm:$0xff]
        %v1281 = vld [vmem:[%s1253 + $0x140] sm:$0xff]
        %v1282 = vld [vmem:[%s1253 + $0x150] sm:$0xff]
        %v1283 = vld [vmem:[%s1253 + $0x158] sm:$0xff]
        %v1284 = vld [vmem:[%s1253 + $0x168] sm:$0xff]
        %v1285 = vld [vmem:[%s1253 + $0x170] sm:$0xff]
        %v1286 = vld [vmem:[%s1253 + $0x1] sm:$0xff]
        %v1287 = vld [vmem:[%s1253 + $0x9] sm:$0xff]
        %v1288 = vld [vmem:[%s1253 + $0x19] sm:$0xff]
        %v1289 = vld [vmem:[%s1253 + $0x21] sm:$0xff]
        %v1290 = vld [vmem:[%s1253 + $0x31] sm:$0xff]
        %v1291 = vld [vmem:[%s1253 + $0x39] sm:$0xff]
        %v1292 = vld [vmem:[%s1253 + $0x49] sm:$0xff]
        %v1293 = vld [vmem:[%s1253 + $0x51] sm:$0xff]
        %v1294 = vld [vmem:[%s1253 + $0x61] sm:$0xff]
        %v1295 = vld [vmem:[%s1253 + $0x69] sm:$0xff]
        %v1296 = vld [vmem:[%s1253 + $0x79] sm:$0xff]
        %v1297 = vld [vmem:[%s1253 + $0x81] sm:$0xff]
        %v1298 = vld [vmem:[%s1253 + $0x91] sm:$0xff]
        %v1299 = vld [vmem:[%s1253 + $0x99] sm:$0xff]
        %v1300 = vld [vmem:[%s1253 + $0xa9] sm:$0xff]
        %v1301 = vld [vmem:[%s1253 + $0xb1] sm:$0xff]
        %v1302 = vld [vmem:[%s1253 + $0xc1] sm:$0xff]
        %v1303 = vld [vmem:[%s1253 + $0xc9] sm:$0xff]
        %v1304 = vld [vmem:[%s1253 + $0xd9] sm:$0xff]
        %v1305 = vld [vmem:[%s1253 + $0xe1] sm:$0xff]
        %v1306 = vld [vmem:[%s1253 + $0xf1] sm:$0xff]
        %v1307 = vld [vmem:[%s1253 + $0xf9] sm:$0xff]
        %v1308 = vld [vmem:[%s1253 + $0x109] sm:$0xff]
        %v1309 = vld [vmem:[%s1253 + $0x111] sm:$0xff]
        %v1310 = vld [vmem:[%s1253 + $0x121] sm:$0xff]
        %v1311 = vld [vmem:[%s1253 + $0x129] sm:$0xff]
        %v1312 = vld [vmem:[%s1253 + $0x139] sm:$0xff]
        %v1313 = vld [vmem:[%s1253 + $0x141] sm:$0xff]
        %v1314 = vld [vmem:[%s1253 + $0x151] sm:$0xff]
        %v1315 = vld [vmem:[%s1253 + $0x159] sm:$0xff]
        %v1316 = vld [vmem:[%s1253 + $0x169] sm:$0xff]
        %v1317 = vld [vmem:[%s1253 + $0x171] sm:$0xff]
        %v1318 = vld [vmem:[%s1253 + $0x2] sm:$0xff]
        %v1319 = vld [vmem:[%s1253 + $0xa] sm:$0xff]
        %v1320 = vld [vmem:[%s1253 + $0x1a] sm:$0xff]
        %v1321 = vld [vmem:[%s1253 + $0x22] sm:$0xff]
        %v1322 = vld [vmem:[%s1253 + $0x32] sm:$0xff]
        %v1323 = vld [vmem:[%s1253 + $0x3a] sm:$0xff]
        %v1324 = vld [vmem:[%s1253 + $0x4a] sm:$0xff]
        %v1325 = vld [vmem:[%s1253 + $0x52] sm:$0xff]
        %v1326 = vld [vmem:[%s1253 + $0x62] sm:$0xff]
        %v1327 = vld [vmem:[%s1253 + $0x6a] sm:$0xff]
        %v1328 = vld [vmem:[%s1253 + $0x7a] sm:$0xff]
        %v1329 = vld [vmem:[%s1253 + $0x82] sm:$0xff]
        %v1330 = vld [vmem:[%s1253 + $0x92] sm:$0xff]
        %v1331 = vld [vmem:[%s1253 + $0x9a] sm:$0xff]
        %v1332 = vld [vmem:[%s1253 + $0xaa] sm:$0xff]
        %v1333 = vld [vmem:[%s1253 + $0xb2] sm:$0xff]
        %v1334 = vld [vmem:[%s1253 + $0xc2] sm:$0xff]
        %v1335 = vld [vmem:[%s1253 + $0xca] sm:$0xff]
        %v1336 = vld [vmem:[%s1253 + $0xda] sm:$0xff]
        %v1337 = vld [vmem:[%s1253 + $0xe2] sm:$0xff]
        %v1338 = vld [vmem:[%s1253 + $0xf2] sm:$0xff]
        %v1339 = vld [vmem:[%s1253 + $0xfa] sm:$0xff]
        %v1340 = vld [vmem:[%s1253 + $0x10a] sm:$0xff]
        %v1341 = vld [vmem:[%s1253 + $0x112] sm:$0xff]
        %v1342 = vld [vmem:[%s1253 + $0x122] sm:$0xff]
        %v1343 = vld [vmem:[%s1253 + $0x12a] sm:$0xff]
        %v1344 = vld [vmem:[%s1253 + $0x13a] sm:$0xff]
        %v1345 = vld [vmem:[%s1253 + $0x142] sm:$0xff]
        %v1346 = vld [vmem:[%s1253 + $0x152] sm:$0xff]
        %v1347 = vld [vmem:[%s1253 + $0x15a] sm:$0xff]
        %v1348 = vld [vmem:[%s1253 + $0x16a] sm:$0xff]
        %v1349 = vld [vmem:[%s1253 + $0x172] sm:$0xff]
        %1382 = vrot.lane.b32.xlu0 %v1093, 64
        %v1383 = vpop.permute.xlu0 %1382
        %1384 = vrot.lane.b32.xlu0 %v1094, 64
        %v1385 = vpop.permute.xlu0 %1384
        %1386 = vrot.lane.b32.xlu0 %v1095, 64
        %v1387 = vpop.permute.xlu0 %1386
        %1388 = vrot.lane.b32.xlu0 %v1096, 64
        %v1389 = vpop.permute.xlu0 %1388
        %1390 = vrot.lane.b32.xlu0 %v1097, 64
        %v1391 = vpop.permute.xlu0 %1390
        %1392 = vrot.lane.b32.xlu0 %v1098, 64
        %v1393 = vpop.permute.xlu0 %1392
        %1394 = vrot.lane.b32.xlu0 %v1099, 64
        %v1395 = vpop.permute.xlu0 %1394
        %1396 = vrot.lane.b32.xlu0 %v1100, 64
        %v1397 = vpop.permute.xlu0 %1396
        %1398 = vrot.lane.b32.xlu0 %v1101, 64
        %v1399 = vpop.permute.xlu0 %1398
        %1400 = vrot.lane.b32.xlu0 %v1102, 64
        %v1401 = vpop.permute.xlu0 %1400
        %1402 = vrot.lane.b32.xlu0 %v1103, 64
        %v1403 = vpop.permute.xlu0 %1402
        %1404 = vrot.lane.b32.xlu0 %v1104, 64
        %v1405 = vpop.permute.xlu0 %1404
        %1406 = vrot.lane.b32.xlu0 %v1105, 64
        %v1407 = vpop.permute.xlu0 %1406
        %1408 = vrot.lane.b32.xlu0 %v1106, 64
        %v1409 = vpop.permute.xlu0 %1408
        %1410 = vrot.lane.b32.xlu0 %v1107, 64
        %v1411 = vpop.permute.xlu0 %1410
        %1412 = vrot.lane.b32.xlu0 %v1108, 64
        %v1413 = vpop.permute.xlu0 %1412
        %1414 = vrot.lane.b32.xlu0 %v1109, 64
        %v1415 = vpop.permute.xlu0 %1414
        %1416 = vrot.lane.b32.xlu0 %v1110, 64
        %v1417 = vpop.permute.xlu0 %1416
        %1418 = vrot.lane.b32.xlu0 %v1111, 64
        %v1419 = vpop.permute.xlu0 %1418
        %1420 = vrot.lane.b32.xlu0 %v1112, 64
        %v1421 = vpop.permute.xlu0 %1420
        %1422 = vrot.lane.b32.xlu0 %v1113, 64
        %v1423 = vpop.permute.xlu0 %1422
        %1424 = vrot.lane.b32.xlu0 %v1114, 64
        %v1425 = vpop.permute.xlu0 %1424
        %1426 = vrot.lane.b32.xlu0 %v1115, 64
        %v1427 = vpop.permute.xlu0 %1426
        %1428 = vrot.lane.b32.xlu0 %v1116, 64
        %v1429 = vpop.permute.xlu0 %1428
        %1430 = vrot.lane.b32.xlu0 %v1117, 64
        %v1431 = vpop.permute.xlu0 %1430
        %1432 = vrot.lane.b32.xlu0 %v1118, 64
        %v1433 = vpop.permute.xlu0 %1432
        %1434 = vrot.lane.b32.xlu0 %v1119, 64
        %v1435 = vpop.permute.xlu0 %1434
        %1436 = vrot.lane.b32.xlu0 %v1120, 64
        %v1437 = vpop.permute.xlu0 %1436
        %1438 = vrot.lane.b32.xlu0 %v1121, 64
        %v1439 = vpop.permute.xlu0 %1438
        %1440 = vrot.lane.b32.xlu0 %v1122, 64
        %v1441 = vpop.permute.xlu0 %1440
        %1442 = vrot.lane.b32.xlu0 %v1123, 64
        %v1443 = vpop.permute.xlu0 %1442
        %1444 = vrot.lane.b32.xlu0 %v1124, 64
        %v1445 = vpop.permute.xlu0 %1444
        %1510 = vrot.lane.b32.xlu0 %v1157, 64
        %v1511 = vpop.permute.xlu0 %1510
        %1512 = vrot.lane.b32.xlu0 %v1158, 64
        %v1513 = vpop.permute.xlu0 %1512
        %1514 = vrot.lane.b32.xlu0 %v1159, 64
        %v1515 = vpop.permute.xlu0 %1514
        %1516 = vrot.lane.b32.xlu0 %v1160, 64
        %v1517 = vpop.permute.xlu0 %1516
        %1518 = vrot.lane.b32.xlu0 %v1161, 64
        %v1519 = vpop.permute.xlu0 %1518
        %1520 = vrot.lane.b32.xlu0 %v1162, 64
        %v1521 = vpop.permute.xlu0 %1520
        %1522 = vrot.lane.b32.xlu0 %v1163, 64
        %v1523 = vpop.permute.xlu0 %1522
        %1524 = vrot.lane.b32.xlu0 %v1164, 64
        %v1525 = vpop.permute.xlu0 %1524
        %1526 = vrot.lane.b32.xlu0 %v1165, 64
        %v1527 = vpop.permute.xlu0 %1526
        %1528 = vrot.lane.b32.xlu0 %v1166, 64
        %v1529 = vpop.permute.xlu0 %1528
        %1530 = vrot.lane.b32.xlu0 %v1167, 64
        %v1531 = vpop.permute.xlu0 %1530
        %1532 = vrot.lane.b32.xlu0 %v1168, 64
        %v1533 = vpop.permute.xlu0 %1532
        %1534 = vrot.lane.b32.xlu0 %v1169, 64
        %v1535 = vpop.permute.xlu0 %1534
        %1536 = vrot.lane.b32.xlu0 %v1170, 64
        %v1537 = vpop.permute.xlu0 %1536
        %1538 = vrot.lane.b32.xlu0 %v1171, 64
        %v1539 = vpop.permute.xlu0 %1538
        %1540 = vrot.lane.b32.xlu0 %v1172, 64
        %v1541 = vpop.permute.xlu0 %1540
        %1542 = vrot.lane.b32.xlu0 %v1173, 64
        %v1543 = vpop.permute.xlu0 %1542
        %1544 = vrot.lane.b32.xlu0 %v1174, 64
        %v1545 = vpop.permute.xlu0 %1544
        %1546 = vrot.lane.b32.xlu0 %v1175, 64
        %v1547 = vpop.permute.xlu0 %1546
        %1548 = vrot.lane.b32.xlu0 %v1176, 64
        %v1549 = vpop.permute.xlu0 %1548
        %1550 = vrot.lane.b32.xlu0 %v1177, 64
        %v1551 = vpop.permute.xlu0 %1550
        %1552 = vrot.lane.b32.xlu0 %v1178, 64
        %v1553 = vpop.permute.xlu0 %1552
        %1554 = vrot.lane.b32.xlu0 %v1179, 64
        %v1555 = vpop.permute.xlu0 %1554
        %1556 = vrot.lane.b32.xlu0 %v1180, 64
        %v1557 = vpop.permute.xlu0 %1556
        %1558 = vrot.lane.b32.xlu0 %v1181, 64
        %v1559 = vpop.permute.xlu0 %1558
        %1560 = vrot.lane.b32.xlu0 %v1182, 64
        %v1561 = vpop.permute.xlu0 %1560
        %1562 = vrot.lane.b32.xlu0 %v1183, 64
        %v1563 = vpop.permute.xlu0 %1562
        %1564 = vrot.lane.b32.xlu0 %v1184, 64
        %v1565 = vpop.permute.xlu0 %1564
        %1566 = vrot.lane.b32.xlu0 %v1185, 64
        %v1567 = vpop.permute.xlu0 %1566
        %1568 = vrot.lane.b32.xlu0 %v1186, 64
        %v1569 = vpop.permute.xlu0 %1568
        %1570 = vrot.lane.b32.xlu0 %v1187, 64
        %v1571 = vpop.permute.xlu0 %1570
        %1572 = vrot.lane.b32.xlu0 %v1188, 64
        %v1573 = vpop.permute.xlu0 %1572
        %1638 = vrot.lane.b32.xlu0 %v1221, 64
        %v1639 = vpop.permute.xlu0 %1638
        %1640 = vrot.lane.b32.xlu0 %v1222, 64
        %v1641 = vpop.permute.xlu0 %1640
        %1642 = vrot.lane.b32.xlu0 %v1223, 64
        %v1643 = vpop.permute.xlu0 %1642
        %1644 = vrot.lane.b32.xlu0 %v1224, 64
        %v1645 = vpop.permute.xlu0 %1644
        %1646 = vrot.lane.b32.xlu0 %v1225, 64
        %v1647 = vpop.permute.xlu0 %1646
        %1648 = vrot.lane.b32.xlu0 %v1226, 64
        %v1649 = vpop.permute.xlu0 %1648
        %1650 = vrot.lane.b32.xlu0 %v1227, 64
        %v1651 = vpop.permute.xlu0 %1650
        %1652 = vrot.lane.b32.xlu0 %v1228, 64
        %v1653 = vpop.permute.xlu0 %1652
        %1654 = vrot.lane.b32.xlu0 %v1229, 64
        %v1655 = vpop.permute.xlu0 %1654
        %1656 = vrot.lane.b32.xlu0 %v1230, 64
        %v1657 = vpop.permute.xlu0 %1656
        %1658 = vrot.lane.b32.xlu0 %v1231, 64
        %v1659 = vpop.permute.xlu0 %1658
        %1660 = vrot.lane.b32.xlu0 %v1232, 64
        %v1661 = vpop.permute.xlu0 %1660
        %1662 = vrot.lane.b32.xlu0 %v1233, 64
        %v1663 = vpop.permute.xlu0 %1662
        %1664 = vrot.lane.b32.xlu0 %v1234, 64
        %v1665 = vpop.permute.xlu0 %1664
        %1666 = vrot.lane.b32.xlu0 %v1235, 64
        %v1667 = vpop.permute.xlu0 %1666
        %1668 = vrot.lane.b32.xlu0 %v1236, 64
        %v1669 = vpop.permute.xlu0 %1668
        %1670 = vrot.lane.b32.xlu0 %v1237, 64
        %v1671 = vpop.permute.xlu0 %1670
        %1672 = vrot.lane.b32.xlu0 %v1238, 64
        %v1673 = vpop.permute.xlu0 %1672
        %1674 = vrot.lane.b32.xlu0 %v1239, 64
        %v1675 = vpop.permute.xlu0 %1674
        %1676 = vrot.lane.b32.xlu0 %v1240, 64
        %v1677 = vpop.permute.xlu0 %1676
        %1678 = vrot.lane.b32.xlu0 %v1241, 64
        %v1679 = vpop.permute.xlu0 %1678
        %1680 = vrot.lane.b32.xlu0 %v1242, 64
        %v1681 = vpop.permute.xlu0 %1680
        %1682 = vrot.lane.b32.xlu0 %v1243, 64
        %v1683 = vpop.permute.xlu0 %1682
        %1684 = vrot.lane.b32.xlu0 %v1244, 64
        %v1685 = vpop.permute.xlu0 %1684
        %1686 = vrot.lane.b32.xlu0 %v1245, 64
        %v1687 = vpop.permute.xlu0 %1686
        %1688 = vrot.lane.b32.xlu0 %v1246, 64
        %v1689 = vpop.permute.xlu0 %1688
        %1690 = vrot.lane.b32.xlu0 %v1247, 64
        %v1691 = vpop.permute.xlu0 %1690
        %1692 = vrot.lane.b32.xlu0 %v1248, 64
        %v1693 = vpop.permute.xlu0 %1692
        %1694 = vrot.lane.b32.xlu0 %v1249, 64
        %v1695 = vpop.permute.xlu0 %1694
        %1696 = vrot.lane.b32.xlu0 %v1250, 64
        %v1697 = vpop.permute.xlu0 %1696
        %1698 = vrot.lane.b32.xlu0 %v1251, 64
        %v1699 = vpop.permute.xlu0 %1698
        %1700 = vrot.lane.b32.xlu0 %v1252, 64
        %v1701 = vpop.permute.xlu0 %1700
        %1766 = vrot.lane.b32.xlu0 %v1286, 64
        %v1767 = vpop.permute.xlu0 %1766
        %1768 = vrot.lane.b32.xlu0 %v1287, 64
        %v1769 = vpop.permute.xlu0 %1768
        %1770 = vrot.lane.b32.xlu0 %v1288, 64
        %v1771 = vpop.permute.xlu0 %1770
        %1772 = vrot.lane.b32.xlu0 %v1289, 64
        %v1773 = vpop.permute.xlu0 %1772
        %1774 = vrot.lane.b32.xlu0 %v1290, 64
        %v1775 = vpop.permute.xlu0 %1774
        %1776 = vrot.lane.b32.xlu0 %v1291, 64
        %v1777 = vpop.permute.xlu0 %1776
        %1778 = vrot.lane.b32.xlu0 %v1292, 64
        %v1779 = vpop.permute.xlu0 %1778
        %1780 = vrot.lane.b32.xlu0 %v1293, 64
        %v1781 = vpop.permute.xlu0 %1780
        %1782 = vrot.lane.b32.xlu0 %v1294, 64
        %v1783 = vpop.permute.xlu0 %1782
        %1784 = vrot.lane.b32.xlu0 %v1295, 64
        %v1785 = vpop.permute.xlu0 %1784
        %1786 = vrot.lane.b32.xlu0 %v1296, 64
        %v1787 = vpop.permute.xlu0 %1786
        %1788 = vrot.lane.b32.xlu0 %v1297, 64
        %v1789 = vpop.permute.xlu0 %1788
        %1790 = vrot.lane.b32.xlu0 %v1298, 64
        %v1791 = vpop.permute.xlu0 %1790
        %1792 = vrot.lane.b32.xlu0 %v1299, 64
        %v1793 = vpop.permute.xlu0 %1792
        %1794 = vrot.lane.b32.xlu0 %v1300, 64
        %v1795 = vpop.permute.xlu0 %1794
        %1796 = vrot.lane.b32.xlu0 %v1301, 64
        %v1797 = vpop.permute.xlu0 %1796
        %1798 = vrot.lane.b32.xlu0 %v1302, 64
        %v1799 = vpop.permute.xlu0 %1798
        %1800 = vrot.lane.b32.xlu0 %v1303, 64
        %v1801 = vpop.permute.xlu0 %1800
        %1802 = vrot.lane.b32.xlu0 %v1304, 64
        %v1803 = vpop.permute.xlu0 %1802
        %1804 = vrot.lane.b32.xlu0 %v1305, 64
        %v1805 = vpop.permute.xlu0 %1804
        %1806 = vrot.lane.b32.xlu0 %v1306, 64
        %v1807 = vpop.permute.xlu0 %1806
        %1808 = vrot.lane.b32.xlu0 %v1307, 64
        %v1809 = vpop.permute.xlu0 %1808
        %1810 = vrot.lane.b32.xlu0 %v1308, 64
        %v1811 = vpop.permute.xlu0 %1810
        %1812 = vrot.lane.b32.xlu0 %v1309, 64
        %v1813 = vpop.permute.xlu0 %1812
        %1814 = vrot.lane.b32.xlu0 %v1310, 64
        %v1815 = vpop.permute.xlu0 %1814
        %1816 = vrot.lane.b32.xlu0 %v1311, 64
        %v1817 = vpop.permute.xlu0 %1816
        %1818 = vrot.lane.b32.xlu0 %v1312, 64
        %v1819 = vpop.permute.xlu0 %1818
        %1820 = vrot.lane.b32.xlu0 %v1313, 64
        %v1821 = vpop.permute.xlu0 %1820
        %1822 = vrot.lane.b32.xlu0 %v1314, 64
        %v1823 = vpop.permute.xlu0 %1822
        %1824 = vrot.lane.b32.xlu0 %v1315, 64
        %v1825 = vpop.permute.xlu0 %1824
        %1826 = vrot.lane.b32.xlu0 %v1316, 64
        %v1827 = vpop.permute.xlu0 %1826
        %1828 = vrot.lane.b32.xlu0 %v1317, 64
        %v1829 = vpop.permute.xlu0 %1828
        %v1862 = vsel %vm982, %v1061, %v1383
        %v1863 = vsel %vm982, %v1062, %v1385
        %v1864 = vsel %vm982, %v1063, %v1387
        %v1865 = vsel %vm982, %v1064, %v1389
        %v1866 = vsel %vm982, %v1065, %v1391
        %v1867 = vsel %vm982, %v1066, %v1393
        %v1868 = vsel %vm982, %v1067, %v1395
        %v1869 = vsel %vm982, %v1068, %v1397
        %v1870 = vsel %vm982, %v1069, %v1399
        %v1871 = vsel %vm982, %v1070, %v1401
        %v1872 = vsel %vm982, %v1071, %v1403
        %v1873 = vsel %vm982, %v1072, %v1405
        %v1874 = vsel %vm982, %v1073, %v1407
        %v1875 = vsel %vm982, %v1074, %v1409
        %v1876 = vsel %vm982, %v1075, %v1411
        %v1877 = vsel %vm982, %v1076, %v1413
        %v1878 = vsel %vm982, %v1077, %v1415
        %v1879 = vsel %vm982, %v1078, %v1417
        %v1880 = vsel %vm982, %v1079, %v1419
        %v1881 = vsel %vm982, %v1080, %v1421
        %v1882 = vsel %vm982, %v1081, %v1423
        %v1883 = vsel %vm982, %v1082, %v1425
        %v1884 = vsel %vm982, %v1083, %v1427
        %v1885 = vsel %vm982, %v1084, %v1429
        %v1886 = vsel %vm982, %v1085, %v1431
        %v1887 = vsel %vm982, %v1086, %v1433
        %v1888 = vsel %vm982, %v1087, %v1435
        %v1889 = vsel %vm982, %v1088, %v1437
        %v1890 = vsel %vm982, %v1089, %v1439
        %v1891 = vsel %vm982, %v1090, %v1441
        %v1892 = vsel %vm982, %v1091, %v1443
        %v1893 = vsel %vm982, %v1092, %v1445
        %v1894 = vsel %vm982, %v1125, %v1511
        %v1895 = vsel %vm982, %v1126, %v1513
        %v1896 = vsel %vm982, %v1127, %v1515
        %v1897 = vsel %vm982, %v1128, %v1517
        %v1898 = vsel %vm982, %v1129, %v1519
        %v1899 = vsel %vm982, %v1130, %v1521
        %v1900 = vsel %vm982, %v1131, %v1523
        %v1901 = vsel %vm982, %v1132, %v1525
        %v1902 = vsel %vm982, %v1133, %v1527
        %v1903 = vsel %vm982, %v1134, %v1529
        %v1904 = vsel %vm982, %v1135, %v1531
        %v1905 = vsel %vm982, %v1136, %v1533
        %v1906 = vsel %vm982, %v1137, %v1535
        %v1907 = vsel %vm982, %v1138, %v1537
        %v1908 = vsel %vm982, %v1139, %v1539
        %v1909 = vsel %vm982, %v1140, %v1541
        %v1910 = vsel %vm982, %v1141, %v1543
        %v1911 = vsel %vm982, %v1142, %v1545
        %v1912 = vsel %vm982, %v1143, %v1547
        %v1913 = vsel %vm982, %v1144, %v1549
        %v1914 = vsel %vm982, %v1145, %v1551
        %v1915 = vsel %vm982, %v1146, %v1553
        %v1916 = vsel %vm982, %v1147, %v1555
        %v1917 = vsel %vm982, %v1148, %v1557
        %v1918 = vsel %vm982, %v1149, %v1559
        %v1919 = vsel %vm982, %v1150, %v1561
        %v1920 = vsel %vm982, %v1151, %v1563
        %v1921 = vsel %vm982, %v1152, %v1565
        %v1922 = vsel %vm982, %v1153, %v1567
        %v1923 = vsel %vm982, %v1154, %v1569
        %v1924 = vsel %vm982, %v1155, %v1571
        %v1925 = vsel %vm982, %v1156, %v1573
        %v1926 = vsel %vm982, %v1189, %v1639
        %v1927 = vsel %vm982, %v1190, %v1641
        %v1928 = vsel %vm982, %v1191, %v1643
        %v1929 = vsel %vm982, %v1192, %v1645
        %v1930 = vsel %vm982, %v1193, %v1647
        %v1931 = vsel %vm982, %v1194, %v1649
        %v1932 = vsel %vm982, %v1195, %v1651
        %v1933 = vsel %vm982, %v1196, %v1653
        %v1934 = vsel %vm982, %v1197, %v1655
        %v1935 = vsel %vm982, %v1198, %v1657
        %v1936 = vsel %vm982, %v1199, %v1659
        %v1937 = vsel %vm982, %v1200, %v1661
        %v1938 = vsel %vm982, %v1201, %v1663
        %v1939 = vsel %vm982, %v1202, %v1665
        %v1940 = vsel %vm982, %v1203, %v1667
        %v1941 = vsel %vm982, %v1204, %v1669
        %v1942 = vsel %vm982, %v1205, %v1671
        %v1943 = vsel %vm982, %v1206, %v1673
        %v1944 = vsel %vm982, %v1207, %v1675
        %v1945 = vsel %vm982, %v1208, %v1677
        %v1946 = vsel %vm982, %v1209, %v1679
        %v1947 = vsel %vm982, %v1210, %v1681
        %v1948 = vsel %vm982, %v1211, %v1683
        %v1949 = vsel %vm982, %v1212, %v1685
        %v1950 = vsel %vm982, %v1213, %v1687
        %v1951 = vsel %vm982, %v1214, %v1689
        %v1952 = vsel %vm982, %v1215, %v1691
        %v1953 = vsel %vm982, %v1216, %v1693
        %v1954 = vsel %vm982, %v1217, %v1695
        %v1955 = vsel %vm982, %v1218, %v1697
        %v1956 = vsel %vm982, %v1219, %v1699
        %v1957 = vsel %vm982, %v1220, %v1701
        %v1958 = vsel %vm982, %v1254, %v1767
        %v1959 = vsel %vm982, %v1255, %v1769
        %v1960 = vsel %vm982, %v1256, %v1771
        %v1961 = vsel %vm982, %v1257, %v1773
        %v1962 = vsel %vm982, %v1258, %v1775
        %v1963 = vsel %vm982, %v1259, %v1777
        %v1964 = vsel %vm982, %v1260, %v1779
        %v1965 = vsel %vm982, %v1261, %v1781
        %v1966 = vsel %vm982, %v1262, %v1783
        %v1967 = vsel %vm982, %v1263, %v1785
        %v1968 = vsel %vm982, %v1264, %v1787
        %v1969 = vsel %vm982, %v1265, %v1789
        %v1970 = vsel %vm982, %v1266, %v1791
        %v1971 = vsel %vm982, %v1267, %v1793
        %v1972 = vsel %vm982, %v1268, %v1795
        %v1973 = vsel %vm982, %v1269, %v1797
        %v1974 = vsel %vm982, %v1270, %v1799
        %v1975 = vsel %vm982, %v1271, %v1801
        %v1976 = vsel %vm982, %v1272, %v1803
        %v1977 = vsel %vm982, %v1273, %v1805
        %v1978 = vsel %vm982, %v1274, %v1807
        %v1979 = vsel %vm982, %v1275, %v1809
        %v1980 = vsel %vm982, %v1276, %v1811
        %v1981 = vsel %vm982, %v1277, %v1813
        %v1982 = vsel %vm982, %v1278, %v1815
        %v1983 = vsel %vm982, %v1279, %v1817
        %v1984 = vsel %vm982, %v1280, %v1819
        %v1985 = vsel %vm982, %v1281, %v1821
        %v1986 = vsel %vm982, %v1282, %v1823
        %v1987 = vsel %vm982, %v1283, %v1825
        %v1988 = vsel %vm982, %v1284, %v1827
        %v1989 = vsel %vm982, %v1285, %v1829
        %v1990 = vpack.c.bf16 %v1863, %v1862
        %v1991 = vpack.c.bf16 %v1895, %v1894
        %v1992 = vpack.c.bf16 %v1927, %v1926
        %v1993 = vpack.c.bf16 %v1959, %v1958
        %v1994 = vpack.c.bf16 %v1319, %v1318
        %v1995 = vpack.c.bf16 %v1865, %v1864
        %v1996 = vpack.c.bf16 %v1897, %v1896
        %v1997 = vpack.c.bf16 %v1929, %v1928
        %v1998 = vpack.c.bf16 %v1961, %v1960
        %v1999 = vpack.c.bf16 %v1321, %v1320
        %v2000 = vpack.c.bf16 %v1867, %v1866
        %v2001 = vpack.c.bf16 %v1899, %v1898
        %v2002 = vpack.c.bf16 %v1931, %v1930
        %v2003 = vpack.c.bf16 %v1963, %v1962
        %v2004 = vpack.c.bf16 %v1323, %v1322
        %v2005 = vpack.c.bf16 %v1869, %v1868
        %v2006 = vpack.c.bf16 %v1901, %v1900
        %v2007 = vpack.c.bf16 %v1933, %v1932
        %v2008 = vpack.c.bf16 %v1965, %v1964
        %v2009 = vpack.c.bf16 %v1325, %v1324
        %v2010 = vpack.c.bf16 %v1871, %v1870
        %v2011 = vpack.c.bf16 %v1903, %v1902
        %v2012 = vpack.c.bf16 %v1935, %v1934
        %v2013 = vpack.c.bf16 %v1967, %v1966
        %v2014 = vpack.c.bf16 %v1327, %v1326
        %v2015 = vpack.c.bf16 %v1873, %v1872
        %v2016 = vpack.c.bf16 %v1905, %v1904
        %v2017 = vpack.c.bf16 %v1937, %v1936
        %v2018 = vpack.c.bf16 %v1969, %v1968
        %v2019 = vpack.c.bf16 %v1329, %v1328
        %v2020 = vpack.c.bf16 %v1875, %v1874
        %v2021 = vpack.c.bf16 %v1907, %v1906
        %v2022 = vpack.c.bf16 %v1939, %v1938
        %v2023 = vpack.c.bf16 %v1971, %v1970
        %v2024 = vpack.c.bf16 %v1331, %v1330
        %v2025 = vpack.c.bf16 %v1877, %v1876
        %v2026 = vpack.c.bf16 %v1909, %v1908
        %v2027 = vpack.c.bf16 %v1941, %v1940
        %v2028 = vpack.c.bf16 %v1973, %v1972
        %v2029 = vpack.c.bf16 %v1333, %v1332
        %v2030 = vpack.c.bf16 %v1879, %v1878
        %v2031 = vpack.c.bf16 %v1911, %v1910
        %v2032 = vpack.c.bf16 %v1943, %v1942
        %v2033 = vpack.c.bf16 %v1975, %v1974
        %v2034 = vpack.c.bf16 %v1335, %v1334
        %v2035 = vpack.c.bf16 %v1881, %v1880
        %v2036 = vpack.c.bf16 %v1913, %v1912
        %v2037 = vpack.c.bf16 %v1945, %v1944
        %v2038 = vpack.c.bf16 %v1977, %v1976
        %v2039 = vpack.c.bf16 %v1337, %v1336
        %v2040 = vpack.c.bf16 %v1883, %v1882
        %v2041 = vpack.c.bf16 %v1915, %v1914
        %v2042 = vpack.c.bf16 %v1947, %v1946
        %v2043 = vpack.c.bf16 %v1979, %v1978
        %v2044 = vpack.c.bf16 %v1339, %v1338
        %v2045 = vpack.c.bf16 %v1885, %v1884
        %v2046 = vpack.c.bf16 %v1917, %v1916
        %v2047 = vpack.c.bf16 %v1949, %v1948
        %v2048 = vpack.c.bf16 %v1981, %v1980
        %v2049 = vpack.c.bf16 %v1341, %v1340
        %v2050 = vpack.c.bf16 %v1887, %v1886
        %v2051 = vpack.c.bf16 %v1919, %v1918
        %v2052 = vpack.c.bf16 %v1951, %v1950
        %v2053 = vpack.c.bf16 %v1983, %v1982
        %v2054 = vpack.c.bf16 %v1343, %v1342
        %v2055 = vpack.c.bf16 %v1889, %v1888
        %v2056 = vpack.c.bf16 %v1921, %v1920
        %v2057 = vpack.c.bf16 %v1953, %v1952
        %v2058 = vpack.c.bf16 %v1985, %v1984
        %v2059 = vpack.c.bf16 %v1345, %v1344
        %v2060 = vpack.c.bf16 %v1891, %v1890
        %v2061 = vpack.c.bf16 %v1923, %v1922
        %v2062 = vpack.c.bf16 %v1955, %v1954
        %v2063 = vpack.c.bf16 %v1987, %v1986
        %v2064 = vpack.c.bf16 %v1347, %v1346
        %v2065 = vpack.c.bf16 %v1893, %v1892
        %v2066 = vpack.c.bf16 %v1925, %v1924
        %v2067 = vpack.c.bf16 %v1957, %v1956
        %v2068 = vpack.c.bf16 %v1989, %v1988
        %v2069 = vpack.c.bf16 %v1349, %v1348
        %v2070 = vld [vmem:[%s4] sm:$0xf]
        %v2071 = vld [vmem:[%s4 + $0x4] sm:$0xf]
        %v2072 = vld [vmem:[%s4 + $0x8] sm:$0xf]
        %v2073 = vld [vmem:[%s4 + $0xc] sm:$0xf]
        %v2074 = vld [vmem:[%s4 + $0x10] sm:$0xf]
        %v2075 = vld [vmem:[%s4 + $0x14] sm:$0xf]
        %v2076 = vld [vmem:[%s4 + $0x18] sm:$0xf]
        %v2077 = vld [vmem:[%s4 + $0x1c] sm:$0xf]
        %v2078 = vld [vmem:[%s4 + $0x20] sm:$0xf]
        %v2079 = vld [vmem:[%s4 + $0x24] sm:$0xf]
        %v2080 = vld [vmem:[%s4 + $0x28] sm:$0xf]
        %v2081 = vld [vmem:[%s4 + $0x2c] sm:$0xf]
        %v2082 = vld [vmem:[%s4 + $0x30] sm:$0xf]
        %v2083 = vld [vmem:[%s4 + $0x34] sm:$0xf]
        %v2084 = vld [vmem:[%s4 + $0x38] sm:$0xf]
        %v2085 = vld [vmem:[%s4 + $0x3c] sm:$0xf]
        %v2086 = vld [vmem:[%s4 + $0x40] sm:$0xf]
        %v2087 = vld [vmem:[%s4 + $0x44] sm:$0xf]
        %v2088 = vld [vmem:[%s4 + $0x48] sm:$0xf]
        %v2089 = vld [vmem:[%s4 + $0x4c] sm:$0xf]
        %v2090 = vld [vmem:[%s4 + $0x50] sm:$0xf]
        %v2091 = vld [vmem:[%s4 + $0x54] sm:$0xf]
        %v2092 = vld [vmem:[%s4 + $0x58] sm:$0xf]
        %v2093 = vld [vmem:[%s4 + $0x5c] sm:$0xf]
        %v2094 = vld [vmem:[%s4 + $0x60] sm:$0xf]
        %v2095 = vld [vmem:[%s4 + $0x64] sm:$0xf]
        %v2096 = vld [vmem:[%s4 + $0x68] sm:$0xf]
        %v2097 = vld [vmem:[%s4 + $0x6c] sm:$0xf]
        %v2098 = vld [vmem:[%s4 + $0x70] sm:$0xf]
        %v2099 = vld [vmem:[%s4 + $0x74] sm:$0xf]
        %v2100 = vld [vmem:[%s4 + $0x78] sm:$0xf]
        %v2101 = vld [vmem:[%s4 + $0x7c] sm:$0xf]
        %v2102 = vld [vmem:[%s4 + $0x80] sm:$0xf]
        %v2103 = vld [vmem:[%s4 + $0x84] sm:$0xf]
        %v2104 = vld [vmem:[%s4 + $0x88] sm:$0xf]
        %v2105 = vld [vmem:[%s4 + $0x8c] sm:$0xf]
        %v2106 = vld [vmem:[%s4 + $0x90] sm:$0xf]
        %v2107 = vld [vmem:[%s4 + $0x94] sm:$0xf]
        %v2108 = vld [vmem:[%s4 + $0x98] sm:$0xf]
        %v2109 = vld [vmem:[%s4 + $0x9c] sm:$0xf]
        %v2110 = vld [vmem:[%s4 + $0xa0] sm:$0xf]
        %v2111 = vld [vmem:[%s4 + $0xa4] sm:$0xf]
        %v2112 = vld [vmem:[%s4 + $0xa8] sm:$0xf]
        %v2113 = vld [vmem:[%s4 + $0xac] sm:$0xf]
        %v2114 = vld [vmem:[%s4 + $0xb0] sm:$0xf]
        %v2115 = vld [vmem:[%s4 + $0xb4] sm:$0xf]
        %v2116 = vld [vmem:[%s4 + $0xb8] sm:$0xf]
        %v2117 = vld [vmem:[%s4 + $0xbc] sm:$0xf]
        %v2118 = vld [vmem:[%s4 + $0xc0] sm:$0xf]
        %v2119 = vld [vmem:[%s4 + $0xc4] sm:$0xf]
        %v2120 = vld [vmem:[%s4 + $0xc8] sm:$0xf]
        %v2121 = vld [vmem:[%s4 + $0xcc] sm:$0xf]
        %v2122 = vld [vmem:[%s4 + $0xd0] sm:$0xf]
        %v2123 = vld [vmem:[%s4 + $0xd4] sm:$0xf]
        %v2124 = vld [vmem:[%s4 + $0xd8] sm:$0xf]
        %v2125 = vld [vmem:[%s4 + $0xdc] sm:$0xf]
        %v2126 = vld [vmem:[%s4 + $0xe0] sm:$0xf]
        %v2127 = vld [vmem:[%s4 + $0xe4] sm:$0xf]
        %v2128 = vld [vmem:[%s4 + $0xe8] sm:$0xf]
        %v2129 = vld [vmem:[%s4 + $0xec] sm:$0xf]
        %v2130 = vld [vmem:[%s4 + $0xf0] sm:$0xf]
        %v2131 = vld [vmem:[%s4 + $0xf4] sm:$0xf]
        %v2132 = vld [vmem:[%s4 + $0xf8] sm:$0xf]
        %v2133 = vld [vmem:[%s4 + $0xfc] sm:$0xf]
        %v2134 = vld [vmem:[%s4 + $0x100] sm:$0xf]
        %v2135 = vld [vmem:[%s4 + $0x104] sm:$0xf]
        %v2136 = vld [vmem:[%s4 + $0x108] sm:$0xf]
        %v2137 = vld [vmem:[%s4 + $0x10c] sm:$0xf]
        %v2138 = vld [vmem:[%s4 + $0x110] sm:$0xf]
        %v2139 = vld [vmem:[%s4 + $0x114] sm:$0xf]
        %v2140 = vld [vmem:[%s4 + $0x118] sm:$0xf]
        %v2141 = vld [vmem:[%s4 + $0x11c] sm:$0xf]
        %v2214 = vunpack.c.l.b16 %v2070
        %v2215 = vunpack.c.l.b16 %v2071
        %v2216 = vunpack.c.l.b16 %v2072
        %v2217 = vunpack.c.l.b16 %v2073
        %v2218 = vunpack.c.l.b16 %v2074
        %v2219 = vunpack.c.l.b16 %v2075
        %v2220 = vunpack.c.l.b16 %v2076
        %v2221 = vunpack.c.l.b16 %v2077
        %v2222 = vunpack.c.l.b16 %v2078
        %v2223 = vunpack.c.l.b16 %v2079
        %v2224 = vunpack.c.l.b16 %v2080
        %v2225 = vunpack.c.l.b16 %v2081
        %v2226 = vunpack.c.l.b16 %v2082
        %v2227 = vunpack.c.l.b16 %v2083
        %v2228 = vunpack.c.l.b16 %v2084
        %v2229 = vunpack.c.l.b16 %v2085
        %v2230 = vunpack.c.l.b16 %v2086
        %v2231 = vunpack.c.l.b16 %v2087
        %v2232 = vunpack.c.l.b16 %v2088
        %v2233 = vunpack.c.l.b16 %v2089
        %v2234 = vunpack.c.l.b16 %v2090
        %v2235 = vunpack.c.l.b16 %v2091
        %v2236 = vunpack.c.l.b16 %v2092
        %v2237 = vunpack.c.l.b16 %v2093
        %v2238 = vunpack.c.l.b16 %v2094
        %v2239 = vunpack.c.l.b16 %v2095
        %v2240 = vunpack.c.l.b16 %v2096
        %v2241 = vunpack.c.l.b16 %v2097
        %v2242 = vunpack.c.l.b16 %v2098
        %v2243 = vunpack.c.l.b16 %v2099
        %v2244 = vunpack.c.l.b16 %v2100
        %v2245 = vunpack.c.l.b16 %v2101
        %v2246 = vunpack.c.l.b16 %v2102
        %v2247 = vunpack.c.l.b16 %v2103
        %v2248 = vunpack.c.l.b16 %v2104
        %v2249 = vunpack.c.l.b16 %v2105
        %v2250 = vunpack.c.l.b16 %v2106
        %v2251 = vunpack.c.l.b16 %v2107
        %v2252 = vunpack.c.l.b16 %v2108
        %v2253 = vunpack.c.l.b16 %v2109
        %v2254 = vunpack.c.l.b16 %v2110
        %v2255 = vunpack.c.l.b16 %v2111
        %v2256 = vunpack.c.l.b16 %v2112
        %v2257 = vunpack.c.l.b16 %v2113
        %v2258 = vunpack.c.l.b16 %v2114
        %v2259 = vunpack.c.l.b16 %v2115
        %v2260 = vunpack.c.l.b16 %v2116
        %v2261 = vunpack.c.l.b16 %v2117
        %v2262 = vunpack.c.l.b16 %v2118
        %v2263 = vunpack.c.l.b16 %v2119
        %v2264 = vunpack.c.l.b16 %v2120
        %v2265 = vunpack.c.l.b16 %v2121
        %v2266 = vunpack.c.l.b16 %v2122
        %v2267 = vunpack.c.l.b16 %v2123
        %v2268 = vunpack.c.l.b16 %v2124
        %v2269 = vunpack.c.l.b16 %v2125
        %v2270 = vunpack.c.l.b16 %v2126
        %v2271 = vunpack.c.l.b16 %v2127
        %v2272 = vunpack.c.l.b16 %v2128
        %v2273 = vunpack.c.l.b16 %v2129
        %v2274 = vunpack.c.l.b16 %v2130
        %v2275 = vunpack.c.l.b16 %v2131
        %v2276 = vunpack.c.l.b16 %v2132
        %v2277 = vunpack.c.l.b16 %v2133
        %v2278 = vunpack.c.l.b16 %v2134
        %v2279 = vunpack.c.l.b16 %v2135
        %v2280 = vunpack.c.l.b16 %v2136
        %v2281 = vunpack.c.l.b16 %v2137
        %v2282 = vunpack.c.l.b16 %v2138
        %v2283 = vunpack.c.l.b16 %v2139
        %v2284 = vunpack.c.l.b16 %v2140
        %v2285 = vunpack.c.l.b16 %v2141
        %v2286 = vpack.c.b16 %v2215, %v2214
        %v2287 = vpack.c.b16 %v2217, %v2216
        %v2288 = vpack.c.b16 %v2219, %v2218
        %v2289 = vpack.c.b16 %v2221, %v2220
        %v2290 = vpack.c.b16 %v2223, %v2222
        %v2291 = vpack.c.b16 %v2225, %v2224
        %v2292 = vpack.c.b16 %v2227, %v2226
        %v2293 = vpack.c.b16 %v2229, %v2228
        %v2294 = vpack.c.b16 %v2231, %v2230
        %v2295 = vpack.c.b16 %v2233, %v2232
        %v2296 = vpack.c.b16 %v2235, %v2234
        %v2297 = vpack.c.b16 %v2237, %v2236
        %v2298 = vpack.c.b16 %v2239, %v2238
        %v2299 = vpack.c.b16 %v2241, %v2240
        %v2300 = vpack.c.b16 %v2243, %v2242
        %v2301 = vpack.c.b16 %v2245, %v2244
        %v2302 = vpack.c.b16 %v2247, %v2246
        %v2303 = vpack.c.b16 %v2249, %v2248
        %v2304 = vpack.c.b16 %v2251, %v2250
        %v2305 = vpack.c.b16 %v2253, %v2252
        %v2306 = vpack.c.b16 %v2255, %v2254
        %v2307 = vpack.c.b16 %v2257, %v2256
        %v2308 = vpack.c.b16 %v2259, %v2258
        %v2309 = vpack.c.b16 %v2261, %v2260
        %v2310 = vpack.c.b16 %v2263, %v2262
        %v2311 = vpack.c.b16 %v2265, %v2264
        %v2312 = vpack.c.b16 %v2267, %v2266
        %v2313 = vpack.c.b16 %v2269, %v2268
        %v2314 = vpack.c.b16 %v2271, %v2270
        %v2315 = vpack.c.b16 %v2273, %v2272
        %v2316 = vpack.c.b16 %v2275, %v2274
        %v2317 = vpack.c.b16 %v2277, %v2276
        %v2318 = vpack.c.b16 %v2279, %v2278
        %v2319 = vpack.c.b16 %v2281, %v2280
        %v2320 = vpack.c.b16 %v2283, %v2282
        %v2321 = vpack.c.b16 %v2285, %v2284
        %v2359 = vsel %vm982, %v1994, 0
        %v2362 = vsel %vm982, %v1999, 0
        %v2365 = vsel %vm982, %v2004, 0
        %v2368 = vsel %vm982, %v2009, 0
        %v2371 = vsel %vm982, %v2014, 0
        %v2374 = vsel %vm982, %v2019, 0
        %v2377 = vsel %vm982, %v2024, 0
        %v2380 = vsel %vm982, %v2029, 0
        %v2383 = vsel %vm982, %v2034, 0
        %v2386 = vsel %vm982, %v2039, 0
        %v2389 = vsel %vm982, %v2044, 0
        %v2392 = vsel %vm982, %v2049, 0
        %v2395 = vsel %vm982, %v2054, 0
        %v2398 = vsel %vm982, %v2059, 0
        %v2401 = vsel %vm982, %v2064, 0
        %v2404 = vsel %vm982, %v2069, 0
        %2406 = vmatprep.subr.bf16.mxu0 0
        %2407 = vmatpush1.bf16.msra.mxu0 %v2286
        %2408 = vmatprep.subr.bf16.mxu0 0
        %2409 = vmatpush1.bf16.msra.mxu0 %v2287
        %2410 = vmatprep.subr.bf16.mxu0 0
        %2411 = vmatpush1.bf16.msra.mxu0 %v2288
        %2412 = vmatprep.subr.bf16.mxu0 0
        %2413 = vmatpush1.bf16.msra.mxu0 %v2289
        %2414 = vmatprep.subr.bf16.mxu0 0
        %2415 = vmatpush1.bf16.msra.mxu0 %v2290
        %2416 = vmatprep.subr.bf16.mxu0 0
        %2417 = vmatpush1.bf16.msra.mxu0 %v2291
        %2418 = vmatprep.subr.bf16.mxu0 0
        %2419 = vmatpush1.bf16.msra.mxu0 %v2292
        %2420 = vmatprep.subr.bf16.mxu0 0
        %2421 = vmatpush1.bf16.msra.mxu0 %v2293
        %2422 = vmatprep.subr.bf16.mxu0 0
        %2423 = vmatpush1.bf16.msra.mxu0 %v2294
        %2424 = vmatprep.subr.bf16.mxu0 0
        %2425 = vmatpush1.bf16.msra.mxu0 %v2295
        %2426 = vmatprep.subr.bf16.mxu0 0
        %2427 = vmatpush1.bf16.msra.mxu0 %v2296
        %2428 = vmatprep.subr.bf16.mxu0 0
        %2429 = vmatpush1.bf16.msra.mxu0 %v2297
        %2430 = vmatprep.subr.bf16.mxu0 0
        %2431 = vmatpush1.bf16.msra.mxu0 %v2298
        %2432 = vmatprep.subr.bf16.mxu0 0
        %2433 = vmatpush1.bf16.msra.mxu0 %v2299
        %2434 = vmatprep.subr.bf16.mxu0 0
        %2435 = vmatpush1.bf16.msra.mxu0 %v2300
        %2436 = vmatprep.subr.bf16.mxu0 0
        %2437 = vmatpush1.bf16.msra.mxu0 %v2301
        %2438 = vmatprep.mubr.bf16.mxu0 %v1991
        %2439 = vmatmul.mubr.bf16.gmra.mrb[0].mxu0 %v1990
        %v2440 = vpop.f32.mrb[0].mxu0
        %v2441 = vadd.f32 0.0, %v2440
        %v2442 = vpop.f32.mrb[0].mxu0
        %v2443 = vpop.f32.mrb[0].mxu0
        %v2444 = vadd.f32 0.0, %v2443
        %v2445 = vpop.f32.mrb[0].mxu0
        %2446 = vmatprep.mubr.bf16.mxu0 %v1996
        %2447 = vmatmul.mubr.bf16.gmra.mrb[0].mxu0 %v1995
        %v2448 = vpop.f32.mrb[0].mxu0
        %v2449 = vadd.f32 0.0, %v2448
        %v2450 = vpop.f32.mrb[0].mxu0
        %v2451 = vpop.f32.mrb[0].mxu0
        %v2452 = vadd.f32 0.0, %v2451
        %v2453 = vpop.f32.mrb[0].mxu0
        %2454 = vmatprep.mubr.bf16.mxu0 %v2001
        %2455 = vmatmul.mubr.bf16.gmra.mrb[0].mxu0 %v2000
        %v2456 = vpop.f32.mrb[0].mxu0
        %v2457 = vadd.f32 0.0, %v2456
        %v2458 = vpop.f32.mrb[0].mxu0
        %v2459 = vpop.f32.mrb[0].mxu0
        %v2460 = vadd.f32 0.0, %v2459
        %v2461 = vpop.f32.mrb[0].mxu0
        %2462 = vmatprep.mubr.bf16.mxu0 %v2006
        %2463 = vmatmul.mubr.bf16.gmra.mrb[0].mxu0 %v2005
        %v2464 = vpop.f32.mrb[0].mxu0
        %v2465 = vadd.f32 0.0, %v2464
        %v2466 = vpop.f32.mrb[0].mxu0
        %v2467 = vpop.f32.mrb[0].mxu0
        %v2468 = vadd.f32 0.0, %v2467
        %v2469 = vpop.f32.mrb[0].mxu0
        %2470 = vmatprep.mubr.bf16.mxu0 %v2011
        %2471 = vmatmul.mubr.bf16.gmra.mrb[0].mxu0 %v2010
        %v2472 = vpop.f32.mrb[0].mxu0
        %v2473 = vadd.f32 0.0, %v2472
        %v2474 = vpop.f32.mrb[0].mxu0
        %v2475 = vpop.f32.mrb[0].mxu0
        %v2476 = vadd.f32 0.0, %v2475
        %v2477 = vpop.f32.mrb[0].mxu0
        %2478 = vmatprep.mubr.bf16.mxu0 %v2016
        %2479 = vmatmul.mubr.bf16.gmra.mrb[0].mxu0 %v2015
        %v2480 = vpop.f32.mrb[0].mxu0
        %v2481 = vadd.f32 0.0, %v2480
        %v2482 = vpop.f32.mrb[0].mxu0
        %v2483 = vpop.f32.mrb[0].mxu0
        %v2484 = vadd.f32 0.0, %v2483
        %v2485 = vpop.f32.mrb[0].mxu0
        %2486 = vmatprep.mubr.bf16.mxu0 %v2021
        %2487 = vmatmul.mubr.bf16.gmra.mrb[0].mxu0 %v2020
        %v2488 = vpop.f32.mrb[0].mxu0
        %v2489 = vadd.f32 0.0, %v2488
        %v2490 = vpop.f32.mrb[0].mxu0
        %v2491 = vpop.f32.mrb[0].mxu0
        %v2492 = vadd.f32 0.0, %v2491
        %v2493 = vpop.f32.mrb[0].mxu0
        %2494 = vmatprep.mubr.bf16.mxu0 %v2026
        %2495 = vmatmul.mubr.bf16.gmra.mrb[0].mxu0 %v2025
        %v2496 = vpop.f32.mrb[0].mxu0
        %v2497 = vadd.f32 0.0, %v2496
        %v2498 = vpop.f32.mrb[0].mxu0
        %v2499 = vpop.f32.mrb[0].mxu0
        %v2500 = vadd.f32 0.0, %v2499
        %v2501 = vpop.f32.mrb[0].mxu0
        %2502 = vmatprep.mubr.bf16.mxu0 %v2031
        %2503 = vmatmul.mubr.bf16.gmra.mrb[0].mxu0 %v2030
        %v2504 = vpop.f32.mrb[0].mxu0
        %v2505 = vadd.f32 0.0, %v2504
        %v2506 = vpop.f32.mrb[0].mxu0
        %v2507 = vpop.f32.mrb[0].mxu0
        %v2508 = vadd.f32 0.0, %v2507
        %v2509 = vpop.f32.mrb[0].mxu0
        %2510 = vmatprep.mubr.bf16.mxu0 %v2036
        %2511 = vmatmul.mubr.bf16.gmra.mrb[0].mxu0 %v2035
        %v2512 = vpop.f32.mrb[0].mxu0
        %v2513 = vadd.f32 0.0, %v2512
        %v2514 = vpop.f32.mrb[0].mxu0
        %v2515 = vpop.f32.mrb[0].mxu0
        %v2516 = vadd.f32 0.0, %v2515
        %v2517 = vpop.f32.mrb[0].mxu0
        %2518 = vmatprep.mubr.bf16.mxu0 %v2041
        %2519 = vmatmul.mubr.bf16.gmra.mrb[0].mxu0 %v2040
        %v2520 = vpop.f32.mrb[0].mxu0
        %v2521 = vadd.f32 0.0, %v2520
        %v2522 = vpop.f32.mrb[0].mxu0
        %v2523 = vpop.f32.mrb[0].mxu0
        %v2524 = vadd.f32 0.0, %v2523
        %v2525 = vpop.f32.mrb[0].mxu0
        %2526 = vmatprep.mubr.bf16.mxu0 %v2046
        %2527 = vmatmul.mubr.bf16.gmra.mrb[0].mxu0 %v2045
        %v2528 = vpop.f32.mrb[0].mxu0
        %v2529 = vadd.f32 0.0, %v2528
        %v2530 = vpop.f32.mrb[0].mxu0
        %v2531 = vpop.f32.mrb[0].mxu0
        %v2532 = vadd.f32 0.0, %v2531
        %v2533 = vpop.f32.mrb[0].mxu0
        %2534 = vmatprep.mubr.bf16.mxu0 %v2051
        %2535 = vmatmul.mubr.bf16.gmra.mrb[0].mxu0 %v2050
        %v2536 = vpop.f32.mrb[0].mxu0
        %v2537 = vadd.f32 0.0, %v2536
        %v2538 = vpop.f32.mrb[0].mxu0
        %v2539 = vpop.f32.mrb[0].mxu0
        %v2540 = vadd.f32 0.0, %v2539
        %v2541 = vpop.f32.mrb[0].mxu0
        %2542 = vmatprep.mubr.bf16.mxu0 %v2056
        %2543 = vmatmul.mubr.bf16.gmra.mrb[0].mxu0 %v2055
        %v2544 = vpop.f32.mrb[0].mxu0
        %v2545 = vadd.f32 0.0, %v2544
        %v2546 = vpop.f32.mrb[0].mxu0
        %v2547 = vpop.f32.mrb[0].mxu0
        %v2548 = vadd.f32 0.0, %v2547
        %v2549 = vpop.f32.mrb[0].mxu0
        %2550 = vmatprep.mubr.bf16.mxu0 %v2061
        %2551 = vmatmul.mubr.bf16.gmra.mrb[0].mxu0 %v2060
        %v2552 = vpop.f32.mrb[0].mxu0
        %v2553 = vadd.f32 0.0, %v2552
        %v2554 = vpop.f32.mrb[0].mxu0
        %v2555 = vpop.f32.mrb[0].mxu0
        %v2556 = vadd.f32 0.0, %v2555
        %v2557 = vpop.f32.mrb[0].mxu0
        %2558 = vmatprep.mubr.bf16.mxu0 %v2066
        %2559 = vmatmul.mubr.bf16.gmra.mrb[0].mxu0 %v2065
        %v2560 = vpop.f32.mrb[0].mxu0
        %v2561 = vadd.f32 0.0, %v2560
        %v2562 = vpop.f32.mrb[0].mxu0
        %v2563 = vpop.f32.mrb[0].mxu0
        %v2564 = vadd.f32 0.0, %v2563
        %v2565 = vpop.f32.mrb[0].mxu0
        %2566 = vdwg.mxu0
        %2567 = vmatprep.subr.bf16.mxu0 0
        %2568 = vmatpush1.bf16.msra.mxu0 %v2302
        %2569 = vmatprep.subr.bf16.mxu0 0
        %2570 = vmatpush1.bf16.msra.mxu0 %v2303
        %2571 = vmatprep.subr.bf16.mxu0 0
        %2572 = vmatpush1.bf16.msra.mxu0 %v2304
        %2573 = vmatprep.subr.bf16.mxu0 0
        %2574 = vmatpush1.bf16.msra.mxu0 %v2305
        %2575 = vmatprep.subr.bf16.mxu0 0
        %2576 = vmatpush1.bf16.msra.mxu0 %v2306
        %2577 = vmatprep.subr.bf16.mxu0 0
        %2578 = vmatpush1.bf16.msra.mxu0 %v2307
        %2579 = vmatprep.subr.bf16.mxu0 0
        %2580 = vmatpush1.bf16.msra.mxu0 %v2308
        %2581 = vmatprep.subr.bf16.mxu0 0
        %2582 = vmatpush1.bf16.msra.mxu0 %v2309
        %2583 = vmatprep.subr.bf16.mxu0 0
        %2584 = vmatpush1.bf16.msra.mxu0 %v2310
        %2585 = vmatprep.subr.bf16.mxu0 0
        %2586 = vmatpush1.bf16.msra.mxu0 %v2311
        %2587 = vmatprep.subr.bf16.mxu0 0
        %2588 = vmatpush1.bf16.msra.mxu0 %v2312
        %2589 = vmatprep.subr.bf16.mxu0 0
        %2590 = vmatpush1.bf16.msra.mxu0 %v2313
        %2591 = vmatprep.subr.bf16.mxu0 0
        %2592 = vmatpush1.bf16.msra.mxu0 %v2314
        %2593 = vmatprep.subr.bf16.mxu0 0
        %2594 = vmatpush1.bf16.msra.mxu0 %v2315
        %2595 = vmatprep.subr.bf16.mxu0 0
        %2596 = vmatpush1.bf16.msra.mxu0 %v2316
        %2597 = vmatprep.subr.bf16.mxu0 0
        %2598 = vmatpush1.bf16.msra.mxu0 %v2317
        %2599 = vmatprep.mubr.bf16.mxu0 %v1993
        %2600 = vmatmul.mubr.bf16.gmra.mrb[0].mxu0 %v1992
        %v2601 = vpop.f32.mrb[0].mxu0
        %v2602 = vadd.f32 %v2441, %v2601
        %v2603 = vpop.f32.mrb[0].mxu0
        %v2604 = vpop.f32.mrb[0].mxu0
        %v2605 = vadd.f32 %v2444, %v2604
        %v2606 = vpop.f32.mrb[0].mxu0
        %2607 = vmatprep.mubr.bf16.mxu0 %v1998
        %2608 = vmatmul.mubr.bf16.gmra.mrb[0].mxu0 %v1997
        %v2609 = vpop.f32.mrb[0].mxu0
        %v2610 = vadd.f32 %v2449, %v2609
        %v2611 = vpop.f32.mrb[0].mxu0
        %v2612 = vpop.f32.mrb[0].mxu0
        %v2613 = vadd.f32 %v2452, %v2612
        %v2614 = vpop.f32.mrb[0].mxu0
        %2615 = vmatprep.mubr.bf16.mxu0 %v2003
        %2616 = vmatmul.mubr.bf16.gmra.mrb[0].mxu0 %v2002
        %v2617 = vpop.f32.mrb[0].mxu0
        %v2618 = vadd.f32 %v2457, %v2617
        %v2619 = vpop.f32.mrb[0].mxu0
        %v2620 = vpop.f32.mrb[0].mxu0
        %v2621 = vadd.f32 %v2460, %v2620
        %v2622 = vpop.f32.mrb[0].mxu0
        %2623 = vmatprep.mubr.bf16.mxu0 %v2008
        %2624 = vmatmul.mubr.bf16.gmra.mrb[0].mxu0 %v2007
        %v2625 = vpop.f32.mrb[0].mxu0
        %v2626 = vadd.f32 %v2465, %v2625
        %v2627 = vpop.f32.mrb[0].mxu0
        %v2628 = vpop.f32.mrb[0].mxu0
        %v2629 = vadd.f32 %v2468, %v2628
        %v2630 = vpop.f32.mrb[0].mxu0
        %2631 = vmatprep.mubr.bf16.mxu0 %v2013
        %2632 = vmatmul.mubr.bf16.gmra.mrb[0].mxu0 %v2012
        %v2633 = vpop.f32.mrb[0].mxu0
        %v2634 = vadd.f32 %v2473, %v2633
        %v2635 = vpop.f32.mrb[0].mxu0
        %v2636 = vpop.f32.mrb[0].mxu0
        %v2637 = vadd.f32 %v2476, %v2636
        %v2638 = vpop.f32.mrb[0].mxu0
        %2639 = vmatprep.mubr.bf16.mxu0 %v2018
        %2640 = vmatmul.mubr.bf16.gmra.mrb[0].mxu0 %v2017
        %v2641 = vpop.f32.mrb[0].mxu0
        %v2642 = vadd.f32 %v2481, %v2641
        %v2643 = vpop.f32.mrb[0].mxu0
        %v2644 = vpop.f32.mrb[0].mxu0
        %v2645 = vadd.f32 %v2484, %v2644
        %v2646 = vpop.f32.mrb[0].mxu0
        %2647 = vmatprep.mubr.bf16.mxu0 %v2023
        %2648 = vmatmul.mubr.bf16.gmra.mrb[0].mxu0 %v2022
        %v2649 = vpop.f32.mrb[0].mxu0
        %v2650 = vadd.f32 %v2489, %v2649
        %v2651 = vpop.f32.mrb[0].mxu0
        %v2652 = vpop.f32.mrb[0].mxu0
        %v2653 = vadd.f32 %v2492, %v2652
        %v2654 = vpop.f32.mrb[0].mxu0
        %2655 = vmatprep.mubr.bf16.mxu0 %v2028
        %2656 = vmatmul.mubr.bf16.gmra.mrb[0].mxu0 %v2027
        %v2657 = vpop.f32.mrb[0].mxu0
        %v2658 = vadd.f32 %v2497, %v2657
        %v2659 = vpop.f32.mrb[0].mxu0
        %v2660 = vpop.f32.mrb[0].mxu0
        %v2661 = vadd.f32 %v2500, %v2660
        %v2662 = vpop.f32.mrb[0].mxu0
        %2663 = vmatprep.mubr.bf16.mxu0 %v2033
        %2664 = vmatmul.mubr.bf16.gmra.mrb[0].mxu0 %v2032
        %v2665 = vpop.f32.mrb[0].mxu0
        %v2666 = vadd.f32 %v2505, %v2665
        %v2667 = vpop.f32.mrb[0].mxu0
        %v2668 = vpop.f32.mrb[0].mxu0
        %v2669 = vadd.f32 %v2508, %v2668
        %v2670 = vpop.f32.mrb[0].mxu0
        %2671 = vmatprep.mubr.bf16.mxu0 %v2038
        %2672 = vmatmul.mubr.bf16.gmra.mrb[0].mxu0 %v2037
        %v2673 = vpop.f32.mrb[0].mxu0
        %v2674 = vadd.f32 %v2513, %v2673
        %v2675 = vpop.f32.mrb[0].mxu0
        %v2676 = vpop.f32.mrb[0].mxu0
        %v2677 = vadd.f32 %v2516, %v2676
        %v2678 = vpop.f32.mrb[0].mxu0
        %2679 = vmatprep.mubr.bf16.mxu0 %v2043
        %2680 = vmatmul.mubr.bf16.gmra.mrb[0].mxu0 %v2042
        %v2681 = vpop.f32.mrb[0].mxu0
        %v2682 = vadd.f32 %v2521, %v2681
        %v2683 = vpop.f32.mrb[0].mxu0
        %v2684 = vpop.f32.mrb[0].mxu0
        %v2685 = vadd.f32 %v2524, %v2684
        %v2686 = vpop.f32.mrb[0].mxu0
        %2687 = vmatprep.mubr.bf16.mxu0 %v2048
        %2688 = vmatmul.mubr.bf16.gmra.mrb[0].mxu0 %v2047
        %v2689 = vpop.f32.mrb[0].mxu0
        %v2690 = vadd.f32 %v2529, %v2689
        %v2691 = vpop.f32.mrb[0].mxu0
        %v2692 = vpop.f32.mrb[0].mxu0
        %v2693 = vadd.f32 %v2532, %v2692
        %v2694 = vpop.f32.mrb[0].mxu0
        %2695 = vmatprep.mubr.bf16.mxu0 %v2053
        %2696 = vmatmul.mubr.bf16.gmra.mrb[0].mxu0 %v2052
        %v2697 = vpop.f32.mrb[0].mxu0
        %v2698 = vadd.f32 %v2537, %v2697
        %v2699 = vpop.f32.mrb[0].mxu0
        %v2700 = vpop.f32.mrb[0].mxu0
        %v2701 = vadd.f32 %v2540, %v2700
        %v2702 = vpop.f32.mrb[0].mxu0
        %2703 = vmatprep.mubr.bf16.mxu0 %v2058
        %2704 = vmatmul.mubr.bf16.gmra.mrb[0].mxu0 %v2057
        %v2705 = vpop.f32.mrb[0].mxu0
        %v2706 = vadd.f32 %v2545, %v2705
        %v2707 = vpop.f32.mrb[0].mxu0
        %v2708 = vpop.f32.mrb[0].mxu0
        %v2709 = vadd.f32 %v2548, %v2708
        %v2710 = vpop.f32.mrb[0].mxu0
        %2711 = vmatprep.mubr.bf16.mxu0 %v2063
        %2712 = vmatmul.mubr.bf16.gmra.mrb[0].mxu0 %v2062
        %v2713 = vpop.f32.mrb[0].mxu0
        %v2714 = vadd.f32 %v2553, %v2713
        %v2715 = vpop.f32.mrb[0].mxu0
        %v2716 = vpop.f32.mrb[0].mxu0
        %v2717 = vadd.f32 %v2556, %v2716
        %v2718 = vpop.f32.mrb[0].mxu0
        %2719 = vmatprep.mubr.bf16.mxu0 %v2068
        %2720 = vmatmul.mubr.bf16.gmra.mrb[0].mxu0 %v2067
        %v2721 = vpop.f32.mrb[0].mxu0
        %v2722 = vadd.f32 %v2561, %v2721
        %v2723 = vpop.f32.mrb[0].mxu0
        %v2724 = vpop.f32.mrb[0].mxu0
        %v2725 = vadd.f32 %v2564, %v2724
        %v2726 = vpop.f32.mrb[0].mxu0
        %2727 = vdwg.mxu0
        %2728 = vmatprep.subr.bf16.mxu0 0
        %2729 = vmatpush1.bf16.msra.mxu0 %v2318
        %2730 = vmatprep.subr.bf16.mxu0 0
        %2731 = vmatpush1.bf16.msra.mxu0 %v2319
        %2732 = vmatprep.subr.bf16.mxu0 0
        %2733 = vmatpush1.bf16.msra.mxu0 %v2320
        %2734 = vmatprep.subr.bf16.mxu0 0
        %2735 = vmatpush1.bf16.msra.mxu0 %v2321
        %2736 = vmatprep.subr.bf16.mxu0 0
        %2737 = vmatpush1.bf16.msra.mxu0 0
        %2738 = vmatprep.subr.bf16.mxu0 0
        %2739 = vmatpush1.bf16.msra.mxu0 0
        %2740 = vmatprep.subr.bf16.mxu0 0
        %2741 = vmatpush1.bf16.msra.mxu0 0
        %2742 = vmatprep.subr.bf16.mxu0 0
        %2743 = vmatpush1.bf16.msra.mxu0 0
        %2744 = vmatprep.subr.bf16.mxu0 0
        %2745 = vmatpush1.bf16.msra.mxu0 0
        %2746 = vmatprep.subr.bf16.mxu0 0
        %2747 = vmatpush1.bf16.msra.mxu0 0
        %2748 = vmatprep.subr.bf16.mxu0 0
        %2749 = vmatpush1.bf16.msra.mxu0 0
        %2750 = vmatprep.subr.bf16.mxu0 0
        %2751 = vmatpush1.bf16.msra.mxu0 0
        %2752 = vmatprep.subr.bf16.mxu0 0
        %2753 = vmatpush1.bf16.msra.mxu0 0
        %2754 = vmatprep.subr.bf16.mxu0 0
        %2755 = vmatpush1.bf16.msra.mxu0 0
        %2756 = vmatprep.subr.bf16.mxu0 0
        %2757 = vmatpush1.bf16.msra.mxu0 0
        %2758 = vmatprep.subr.bf16.mxu0 0
        %2759 = vmatpush1.bf16.msra.mxu0 0
        %2760 = vmatprep.mubr.bf16.mxu0 0
        %2761 = vmatmul.mubr.bf16.gmra.mrb[0].mxu0 %v2359
        %v2762 = vpop.f32.mrb[0].mxu0
        %v2763 = vadd.f32 %v2602, %v2762
        %v2764 = vpop.f32.mrb[0].mxu0
        %v2765 = vpop.f32.mrb[0].mxu0
        %v2766 = vadd.f32 %v2605, %v2765
        %v2767 = vpop.f32.mrb[0].mxu0
        %2768 = vmatprep.mubr.bf16.mxu0 0
        %2769 = vmatmul.mubr.bf16.gmra.mrb[0].mxu0 %v2362
        %v2770 = vpop.f32.mrb[0].mxu0
        %v2771 = vadd.f32 %v2610, %v2770
        %v2772 = vpop.f32.mrb[0].mxu0
        %v2773 = vpop.f32.mrb[0].mxu0
        %v2774 = vadd.f32 %v2613, %v2773
        %v2775 = vpop.f32.mrb[0].mxu0
        %2776 = vmatprep.mubr.bf16.mxu0 0
        %2777 = vmatmul.mubr.bf16.gmra.mrb[0].mxu0 %v2365
        %v2778 = vpop.f32.mrb[0].mxu0
        %v2779 = vadd.f32 %v2618, %v2778
        %v2780 = vpop.f32.mrb[0].mxu0
        %v2781 = vpop.f32.mrb[0].mxu0
        %v2782 = vadd.f32 %v2621, %v2781
        %v2783 = vpop.f32.mrb[0].mxu0
        %2784 = vmatprep.mubr.bf16.mxu0 0
        %2785 = vmatmul.mubr.bf16.gmra.mrb[0].mxu0 %v2368
        %v2786 = vpop.f32.mrb[0].mxu0
        %v2787 = vadd.f32 %v2626, %v2786
        %v2788 = vpop.f32.mrb[0].mxu0
        %v2789 = vpop.f32.mrb[0].mxu0
        %v2790 = vadd.f32 %v2629, %v2789
        %v2791 = vpop.f32.mrb[0].mxu0
        %2792 = vmatprep.mubr.bf16.mxu0 0
        %2793 = vmatmul.mubr.bf16.gmra.mrb[0].mxu0 %v2371
        %v2794 = vpop.f32.mrb[0].mxu0
        %v2795 = vadd.f32 %v2634, %v2794
        %v2796 = vpop.f32.mrb[0].mxu0
        %v2797 = vpop.f32.mrb[0].mxu0
        %v2798 = vadd.f32 %v2637, %v2797
        %v2799 = vpop.f32.mrb[0].mxu0
        %2800 = vmatprep.mubr.bf16.mxu0 0
        %2801 = vmatmul.mubr.bf16.gmra.mrb[0].mxu0 %v2374
        %v2802 = vpop.f32.mrb[0].mxu0
        %v2803 = vadd.f32 %v2642, %v2802
        %v2804 = vpop.f32.mrb[0].mxu0
        %v2805 = vpop.f32.mrb[0].mxu0
        %v2806 = vadd.f32 %v2645, %v2805
        %v2807 = vpop.f32.mrb[0].mxu0
        %2808 = vmatprep.mubr.bf16.mxu0 0
        %2809 = vmatmul.mubr.bf16.gmra.mrb[0].mxu0 %v2377
        %v2810 = vpop.f32.mrb[0].mxu0
        %v2811 = vadd.f32 %v2650, %v2810
        %v2812 = vpop.f32.mrb[0].mxu0
        %v2813 = vpop.f32.mrb[0].mxu0
        %v2814 = vadd.f32 %v2653, %v2813
        %v2815 = vpop.f32.mrb[0].mxu0
        %2816 = vmatprep.mubr.bf16.mxu0 0
        %2817 = vmatmul.mubr.bf16.gmra.mrb[0].mxu0 %v2380
        %v2818 = vpop.f32.mrb[0].mxu0
        %v2819 = vadd.f32 %v2658, %v2818
        %v2820 = vpop.f32.mrb[0].mxu0
        %v2821 = vpop.f32.mrb[0].mxu0
        %v2822 = vadd.f32 %v2661, %v2821
        %v2823 = vpop.f32.mrb[0].mxu0
        %2824 = vmatprep.mubr.bf16.mxu0 0
        %2825 = vmatmul.mubr.bf16.gmra.mrb[0].mxu0 %v2383
        %v2826 = vpop.f32.mrb[0].mxu0
        %v2827 = vadd.f32 %v2666, %v2826
        %v2828 = vpop.f32.mrb[0].mxu0
        %v2829 = vpop.f32.mrb[0].mxu0
        %v2830 = vadd.f32 %v2669, %v2829
        %v2831 = vpop.f32.mrb[0].mxu0
        %2832 = vmatprep.mubr.bf16.mxu0 0
        %2833 = vmatmul.mubr.bf16.gmra.mrb[0].mxu0 %v2386
        %v2834 = vpop.f32.mrb[0].mxu0
        %v2835 = vadd.f32 %v2674, %v2834
        %v2836 = vpop.f32.mrb[0].mxu0
        %v2837 = vpop.f32.mrb[0].mxu0
        %v2838 = vadd.f32 %v2677, %v2837
        %v2839 = vpop.f32.mrb[0].mxu0
        %2840 = vmatprep.mubr.bf16.mxu0 0
        %2841 = vmatmul.mubr.bf16.gmra.mrb[0].mxu0 %v2389
        %v2842 = vpop.f32.mrb[0].mxu0
        %v2843 = vadd.f32 %v2682, %v2842
        %v2844 = vpop.f32.mrb[0].mxu0
        %v2845 = vpop.f32.mrb[0].mxu0
        %v2846 = vadd.f32 %v2685, %v2845
        %v2847 = vpop.f32.mrb[0].mxu0
        %2848 = vmatprep.mubr.bf16.mxu0 0
        %2849 = vmatmul.mubr.bf16.gmra.mrb[0].mxu0 %v2392
        %v2850 = vpop.f32.mrb[0].mxu0
        %v2851 = vadd.f32 %v2690, %v2850
        %v2852 = vpop.f32.mrb[0].mxu0
        %v2853 = vpop.f32.mrb[0].mxu0
        %v2854 = vadd.f32 %v2693, %v2853
        %v2855 = vpop.f32.mrb[0].mxu0
        %2856 = vmatprep.mubr.bf16.mxu0 0
        %2857 = vmatmul.mubr.bf16.gmra.mrb[0].mxu0 %v2395
        %v2858 = vpop.f32.mrb[0].mxu0
        %v2859 = vadd.f32 %v2698, %v2858
        %v2860 = vpop.f32.mrb[0].mxu0
        %v2861 = vpop.f32.mrb[0].mxu0
        %v2862 = vadd.f32 %v2701, %v2861
        %v2863 = vpop.f32.mrb[0].mxu0
        %2864 = vmatprep.mubr.bf16.mxu0 0
        %2865 = vmatmul.mubr.bf16.gmra.mrb[0].mxu0 %v2398
        %v2866 = vpop.f32.mrb[0].mxu0
        %v2867 = vadd.f32 %v2706, %v2866
        %v2868 = vpop.f32.mrb[0].mxu0
        %v2869 = vpop.f32.mrb[0].mxu0
        %v2870 = vadd.f32 %v2709, %v2869
        %v2871 = vpop.f32.mrb[0].mxu0
        %2872 = vmatprep.mubr.bf16.mxu0 0
        %2873 = vmatmul.mubr.bf16.gmra.mrb[0].mxu0 %v2401
        %v2874 = vpop.f32.mrb[0].mxu0
        %v2875 = vadd.f32 %v2714, %v2874
        %v2876 = vpop.f32.mrb[0].mxu0
        %v2877 = vpop.f32.mrb[0].mxu0
        %v2878 = vadd.f32 %v2717, %v2877
        %v2879 = vpop.f32.mrb[0].mxu0
        %2880 = vmatprep.mubr.bf16.mxu0 0
        %2881 = vmatmul.mubr.bf16.gmra.mrb[0].mxu0 %v2404
        %v2882 = vpop.f32.mrb[0].mxu0
        %v2883 = vadd.f32 %v2722, %v2882
        %v2884 = vpop.f32.mrb[0].mxu0
        %v2885 = vpop.f32.mrb[0].mxu0
        %v2886 = vadd.f32 %v2725, %v2885
        %v2887 = vpop.f32.mrb[0].mxu0
        %2888 = vdwg.mxu0
        %v2889 = vld [vmem:[%s5] sm:$0x1]
        %v2891 = vlaneseq
        %v2892 = vshrl.u32 %v2891, 7
        %v2893 = vsub.s32 0, %v2892
        %v2894 = vrot.slane %v2889, %v2893
        %v2896 = vmul.f32 %v2763, %v2894
        %v2897 = vmul.f32 %v2766, %v2894
        %v2898 = vmul.f32 %v2771, %v2894
        %v2899 = vmul.f32 %v2774, %v2894
        %v2900 = vmul.f32 %v2779, %v2894
        %v2901 = vmul.f32 %v2782, %v2894
        %v2902 = vmul.f32 %v2787, %v2894
        %v2903 = vmul.f32 %v2790, %v2894
        %v2904 = vmul.f32 %v2795, %v2894
        %v2905 = vmul.f32 %v2798, %v2894
        %v2906 = vmul.f32 %v2803, %v2894
        %v2907 = vmul.f32 %v2806, %v2894
        %v2908 = vmul.f32 %v2811, %v2894
        %v2909 = vmul.f32 %v2814, %v2894
        %v2910 = vmul.f32 %v2819, %v2894
        %v2911 = vmul.f32 %v2822, %v2894
        %v2912 = vmul.f32 %v2827, %v2894
        %v2913 = vmul.f32 %v2830, %v2894
        %v2914 = vmul.f32 %v2835, %v2894
        %v2915 = vmul.f32 %v2838, %v2894
        %v2916 = vmul.f32 %v2843, %v2894
        %v2917 = vmul.f32 %v2846, %v2894
        %v2918 = vmul.f32 %v2851, %v2894
        %v2919 = vmul.f32 %v2854, %v2894
        %v2920 = vmul.f32 %v2859, %v2894
        %v2921 = vmul.f32 %v2862, %v2894
        %v2922 = vmul.f32 %v2867, %v2894
        %v2923 = vmul.f32 %v2870, %v2894
        %v2924 = vmul.f32 %v2875, %v2894
        %v2925 = vmul.f32 %v2878, %v2894
        %v2926 = vmul.f32 %v2883, %v2894
        %v2927 = vmul.f32 %v2886, %v2894
        %v2928 = vld [vmem:[%s6] sm:$0x1]
        %v2930 = vlaneseq
        %v2931 = vshrl.u32 %v2930, 7
        %v2932 = vsub.s32 0, %v2931
        %v2933 = vrot.slane %v2928, %v2932
        %v2935 = vadd.f32 %v2896, %v2933
        %v2936 = vadd.f32 %v2897, %v2933
        %v2937 = vadd.f32 %v2898, %v2933
        %v2938 = vadd.f32 %v2899, %v2933
        %v2939 = vadd.f32 %v2900, %v2933
        %v2940 = vadd.f32 %v2901, %v2933
        %v2941 = vadd.f32 %v2902, %v2933
        %v2942 = vadd.f32 %v2903, %v2933
        %v2943 = vadd.f32 %v2904, %v2933
        %v2944 = vadd.f32 %v2905, %v2933
        %v2945 = vadd.f32 %v2906, %v2933
        %v2946 = vadd.f32 %v2907, %v2933
        %v2947 = vadd.f32 %v2908, %v2933
        %v2948 = vadd.f32 %v2909, %v2933
        %v2949 = vadd.f32 %v2910, %v2933
        %v2950 = vadd.f32 %v2911, %v2933
        %v2951 = vadd.f32 %v2912, %v2933
        %v2952 = vadd.f32 %v2913, %v2933
        %v2953 = vadd.f32 %v2914, %v2933
        %v2954 = vadd.f32 %v2915, %v2933
        %v2955 = vadd.f32 %v2916, %v2933
        %v2956 = vadd.f32 %v2917, %v2933
        %v2957 = vadd.f32 %v2918, %v2933
        %v2958 = vadd.f32 %v2919, %v2933
        %v2959 = vadd.f32 %v2920, %v2933
        %v2960 = vadd.f32 %v2921, %v2933
        %v2961 = vadd.f32 %v2922, %v2933
        %v2962 = vadd.f32 %v2923, %v2933
        %v2963 = vadd.f32 %v2924, %v2933
        %v2964 = vadd.f32 %v2925, %v2933
        %v2965 = vadd.f32 %v2926, %v2933
        %v2966 = vadd.f32 %v2927, %v2933
        %v2967 = vmax.f32 %v2935, 0.0
        %v2968 = vmax.f32 %v2936, 0.0
        %v2969 = vmax.f32 %v2937, 0.0
        %v2970 = vmax.f32 %v2938, 0.0
        %v2971 = vmax.f32 %v2939, 0.0
        %v2972 = vmax.f32 %v2940, 0.0
        %v2973 = vmax.f32 %v2941, 0.0
        %v2974 = vmax.f32 %v2942, 0.0
        %v2975 = vmax.f32 %v2943, 0.0
        %v2976 = vmax.f32 %v2944, 0.0
        %v2977 = vmax.f32 %v2945, 0.0
        %v2978 = vmax.f32 %v2946, 0.0
        %v2979 = vmax.f32 %v2947, 0.0
        %v2980 = vmax.f32 %v2948, 0.0
        %v2981 = vmax.f32 %v2949, 0.0
        %v2982 = vmax.f32 %v2950, 0.0
        %v2983 = vmax.f32 %v2951, 0.0
        %v2984 = vmax.f32 %v2952, 0.0
        %v2985 = vmax.f32 %v2953, 0.0
        %v2986 = vmax.f32 %v2954, 0.0
        %v2987 = vmax.f32 %v2955, 0.0
        %v2988 = vmax.f32 %v2956, 0.0
        %v2989 = vmax.f32 %v2957, 0.0
        %v2990 = vmax.f32 %v2958, 0.0
        %v2991 = vmax.f32 %v2959, 0.0
        %v2992 = vmax.f32 %v2960, 0.0
        %v2993 = vmax.f32 %v2961, 0.0
        %v2994 = vmax.f32 %v2962, 0.0
        %v2995 = vmax.f32 %v2963, 0.0
        %v2996 = vmax.f32 %v2964, 0.0
        %v2997 = vmax.f32 %v2965, 0.0
        %v2998 = vmax.f32 %v2966, 0.0
        %v2999 = vpack.c.bf16 %v2968, %v2967
        %v3000 = vpack.c.bf16 %v2970, %v2969
        %v3001 = vpack.c.bf16 %v2972, %v2971
        %v3002 = vpack.c.bf16 %v2974, %v2973
        %v3003 = vpack.c.bf16 %v2976, %v2975
        %v3004 = vpack.c.bf16 %v2978, %v2977
        %v3005 = vpack.c.bf16 %v2980, %v2979
        %v3006 = vpack.c.bf16 %v2982, %v2981
        %v3007 = vpack.c.bf16 %v2984, %v2983
        %v3008 = vpack.c.bf16 %v2986, %v2985
        %v3009 = vpack.c.bf16 %v2988, %v2987
        %v3010 = vpack.c.bf16 %v2990, %v2989
        %v3011 = vpack.c.bf16 %v2992, %v2991
        %v3012 = vpack.c.bf16 %v2994, %v2993
        %v3013 = vpack.c.bf16 %v2996, %v2995
        %v3014 = vpack.c.bf16 %v2998, %v2997
        %v3015 = vld [vmem:[%s7] sm:$0xff]
        %v3016 = vld [vmem:[%s7 + $0x8] sm:$0xff]
        %v3017 = vld [vmem:[%s7 + $0x10] sm:$0xff]
        %v3018 = vld [vmem:[%s7 + $0x18] sm:$0xff]
        %v3019 = vld [vmem:[%s7 + $0x20] sm:$0xff]
        %v3020 = vld [vmem:[%s7 + $0x28] sm:$0xff]
        %v3021 = vld [vmem:[%s7 + $0x30] sm:$0xff]
        %v3022 = vld [vmem:[%s7 + $0x38] sm:$0xff]
        %v3031 = vunpack.c.l.b16 %v3015
        %v3032 = vunpack.c.h.b16 %v3015
        %v3033 = vunpack.c.l.b16 %v3016
        %v3034 = vunpack.c.h.b16 %v3016
        %v3035 = vunpack.c.l.b16 %v3017
        %v3036 = vunpack.c.h.b16 %v3017
        %v3037 = vunpack.c.l.b16 %v3018
        %v3038 = vunpack.c.h.b16 %v3018
        %v3039 = vunpack.c.l.b16 %v3019
        %v3040 = vunpack.c.h.b16 %v3019
        %v3041 = vunpack.c.l.b16 %v3020
        %v3042 = vunpack.c.h.b16 %v3020
        %v3043 = vunpack.c.l.b16 %v3021
        %v3044 = vunpack.c.h.b16 %v3021
        %v3045 = vunpack.c.l.b16 %v3022
        %v3046 = vunpack.c.h.b16 %v3022
        %v3047 = vpack.c.b16 %v3033, %v3031
        %v3048 = vpack.c.b16 %v3034, %v3032
        %v3049 = vpack.c.b16 %v3037, %v3035
        %v3050 = vpack.c.b16 %v3038, %v3036
        %v3051 = vpack.c.b16 %v3041, %v3039
        %v3052 = vpack.c.b16 %v3042, %v3040
        %v3053 = vpack.c.b16 %v3045, %v3043
        %v3054 = vpack.c.b16 %v3046, %v3044
        %v3064 = vsel %vm982, %v2999, 0
        %v3067 = vsel %vm982, %v3000, 0
        %v3070 = vsel %vm982, %v3001, 0
        %v3073 = vsel %vm982, %v3002, 0
        %v3076 = vsel %vm982, %v3003, 0
        %v3079 = vsel %vm982, %v3004, 0
        %v3082 = vsel %vm982, %v3005, 0
        %v3085 = vsel %vm982, %v3006, 0
        %v3088 = vsel %vm982, %v3007, 0
        %v3091 = vsel %vm982, %v3008, 0
        %v3094 = vsel %vm982, %v3009, 0
        %v3097 = vsel %vm982, %v3010, 0
        %v3100 = vsel %vm982, %v3011, 0
        %v3103 = vsel %vm982, %v3012, 0
        %v3106 = vsel %vm982, %v3013, 0
        %v3109 = vsel %vm982, %v3014, 0
        %3111 = vmatprep.subr.bf16.mxu0 %v3048
        %3112 = vmatpush1.bf16.msra.mxu0 %v3047
        %3113 = vmatprep.subr.bf16.mxu0 %v3050
        %3114 = vmatpush1.bf16.msra.mxu0 %v3049
        %3115 = vmatprep.subr.bf16.mxu0 %v3052
        %3116 = vmatpush1.bf16.msra.mxu0 %v3051
        %3117 = vmatprep.subr.bf16.mxu0 %v3054
        %3118 = vmatpush1.bf16.msra.mxu0 %v3053
        %3119 = vmatprep.subr.bf16.mxu0 0
        %3120 = vmatpush1.bf16.msra.mxu0 0
        %3121 = vmatprep.subr.bf16.mxu0 0
        %3122 = vmatpush1.bf16.msra.mxu0 0
        %3123 = vmatprep.subr.bf16.mxu0 0
        %3124 = vmatpush1.bf16.msra.mxu0 0
        %3125 = vmatprep.subr.bf16.mxu0 0
        %3126 = vmatpush1.bf16.msra.mxu0 0
        %3127 = vmatprep.subr.bf16.mxu0 0
        %3128 = vmatpush1.bf16.msra.mxu0 0
        %3129 = vmatprep.subr.bf16.mxu0 0
        %3130 = vmatpush1.bf16.msra.mxu0 0
        %3131 = vmatprep.subr.bf16.mxu0 0
        %3132 = vmatpush1.bf16.msra.mxu0 0
        %3133 = vmatprep.subr.bf16.mxu0 0
        %3134 = vmatpush1.bf16.msra.mxu0 0
        %3135 = vmatprep.subr.bf16.mxu0 0
        %3136 = vmatpush1.bf16.msra.mxu0 0
        %3137 = vmatprep.subr.bf16.mxu0 0
        %3138 = vmatpush1.bf16.msra.mxu0 0
        %3139 = vmatprep.subr.bf16.mxu0 0
        %3140 = vmatpush1.bf16.msra.mxu0 0
        %3141 = vmatprep.subr.bf16.mxu0 0
        %3142 = vmatpush1.bf16.msra.mxu0 0
        %3143 = vmatprep.mubr.bf16.mxu0 0
        %3144 = vmatmul.mubr.bf16.gmra.mrb[0].mxu0 %v3064
        %v3145 = vpop.f32.mrb[0].mxu0
        %v3146 = vadd.f32 0.0, %v3145
        %v3147 = vpop.f32.mrb[0].mxu0
        %v3148 = vadd.f32 0.0, %v3147
        %v3149 = vpop.f32.mrb[0].mxu0
        %v3150 = vadd.f32 0.0, %v3149
        %v3151 = vpop.f32.mrb[0].mxu0
        %v3152 = vadd.f32 0.0, %v3151
        %3153 = vmatprep.mubr.bf16.mxu0 0
        %3154 = vmatmul.mubr.bf16.gmra.mrb[0].mxu0 %v3067
        %v3155 = vpop.f32.mrb[0].mxu0
        %v3156 = vadd.f32 0.0, %v3155
        %v3157 = vpop.f32.mrb[0].mxu0
        %v3158 = vadd.f32 0.0, %v3157
        %v3159 = vpop.f32.mrb[0].mxu0
        %v3160 = vadd.f32 0.0, %v3159
        %v3161 = vpop.f32.mrb[0].mxu0
        %v3162 = vadd.f32 0.0, %v3161
        %3163 = vmatprep.mubr.bf16.mxu0 0
        %3164 = vmatmul.mubr.bf16.gmra.mrb[0].mxu0 %v3070
        %v3165 = vpop.f32.mrb[0].mxu0
        %v3166 = vadd.f32 0.0, %v3165
        %v3167 = vpop.f32.mrb[0].mxu0
        %v3168 = vadd.f32 0.0, %v3167
        %v3169 = vpop.f32.mrb[0].mxu0
        %v3170 = vadd.f32 0.0, %v3169
        %v3171 = vpop.f32.mrb[0].mxu0
        %v3172 = vadd.f32 0.0, %v3171
        %3173 = vmatprep.mubr.bf16.mxu0 0
        %3174 = vmatmul.mubr.bf16.gmra.mrb[0].mxu0 %v3073
        %v3175 = vpop.f32.mrb[0].mxu0
        %v3176 = vadd.f32 0.0, %v3175
        %v3177 = vpop.f32.mrb[0].mxu0
        %v3178 = vadd.f32 0.0, %v3177
        %v3179 = vpop.f32.mrb[0].mxu0
        %v3180 = vadd.f32 0.0, %v3179
        %v3181 = vpop.f32.mrb[0].mxu0
        %v3182 = vadd.f32 0.0, %v3181
        %3183 = vmatprep.mubr.bf16.mxu0 0
        %3184 = vmatmul.mubr.bf16.gmra.mrb[0].mxu0 %v3076
        %v3185 = vpop.f32.mrb[0].mxu0
        %v3186 = vadd.f32 0.0, %v3185
        %v3187 = vpop.f32.mrb[0].mxu0
        %v3188 = vadd.f32 0.0, %v3187
        %v3189 = vpop.f32.mrb[0].mxu0
        %v3190 = vadd.f32 0.0, %v3189
        %v3191 = vpop.f32.mrb[0].mxu0
        %v3192 = vadd.f32 0.0, %v3191
        %3193 = vmatprep.mubr.bf16.mxu0 0
        %3194 = vmatmul.mubr.bf16.gmra.mrb[0].mxu0 %v3079
        %v3195 = vpop.f32.mrb[0].mxu0
        %v3196 = vadd.f32 0.0, %v3195
        %v3197 = vpop.f32.mrb[0].mxu0
        %v3198 = vadd.f32 0.0, %v3197
        %v3199 = vpop.f32.mrb[0].mxu0
        %v3200 = vadd.f32 0.0, %v3199
        %v3201 = vpop.f32.mrb[0].mxu0
        %v3202 = vadd.f32 0.0, %v3201
        %3203 = vmatprep.mubr.bf16.mxu0 0
        %3204 = vmatmul.mubr.bf16.gmra.mrb[0].mxu0 %v3082
        %v3205 = vpop.f32.mrb[0].mxu0
        %v3206 = vadd.f32 0.0, %v3205
        %v3207 = vpop.f32.mrb[0].mxu0
        %v3208 = vadd.f32 0.0, %v3207
        %v3209 = vpop.f32.mrb[0].mxu0
        %v3210 = vadd.f32 0.0, %v3209
        %v3211 = vpop.f32.mrb[0].mxu0
        %v3212 = vadd.f32 0.0, %v3211
        %3213 = vmatprep.mubr.bf16.mxu0 0
        %3214 = vmatmul.mubr.bf16.gmra.mrb[0].mxu0 %v3085
        %v3215 = vpop.f32.mrb[0].mxu0
        %v3216 = vadd.f32 0.0, %v3215
        %v3217 = vpop.f32.mrb[0].mxu0
        %v3218 = vadd.f32 0.0, %v3217
        %v3219 = vpop.f32.mrb[0].mxu0
        %v3220 = vadd.f32 0.0, %v3219
        %v3221 = vpop.f32.mrb[0].mxu0
        %v3222 = vadd.f32 0.0, %v3221
        %3223 = vmatprep.mubr.bf16.mxu0 0
        %3224 = vmatmul.mubr.bf16.gmra.mrb[0].mxu0 %v3088
        %v3225 = vpop.f32.mrb[0].mxu0
        %v3226 = vadd.f32 0.0, %v3225
        %v3227 = vpop.f32.mrb[0].mxu0
        %v3228 = vadd.f32 0.0, %v3227
        %v3229 = vpop.f32.mrb[0].mxu0
        %v3230 = vadd.f32 0.0, %v3229
        %v3231 = vpop.f32.mrb[0].mxu0
        %v3232 = vadd.f32 0.0, %v3231
        %3233 = vmatprep.mubr.bf16.mxu0 0
        %3234 = vmatmul.mubr.bf16.gmra.mrb[0].mxu0 %v3091
        %v3235 = vpop.f32.mrb[0].mxu0
        %v3236 = vadd.f32 0.0, %v3235
        %v3237 = vpop.f32.mrb[0].mxu0
        %v3238 = vadd.f32 0.0, %v3237
        %v3239 = vpop.f32.mrb[0].mxu0
        %v3240 = vadd.f32 0.0, %v3239
        %v3241 = vpop.f32.mrb[0].mxu0
        %v3242 = vadd.f32 0.0, %v3241
        %3243 = vmatprep.mubr.bf16.mxu0 0
        %3244 = vmatmul.mubr.bf16.gmra.mrb[0].mxu0 %v3094
        %v3245 = vpop.f32.mrb[0].mxu0
        %v3246 = vadd.f32 0.0, %v3245
        %v3247 = vpop.f32.mrb[0].mxu0
        %v3248 = vadd.f32 0.0, %v3247
        %v3249 = vpop.f32.mrb[0].mxu0
        %v3250 = vadd.f32 0.0, %v3249
        %v3251 = vpop.f32.mrb[0].mxu0
        %v3252 = vadd.f32 0.0, %v3251
        %3253 = vmatprep.mubr.bf16.mxu0 0
        %3254 = vmatmul.mubr.bf16.gmra.mrb[0].mxu0 %v3097
        %v3255 = vpop.f32.mrb[0].mxu0
        %v3256 = vadd.f32 0.0, %v3255
        %v3257 = vpop.f32.mrb[0].mxu0
        %v3258 = vadd.f32 0.0, %v3257
        %v3259 = vpop.f32.mrb[0].mxu0
        %v3260 = vadd.f32 0.0, %v3259
        %v3261 = vpop.f32.mrb[0].mxu0
        %v3262 = vadd.f32 0.0, %v3261
        %3263 = vmatprep.mubr.bf16.mxu0 0
        %3264 = vmatmul.mubr.bf16.gmra.mrb[0].mxu0 %v3100
        %v3265 = vpop.f32.mrb[0].mxu0
        %v3266 = vadd.f32 0.0, %v3265
        %v3267 = vpop.f32.mrb[0].mxu0
        %v3268 = vadd.f32 0.0, %v3267
        %v3269 = vpop.f32.mrb[0].mxu0
        %v3270 = vadd.f32 0.0, %v3269
        %v3271 = vpop.f32.mrb[0].mxu0
        %v3272 = vadd.f32 0.0, %v3271
        %3273 = vmatprep.mubr.bf16.mxu0 0
        %3274 = vmatmul.mubr.bf16.gmra.mrb[0].mxu0 %v3103
        %v3275 = vpop.f32.mrb[0].mxu0
        %v3276 = vadd.f32 0.0, %v3275
        %v3277 = vpop.f32.mrb[0].mxu0
        %v3278 = vadd.f32 0.0, %v3277
        %v3279 = vpop.f32.mrb[0].mxu0
        %v3280 = vadd.f32 0.0, %v3279
        %v3281 = vpop.f32.mrb[0].mxu0
        %v3282 = vadd.f32 0.0, %v3281
        %3283 = vmatprep.mubr.bf16.mxu0 0
        %3284 = vmatmul.mubr.bf16.gmra.mrb[0].mxu0 %v3106
        %v3285 = vpop.f32.mrb[0].mxu0
        %v3286 = vadd.f32 0.0, %v3285
        %v3287 = vpop.f32.mrb[0].mxu0
        %v3288 = vadd.f32 0.0, %v3287
        %v3289 = vpop.f32.mrb[0].mxu0
        %v3290 = vadd.f32 0.0, %v3289
        %v3291 = vpop.f32.mrb[0].mxu0
        %v3292 = vadd.f32 0.0, %v3291
        %3293 = vmatprep.mubr.bf16.mxu0 0
        %3294 = vmatmul.mubr.bf16.gmra.mrb[0].mxu0 %v3109
        %v3295 = vpop.f32.mrb[0].mxu0
        %v3296 = vadd.f32 0.0, %v3295
        %v3297 = vpop.f32.mrb[0].mxu0
        %v3298 = vadd.f32 0.0, %v3297
        %v3299 = vpop.f32.mrb[0].mxu0
        %v3300 = vadd.f32 0.0, %v3299
        %v3301 = vpop.f32.mrb[0].mxu0
        %v3302 = vadd.f32 0.0, %v3301
        %3303 = vdwg.mxu0
        %v3304 = vld [vmem:[%s8] sm:$0x3]
        %v3306 = vlaneseq
        %v3307 = vshrl.u32 %v3306, 7
        %v3308 = vsub.s32 0, %v3307
        %v3309 = vrot.slane %v3304, %v3308
        %v3310 = vlaneseq
        %v3311 = vshrl.u32 %v3310, 7
        %v3312 = vsub.s32 1, %v3311
        %v3313 = vrot.slane %v3304, %v3312
        %v3316 = vmul.f32 %v3146, %v3309
        %v3317 = vmul.f32 %v3148, %v3313
        %v3318 = vmul.f32 %v3150, %v3309
        %v3319 = vmul.f32 %v3152, %v3313
        %v3320 = vmul.f32 %v3156, %v3309
        %v3321 = vmul.f32 %v3158, %v3313
        %v3322 = vmul.f32 %v3160, %v3309
        %v3323 = vmul.f32 %v3162, %v3313
        %v3324 = vmul.f32 %v3166, %v3309
        %v3325 = vmul.f32 %v3168, %v3313
        %v3326 = vmul.f32 %v3170, %v3309
        %v3327 = vmul.f32 %v3172, %v3313
        %v3328 = vmul.f32 %v3176, %v3309
        %v3329 = vmul.f32 %v3178, %v3313
        %v3330 = vmul.f32 %v3180, %v3309
        %v3331 = vmul.f32 %v3182, %v3313
        %v3332 = vmul.f32 %v3186, %v3309
        %v3333 = vmul.f32 %v3188, %v3313
        %v3334 = vmul.f32 %v3190, %v3309
        %v3335 = vmul.f32 %v3192, %v3313
        %v3336 = vmul.f32 %v3196, %v3309
        %v3337 = vmul.f32 %v3198, %v3313
        %v3338 = vmul.f32 %v3200, %v3309
        %v3339 = vmul.f32 %v3202, %v3313
        %v3340 = vmul.f32 %v3206, %v3309
        %v3341 = vmul.f32 %v3208, %v3313
        %v3342 = vmul.f32 %v3210, %v3309
        %v3343 = vmul.f32 %v3212, %v3313
        %v3344 = vmul.f32 %v3216, %v3309
        %v3345 = vmul.f32 %v3218, %v3313
        %v3346 = vmul.f32 %v3220, %v3309
        %v3347 = vmul.f32 %v3222, %v3313
        %v3348 = vmul.f32 %v3226, %v3309
        %v3349 = vmul.f32 %v3228, %v3313
        %v3350 = vmul.f32 %v3230, %v3309
        %v3351 = vmul.f32 %v3232, %v3313
        %v3352 = vmul.f32 %v3236, %v3309
        %v3353 = vmul.f32 %v3238, %v3313
        %v3354 = vmul.f32 %v3240, %v3309
        %v3355 = vmul.f32 %v3242, %v3313
        %v3356 = vmul.f32 %v3246, %v3309
        %v3357 = vmul.f32 %v3248, %v3313
        %v3358 = vmul.f32 %v3250, %v3309
        %v3359 = vmul.f32 %v3252, %v3313
        %v3360 = vmul.f32 %v3256, %v3309
        %v3361 = vmul.f32 %v3258, %v3313
        %v3362 = vmul.f32 %v3260, %v3309
        %v3363 = vmul.f32 %v3262, %v3313
        %v3364 = vmul.f32 %v3266, %v3309
        %v3365 = vmul.f32 %v3268, %v3313
        %v3366 = vmul.f32 %v3270, %v3309
        %v3367 = vmul.f32 %v3272, %v3313
        %v3368 = vmul.f32 %v3276, %v3309
        %v3369 = vmul.f32 %v3278, %v3313
        %v3370 = vmul.f32 %v3280, %v3309
        %v3371 = vmul.f32 %v3282, %v3313
        %v3372 = vmul.f32 %v3286, %v3309
        %v3373 = vmul.f32 %v3288, %v3313
        %v3374 = vmul.f32 %v3290, %v3309
        %v3375 = vmul.f32 %v3292, %v3313
        %v3376 = vmul.f32 %v3296, %v3309
        %v3377 = vmul.f32 %v3298, %v3313
        %v3378 = vmul.f32 %v3300, %v3309
        %v3379 = vmul.f32 %v3302, %v3313
        %v3380 = vld [vmem:[%s9] sm:$0x3]
        %v3382 = vlaneseq
        %v3383 = vshrl.u32 %v3382, 7
        %v3384 = vsub.s32 0, %v3383
        %v3385 = vrot.slane %v3380, %v3384
        %v3386 = vlaneseq
        %v3387 = vshrl.u32 %v3386, 7
        %v3388 = vsub.s32 1, %v3387
        %v3389 = vrot.slane %v3380, %v3388
        %v3392 = vadd.f32 %v3316, %v3385
        %v3393 = vadd.f32 %v3317, %v3389
        %v3394 = vadd.f32 %v3318, %v3385
        %v3395 = vadd.f32 %v3319, %v3389
        %v3396 = vadd.f32 %v3320, %v3385
        %v3397 = vadd.f32 %v3321, %v3389
        %v3398 = vadd.f32 %v3322, %v3385
        %v3399 = vadd.f32 %v3323, %v3389
        %v3400 = vadd.f32 %v3324, %v3385
        %v3401 = vadd.f32 %v3325, %v3389
        %v3402 = vadd.f32 %v3326, %v3385
        %v3403 = vadd.f32 %v3327, %v3389
        %v3404 = vadd.f32 %v3328, %v3385
        %v3405 = vadd.f32 %v3329, %v3389
        %v3406 = vadd.f32 %v3330, %v3385
        %v3407 = vadd.f32 %v3331, %v3389
        %v3408 = vadd.f32 %v3332, %v3385
        %v3409 = vadd.f32 %v3333, %v3389
        %v3410 = vadd.f32 %v3334, %v3385
        %v3411 = vadd.f32 %v3335, %v3389
        %v3412 = vadd.f32 %v3336, %v3385
        %v3413 = vadd.f32 %v3337, %v3389
        %v3414 = vadd.f32 %v3338, %v3385
        %v3415 = vadd.f32 %v3339, %v3389
        %v3416 = vadd.f32 %v3340, %v3385
        %v3417 = vadd.f32 %v3341, %v3389
        %v3418 = vadd.f32 %v3342, %v3385
        %v3419 = vadd.f32 %v3343, %v3389
        %v3420 = vadd.f32 %v3344, %v3385
        %v3421 = vadd.f32 %v3345, %v3389
        %v3422 = vadd.f32 %v3346, %v3385
        %v3423 = vadd.f32 %v3347, %v3389
        %v3424 = vadd.f32 %v3348, %v3385
        %v3425 = vadd.f32 %v3349, %v3389
        %v3426 = vadd.f32 %v3350, %v3385
        %v3427 = vadd.f32 %v3351, %v3389
        %v3428 = vadd.f32 %v3352, %v3385
        %v3429 = vadd.f32 %v3353, %v3389
        %v3430 = vadd.f32 %v3354, %v3385
        %v3431 = vadd.f32 %v3355, %v3389
        %v3432 = vadd.f32 %v3356, %v3385
        %v3433 = vadd.f32 %v3357, %v3389
        %v3434 = vadd.f32 %v3358, %v3385
        %v3435 = vadd.f32 %v3359, %v3389
        %v3436 = vadd.f32 %v3360, %v3385
        %v3437 = vadd.f32 %v3361, %v3389
        %v3438 = vadd.f32 %v3362, %v3385
        %v3439 = vadd.f32 %v3363, %v3389
        %v3440 = vadd.f32 %v3364, %v3385
        %v3441 = vadd.f32 %v3365, %v3389
        %v3442 = vadd.f32 %v3366, %v3385
        %v3443 = vadd.f32 %v3367, %v3389
        %v3444 = vadd.f32 %v3368, %v3385
        %v3445 = vadd.f32 %v3369, %v3389
        %v3446 = vadd.f32 %v3370, %v3385
        %v3447 = vadd.f32 %v3371, %v3389
        %v3448 = vadd.f32 %v3372, %v3385
        %v3449 = vadd.f32 %v3373, %v3389
        %v3450 = vadd.f32 %v3374, %v3385
        %v3451 = vadd.f32 %v3375, %v3389
        %v3452 = vadd.f32 %v3376, %v3385
        %v3453 = vadd.f32 %v3377, %v3389
        %v3454 = vadd.f32 %v3378, %v3385
        %v3455 = vadd.f32 %v3379, %v3389
        %v3456 = vadd.f32 %v3392, %v3394
        %v3457 = vadd.f32 %v3456, %v3396
        %v3458 = vadd.f32 %v3457, %v3398
        %v3459 = vadd.f32 %v3458, %v3400
        %v3460 = vadd.f32 %v3459, %v3402
        %v3461 = vadd.f32 %v3460, %v3404
        %v3462 = vadd.f32 %v3461, %v3406
        %v3463 = vadd.f32 %v3462, %v3408
        %v3464 = vadd.f32 %v3463, %v3410
        %v3465 = vadd.f32 %v3464, %v3412
        %v3466 = vadd.f32 %v3465, %v3414
        %v3467 = vadd.f32 %v3466, %v3416
        %v3468 = vadd.f32 %v3467, %v3418
        %v3469 = vadd.f32 %v3468, %v3420
        %v3470 = vadd.f32 %v3469, %v3422
        %v3471 = vadd.f32 %v3470, %v3424
        %v3472 = vadd.f32 %v3471, %v3426
        %v3473 = vadd.f32 %v3472, %v3428
        %v3474 = vadd.f32 %v3473, %v3430
        %v3475 = vadd.f32 %v3474, %v3432
        %v3476 = vadd.f32 %v3475, %v3434
        %v3477 = vadd.f32 %v3476, %v3436
        %v3478 = vadd.f32 %v3477, %v3438
        %v3479 = vadd.f32 %v3478, %v3440
        %v3480 = vadd.f32 %v3479, %v3442
        %v3481 = vadd.f32 %v3480, %v3444
        %v3482 = vadd.f32 %v3481, %v3446
        %v3483 = vadd.f32 %v3482, %v3448
        %v3484 = vadd.f32 %v3483, %v3450
        %v3485 = vadd.f32 %v3484, %v3452
        %v3486 = vadd.f32 %v3485, %v3454
        %v3487 = vrot.slane %v3486, 4
        %v3488 = vadd.f32 %v3486, %v3487
        %v3489 = vrot.slane %v3488, 2
        %v3490 = vadd.f32 %v3488, %v3489
        %v3491 = vrot.slane %v3490, 1
        %v3492 = vadd.f32 %v3490, %v3491
        %v3493 = vadd.f32 %v3393, %v3395
        %v3494 = vadd.f32 %v3493, %v3397
        %v3495 = vadd.f32 %v3494, %v3399
        %v3496 = vadd.f32 %v3495, %v3401
        %v3497 = vadd.f32 %v3496, %v3403
        %v3498 = vadd.f32 %v3497, %v3405
        %v3499 = vadd.f32 %v3498, %v3407
        %v3500 = vadd.f32 %v3499, %v3409
        %v3501 = vadd.f32 %v3500, %v3411
        %v3502 = vadd.f32 %v3501, %v3413
        %v3503 = vadd.f32 %v3502, %v3415
        %v3504 = vadd.f32 %v3503, %v3417
        %v3505 = vadd.f32 %v3504, %v3419
        %v3506 = vadd.f32 %v3505, %v3421
        %v3507 = vadd.f32 %v3506, %v3423
        %v3508 = vadd.f32 %v3507, %v3425
        %v3509 = vadd.f32 %v3508, %v3427
        %v3510 = vadd.f32 %v3509, %v3429
        %v3511 = vadd.f32 %v3510, %v3431
        %v3512 = vadd.f32 %v3511, %v3433
        %v3513 = vadd.f32 %v3512, %v3435
        %v3514 = vadd.f32 %v3513, %v3437
        %v3515 = vadd.f32 %v3514, %v3439
        %v3516 = vadd.f32 %v3515, %v3441
        %v3517 = vadd.f32 %v3516, %v3443
        %v3518 = vadd.f32 %v3517, %v3445
        %v3519 = vadd.f32 %v3518, %v3447
        %v3520 = vadd.f32 %v3519, %v3449
        %v3521 = vadd.f32 %v3520, %v3451
        %v3522 = vadd.f32 %v3521, %v3453
        %v3523 = vadd.f32 %v3522, %v3455
        %v3524 = vrot.slane %v3523, 4
        %v3525 = vadd.f32 %v3523, %v3524
        %v3526 = vrot.slane %v3525, 2
        %v3527 = vadd.f32 %v3525, %v3526
        %v3528 = vrot.slane %v3527, 1
        %v3529 = vadd.f32 %v3527, %v3528
        %v3530 = vrcp.pop 256.0
        %v3531 = vmul.f32 %v3492, %v3530
        %v3532 = vmul.f32 %v3529, %v3530
        %v3533 = vld [vmem:[%s10] sm:$0xff]
        %v3534 = vld [vmem:[%s10 + $0x8] sm:$0xff]
        %v3535 = vld [vmem:[%s10 + $0x10] sm:$0xff]
        %v3536 = vld [vmem:[%s10 + $0x18] sm:$0xff]
        %v3537 = vld [vmem:[%s10 + $0x20] sm:$0xff]
        %v3538 = vld [vmem:[%s10 + $0x28] sm:$0xff]
        %v3539 = vld [vmem:[%s10 + $0x30] sm:$0xff]
        %v3540 = vld [vmem:[%s10 + $0x38] sm:$0xff]
        %v3541 = vld [vmem:[%s10 + $0x40] sm:$0xff]
        %v3542 = vld [vmem:[%s10 + $0x48] sm:$0xff]
        %v3543 = vld [vmem:[%s10 + $0x50] sm:$0xff]
        %v3544 = vld [vmem:[%s10 + $0x58] sm:$0xff]
        %v3545 = vld [vmem:[%s10 + $0x60] sm:$0xff]
        %v3546 = vld [vmem:[%s10 + $0x68] sm:$0xff]
        %v3547 = vld [vmem:[%s10 + $0x70] sm:$0xff]
        %v3548 = vld [vmem:[%s10 + $0x78] sm:$0xff]
        %v3549 = vld [vmem:[%s10 + $0x80] sm:$0xff]
        %v3550 = vld [vmem:[%s10 + $0x88] sm:$0xff]
        %v3551 = vld [vmem:[%s10 + $0x90] sm:$0xff]
        %v3552 = vld [vmem:[%s10 + $0x98] sm:$0xff]
        %v3553 = vld [vmem:[%s10 + $0xa0] sm:$0xff]
        %v3554 = vld [vmem:[%s10 + $0xa8] sm:$0xff]
        %v3555 = vld [vmem:[%s10 + $0xb0] sm:$0xff]
        %v3556 = vld [vmem:[%s10 + $0xb8] sm:$0xff]
        %v3557 = vld [vmem:[%s10 + $0xc0] sm:$0xff]
        %v3558 = vld [vmem:[%s10 + $0xc8] sm:$0xff]
        %v3559 = vld [vmem:[%s10 + $0xd0] sm:$0xff]
        %v3560 = vld [vmem:[%s10 + $0xd8] sm:$0xff]
        %v3561 = vld [vmem:[%s10 + $0xe0] sm:$0xff]
        %v3562 = vld [vmem:[%s10 + $0xe8] sm:$0xff]
        %v3563 = vld [vmem:[%s10 + $0xf0] sm:$0xff]
        %v3564 = vld [vmem:[%s10 + $0xf8] sm:$0xff]
        %v3565 = vld [vmem:[%s11] sm:$0x1]
        %3566 = vmatprep.subr.mxu0 0.0
        %3567 = vmatpush1.msra.mxu0 %v3533
        %3568 = vmatprep.subr.mxu0 0.0
        %3569 = vmatpush1.msra.mxu0 %v3534
        %3570 = vmatprep.subr.mxu0 0.0
        %3571 = vmatpush1.msra.mxu0 %v3535
        %3572 = vmatprep.subr.mxu0 0.0
        %3573 = vmatpush1.msra.mxu0 %v3536
        %3574 = vmatprep.subr.mxu0 0.0
        %3575 = vmatpush1.msra.mxu0 %v3537
        %3576 = vmatprep.subr.mxu0 0.0
        %3577 = vmatpush1.msra.mxu0 %v3538
        %3578 = vmatprep.subr.mxu0 0.0
        %3579 = vmatpush1.msra.mxu0 %v3539
        %3580 = vmatprep.subr.mxu0 0.0
        %3581 = vmatpush1.msra.mxu0 %v3540
        %3582 = vmatprep.subr.mxu0 0.0
        %3583 = vmatpush1.msra.mxu0 %v3541
        %3584 = vmatprep.subr.mxu0 0.0
        %3585 = vmatpush1.msra.mxu0 %v3542
        %3586 = vmatprep.subr.mxu0 0.0
        %3587 = vmatpush1.msra.mxu0 %v3543
        %3588 = vmatprep.subr.mxu0 0.0
        %3589 = vmatpush1.msra.mxu0 %v3544
        %3590 = vmatprep.subr.mxu0 0.0
        %3591 = vmatpush1.msra.mxu0 %v3545
        %3592 = vmatprep.subr.mxu0 0.0
        %3593 = vmatpush1.msra.mxu0 %v3546
        %3594 = vmatprep.subr.mxu0 0.0
        %3595 = vmatpush1.msra.mxu0 %v3547
        %3596 = vmatprep.subr.mxu0 0.0
        %3597 = vmatpush1.msra.mxu0 %v3548
        %3598 = vmatprep.subr.mxu0 0.0
        %3599 = vmatpush1.msra.mxu0 %v3549
        %3600 = vmatprep.subr.mxu0 0.0
        %3601 = vmatpush1.msra.mxu0 %v3550
        %3602 = vmatprep.subr.mxu0 0.0
        %3603 = vmatpush1.msra.mxu0 %v3551
        %3604 = vmatprep.subr.mxu0 0.0
        %3605 = vmatpush1.msra.mxu0 %v3552
        %3606 = vmatprep.subr.mxu0 0.0
        %3607 = vmatpush1.msra.mxu0 %v3553
        %3608 = vmatprep.subr.mxu0 0.0
        %3609 = vmatpush1.msra.mxu0 %v3554
        %3610 = vmatprep.subr.mxu0 0.0
        %3611 = vmatpush1.msra.mxu0 %v3555
        %3612 = vmatprep.subr.mxu0 0.0
        %3613 = vmatpush1.msra.mxu0 %v3556
        %3614 = vmatprep.subr.mxu0 0.0
        %3615 = vmatpush1.msra.mxu0 %v3557
        %3616 = vmatprep.subr.mxu0 0.0
        %3617 = vmatpush1.msra.mxu0 %v3558
        %3618 = vmatprep.subr.mxu0 0.0
        %3619 = vmatpush1.msra.mxu0 %v3559
        %3620 = vmatprep.subr.mxu0 0.0
        %3621 = vmatpush1.msra.mxu0 %v3560
        %3622 = vmatprep.subr.mxu0 0.0
        %3623 = vmatpush1.msra.mxu0 %v3561
        %3624 = vmatprep.subr.mxu0 0.0
        %3625 = vmatpush1.msra.mxu0 %v3562
        %3626 = vmatprep.subr.mxu0 0.0
        %3627 = vmatpush1.msra.mxu0 %v3563
        %3628 = vmatprep.subr.mxu0 0.0
        %3629 = vmatpush1.msra.mxu0 %v3564
        %3630 = vmatprep.mubr.f32.mxu0 %v3532
        %3631 = vmatmul.mubr.f32.gmra.mrb[0].mxu0 %v3531
        %v3632 = vpop.f32.mrb[0].mxu0
        %v3633 = vadd.f32 %v3565, %v3632
        %v3634 = vpop.f32.mrb[0].mxu0
        %3635 = vdwg.mxu0
        %v3636 = vmax.f32 %v3633, 0.0
        %v3637 = vld [vmem:[%s12] sm:$0xff]
        %v3638 = vld [vmem:[%s12 + $0x8] sm:$0xff]
        %v3639 = vld [vmem:[%s12 + $0x10] sm:$0xff]
        %v3640 = vld [vmem:[%s12 + $0x18] sm:$0xff]
        %v3641 = vld [vmem:[%s13] sm:$0x3]
        %v3643 = vlaneseq
        %v3644 = vshrl.u32 %v3643, 7
        %v3645 = vsub.s32 0, %v3644
        %v3646 = vrot.slane %v3641, %v3645
        %v3647 = vlaneseq
        %v3648 = vshrl.u32 %v3647, 7
        %v3649 = vsub.s32 1, %v3648
        %v3650 = vrot.slane %v3641, %v3649
        %vm3653 = vcmask 130048
        %v3655 = vsel %vm3653, %v3636, 0
        %3657 = vmatprep.subr.mxu0 %v3638
        %3658 = vmatpush1.msra.mxu0 %v3637
        %3659 = vmatprep.subr.mxu0 %v3640
        %3660 = vmatpush1.msra.mxu0 %v3639
        %3661 = vmatprep.subr.mxu0 0.0
        %3662 = vmatpush1.msra.mxu0 0.0
        %3663 = vmatprep.subr.mxu0 0.0
        %3664 = vmatpush1.msra.mxu0 0.0
        %3665 = vmatprep.subr.mxu0 0.0
        %3666 = vmatpush1.msra.mxu0 0.0
        %3667 = vmatprep.subr.mxu0 0.0
        %3668 = vmatpush1.msra.mxu0 0.0
        %3669 = vmatprep.subr.mxu0 0.0
        %3670 = vmatpush1.msra.mxu0 0.0
        %3671 = vmatprep.subr.mxu0 0.0
        %3672 = vmatpush1.msra.mxu0 0.0
        %3673 = vmatprep.subr.mxu0 0.0
        %3674 = vmatpush1.msra.mxu0 0.0
        %3675 = vmatprep.subr.mxu0 0.0
        %3676 = vmatpush1.msra.mxu0 0.0
        %3677 = vmatprep.subr.mxu0 0.0
        %3678 = vmatpush1.msra.mxu0 0.0
        %3679 = vmatprep.subr.mxu0 0.0
        %3680 = vmatpush1.msra.mxu0 0.0
        %3681 = vmatprep.subr.mxu0 0.0
        %3682 = vmatpush1.msra.mxu0 0.0
        %3683 = vmatprep.subr.mxu0 0.0
        %3684 = vmatpush1.msra.mxu0 0.0
        %3685 = vmatprep.subr.mxu0 0.0
        %3686 = vmatpush1.msra.mxu0 0.0
        %3687 = vmatprep.subr.mxu0 0.0
        %3688 = vmatpush1.msra.mxu0 0.0
        %3689 = vmatprep.subr.mxu0 0.0
        %3690 = vmatpush1.msra.mxu0 0.0
        %3691 = vmatprep.subr.mxu0 0.0
        %3692 = vmatpush1.msra.mxu0 0.0
        %3693 = vmatprep.subr.mxu0 0.0
        %3694 = vmatpush1.msra.mxu0 0.0
        %3695 = vmatprep.subr.mxu0 0.0
        %3696 = vmatpush1.msra.mxu0 0.0
        %3697 = vmatprep.subr.mxu0 0.0
        %3698 = vmatpush1.msra.mxu0 0.0
        %3699 = vmatprep.subr.mxu0 0.0
        %3700 = vmatpush1.msra.mxu0 0.0
        %3701 = vmatprep.subr.mxu0 0.0
        %3702 = vmatpush1.msra.mxu0 0.0
        %3703 = vmatprep.subr.mxu0 0.0
        %3704 = vmatpush1.msra.mxu0 0.0
        %3705 = vmatprep.subr.mxu0 0.0
        %3706 = vmatpush1.msra.mxu0 0.0
        %3707 = vmatprep.subr.mxu0 0.0
        %3708 = vmatpush1.msra.mxu0 0.0
        %3709 = vmatprep.subr.mxu0 0.0
        %3710 = vmatpush1.msra.mxu0 0.0
        %3711 = vmatprep.subr.mxu0 0.0
        %3712 = vmatpush1.msra.mxu0 0.0
        %3713 = vmatprep.subr.mxu0 0.0
        %3714 = vmatpush1.msra.mxu0 0.0
        %3715 = vmatprep.subr.mxu0 0.0
        %3716 = vmatpush1.msra.mxu0 0.0
        %3717 = vmatprep.subr.mxu0 0.0
        %3718 = vmatpush1.msra.mxu0 0.0
        %3719 = vmatprep.subr.mxu0 0.0
        %3720 = vmatpush1.msra.mxu0 0.0
        %3721 = vmatprep.mubr.f32.mxu0 0.0
        %3722 = vmatmul.mubr.f32.gmra.mrb[0].mxu0 %v3655
        %v3723 = vpop.f32.mrb[0].mxu0
        %v3724 = vadd.f32 %v3646, %v3723
        %v3725 = vpop.f32.mrb[0].mxu0
        %v3726 = vadd.f32 %v3650, %v3725
        %3727 = vdwg.mxu0
        %v3728 = vxor.u32 %v3724, 2147483648
        %v3729 = vxor.u32 %v3726, 2147483648
        %v3730 = vmul.f32 %v3728, 1.442695
        %v3731 = vpow.pop %v3730
        %v3732 = vmul.f32 %v3729, 1.442695
        %v3733 = vpow.pop %v3732
        %v3734 = vadd.f32 %v3731, 1.0
        %v3735 = vadd.f32 %v3733, 1.0
        %v3736 = vrcp.pop %v3734
        %v3737 = vmul.f32 1.0, %v3736
        %v3738 = vrcp.pop %v3735
        %v3739 = vmul.f32 1.0, %v3738
        %v3740 = vld [vmem:[%s441] sm:$0xff]
        %v3741 = vld [vmem:[%s441 + $0x8] sm:$0xff]
        %v3742 = vld [vmem:[%s441 + $0x10] sm:$0xff]
        %v3743 = vld [vmem:[%s441 + $0x18] sm:$0xff]
        %v3744 = vld [vmem:[%s441 + $0x20] sm:$0xff]
        %v3745 = vld [vmem:[%s441 + $0x28] sm:$0xff]
        %v3746 = vld [vmem:[%s441 + $0x30] sm:$0xff]
        %v3747 = vld [vmem:[%s441 + $0x38] sm:$0xff]
        %v3748 = vld [vmem:[%s441 + $0x40] sm:$0xff]
        %v3749 = vld [vmem:[%s441 + $0x48] sm:$0xff]
        %v3750 = vld [vmem:[%s441 + $0x50] sm:$0xff]
        %v3751 = vld [vmem:[%s441 + $0x58] sm:$0xff]
        %v3752 = vld [vmem:[%s441 + $0x60] sm:$0xff]
        %v3753 = vld [vmem:[%s441 + $0x68] sm:$0xff]
        %v3754 = vld [vmem:[%s441 + $0x70] sm:$0xff]
        %v3755 = vld [vmem:[%s441 + $0x78] sm:$0xff]
        %v3756 = vld [vmem:[%s441 + $0x80] sm:$0xff]
        %v3757 = vld [vmem:[%s441 + $0x88] sm:$0xff]
        %v3758 = vld [vmem:[%s441 + $0x90] sm:$0xff]
        %v3759 = vld [vmem:[%s441 + $0x98] sm:$0xff]
        %v3760 = vld [vmem:[%s441 + $0xa0] sm:$0xff]
        %v3761 = vld [vmem:[%s441 + $0xa8] sm:$0xff]
        %v3762 = vld [vmem:[%s441 + $0xb0] sm:$0xff]
        %v3763 = vld [vmem:[%s441 + $0xb8] sm:$0xff]
        %v3764 = vld [vmem:[%s441 + $0xc0] sm:$0xff]
        %v3765 = vld [vmem:[%s441 + $0xc8] sm:$0xff]
        %v3766 = vld [vmem:[%s441 + $0xd0] sm:$0xff]
        %v3767 = vld [vmem:[%s441 + $0xd8] sm:$0xff]
        %v3768 = vld [vmem:[%s441 + $0xe0] sm:$0xff]
        %v3769 = vld [vmem:[%s441 + $0xe8] sm:$0xff]
        %v3770 = vld [vmem:[%s441 + $0xf0] sm:$0xff]
        %v3771 = vld [vmem:[%s441 + $0xf8] sm:$0xff]
        %v3772 = vld [vmem:[%s441 + $0x100] sm:$0xff]
        %v3773 = vld [vmem:[%s441 + $0x108] sm:$0xff]
        %v3774 = vld [vmem:[%s441 + $0x110] sm:$0xff]
        %v3775 = vld [vmem:[%s441 + $0x118] sm:$0xff]
        %v3776 = vld [vmem:[%s441 + $0x120] sm:$0xff]
        %v3777 = vld [vmem:[%s441 + $0x128] sm:$0xff]
        %v3778 = vld [vmem:[%s441 + $0x130] sm:$0xff]
        %v3779 = vld [vmem:[%s441 + $0x138] sm:$0xff]
        %v3780 = vld [vmem:[%s441 + $0x140] sm:$0xff]
        %v3781 = vld [vmem:[%s441 + $0x148] sm:$0xff]
        %v3782 = vld [vmem:[%s441 + $0x150] sm:$0xff]
        %v3783 = vld [vmem:[%s441 + $0x158] sm:$0xff]
        %v3784 = vld [vmem:[%s441 + $0x160] sm:$0xff]
        %v3785 = vld [vmem:[%s441 + $0x168] sm:$0xff]
        %v3786 = vld [vmem:[%s441 + $0x170] sm:$0xff]
        %v3787 = vld [vmem:[%s441 + $0x178] sm:$0xff]
        %v3788 = vld [vmem:[%s441 + $0x180] sm:$0xff]
        %v3789 = vld [vmem:[%s441 + $0x188] sm:$0xff]
        %v3790 = vld [vmem:[%s441 + $0x190] sm:$0xff]
        %v3791 = vld [vmem:[%s441 + $0x198] sm:$0xff]
        %v3792 = vld [vmem:[%s441 + $0x1a0] sm:$0xff]
        %v3793 = vld [vmem:[%s441 + $0x1a8] sm:$0xff]
        %v3794 = vld [vmem:[%s441 + $0x1b0] sm:$0xff]
        %v3795 = vld [vmem:[%s441 + $0x1b8] sm:$0xff]
        %v3796 = vld [vmem:[%s441 + $0x1c0] sm:$0xff]
        %v3797 = vld [vmem:[%s441 + $0x1c8] sm:$0xff]
        %v3798 = vld [vmem:[%s441 + $0x1d0] sm:$0xff]
        %v3799 = vld [vmem:[%s441 + $0x1d8] sm:$0xff]
        %v3800 = vld [vmem:[%s441 + $0x1e0] sm:$0xff]
        %v3801 = vld [vmem:[%s441 + $0x1e8] sm:$0xff]
        %v3802 = vld [vmem:[%s441 + $0x1f0] sm:$0xff]
        %v3803 = vld [vmem:[%s441 + $0x1f8] sm:$0xff]
        %v3804 = vlaneseq
        %v3805 = vshrl.u32 %v3804, 7
        %v3806 = vsub.s32 0, %v3805
        %v3807 = vrot.slane %v3737, %v3806
        %v3808 = vlaneseq
        %v3809 = vshrl.u32 %v3808, 7
        %v3810 = vsub.s32 0, %v3809
        %v3811 = vrot.slane %v3739, %v3810
        %v3812 = vmul.f32 %v3392, %v3807
        %v3813 = vmul.f32 %v3393, %v3811
        %v3814 = vmul.f32 %v3394, %v3807
        %v3815 = vmul.f32 %v3395, %v3811
        %v3816 = vmul.f32 %v3396, %v3807
        %v3817 = vmul.f32 %v3397, %v3811
        %v3818 = vmul.f32 %v3398, %v3807
        %v3819 = vmul.f32 %v3399, %v3811
        %v3820 = vmul.f32 %v3400, %v3807
        %v3821 = vmul.f32 %v3401, %v3811
        %v3822 = vmul.f32 %v3402, %v3807
        %v3823 = vmul.f32 %v3403, %v3811
        %v3824 = vmul.f32 %v3404, %v3807
        %v3825 = vmul.f32 %v3405, %v3811
        %v3826 = vmul.f32 %v3406, %v3807
        %v3827 = vmul.f32 %v3407, %v3811
        %v3828 = vmul.f32 %v3408, %v3807
        %v3829 = vmul.f32 %v3409, %v3811
        %v3830 = vmul.f32 %v3410, %v3807
        %v3831 = vmul.f32 %v3411, %v3811
        %v3832 = vmul.f32 %v3412, %v3807
        %v3833 = vmul.f32 %v3413, %v3811
        %v3834 = vmul.f32 %v3414, %v3807
        %v3835 = vmul.f32 %v3415, %v3811
        %v3836 = vmul.f32 %v3416, %v3807
        %v3837 = vmul.f32 %v3417, %v3811
        %v3838 = vmul.f32 %v3418, %v3807
        %v3839 = vmul.f32 %v3419, %v3811
        %v3840 = vmul.f32 %v3420, %v3807
        %v3841 = vmul.f32 %v3421, %v3811
        %v3842 = vmul.f32 %v3422, %v3807
        %v3843 = vmul.f32 %v3423, %v3811
        %v3844 = vmul.f32 %v3424, %v3807
        %v3845 = vmul.f32 %v3425, %v3811
        %v3846 = vmul.f32 %v3426, %v3807
        %v3847 = vmul.f32 %v3427, %v3811
        %v3848 = vmul.f32 %v3428, %v3807
        %v3849 = vmul.f32 %v3429, %v3811
        %v3850 = vmul.f32 %v3430, %v3807
        %v3851 = vmul.f32 %v3431, %v3811
        %v3852 = vmul.f32 %v3432, %v3807
        %v3853 = vmul.f32 %v3433, %v3811
        %v3854 = vmul.f32 %v3434, %v3807
        %v3855 = vmul.f32 %v3435, %v3811
        %v3856 = vmul.f32 %v3436, %v3807
        %v3857 = vmul.f32 %v3437, %v3811
        %v3858 = vmul.f32 %v3438, %v3807
        %v3859 = vmul.f32 %v3439, %v3811
        %v3860 = vmul.f32 %v3440, %v3807
        %v3861 = vmul.f32 %v3441, %v3811
        %v3862 = vmul.f32 %v3442, %v3807
        %v3863 = vmul.f32 %v3443, %v3811
        %v3864 = vmul.f32 %v3444, %v3807
        %v3865 = vmul.f32 %v3445, %v3811
        %v3866 = vmul.f32 %v3446, %v3807
        %v3867 = vmul.f32 %v3447, %v3811
        %v3868 = vmul.f32 %v3448, %v3807
        %v3869 = vmul.f32 %v3449, %v3811
        %v3870 = vmul.f32 %v3450, %v3807
        %v3871 = vmul.f32 %v3451, %v3811
        %v3872 = vmul.f32 %v3452, %v3807
        %v3873 = vmul.f32 %v3453, %v3811
        %v3874 = vmul.f32 %v3454, %v3807
        %v3875 = vmul.f32 %v3455, %v3811
        %v3876 = vadd.f32 %v3812, %v3740
        %v3877 = vadd.f32 %v3813, %v3741
        %v3878 = vadd.f32 %v3814, %v3742
        %v3879 = vadd.f32 %v3815, %v3743
        %v3880 = vadd.f32 %v3816, %v3744
        %v3881 = vadd.f32 %v3817, %v3745
        %v3882 = vadd.f32 %v3818, %v3746
        %v3883 = vadd.f32 %v3819, %v3747
        %v3884 = vadd.f32 %v3820, %v3748
        %v3885 = vadd.f32 %v3821, %v3749
        %v3886 = vadd.f32 %v3822, %v3750
        %v3887 = vadd.f32 %v3823, %v3751
        %v3888 = vadd.f32 %v3824, %v3752
        %v3889 = vadd.f32 %v3825, %v3753
        %v3890 = vadd.f32 %v3826, %v3754
        %v3891 = vadd.f32 %v3827, %v3755
        %v3892 = vadd.f32 %v3828, %v3756
        %v3893 = vadd.f32 %v3829, %v3757
        %v3894 = vadd.f32 %v3830, %v3758
        %v3895 = vadd.f32 %v3831, %v3759
        %v3896 = vadd.f32 %v3832, %v3760
        %v3897 = vadd.f32 %v3833, %v3761
        %v3898 = vadd.f32 %v3834, %v3762
        %v3899 = vadd.f32 %v3835, %v3763
        %v3900 = vadd.f32 %v3836, %v3764
        %v3901 = vadd.f32 %v3837, %v3765
        %v3902 = vadd.f32 %v3838, %v3766
        %v3903 = vadd.f32 %v3839, %v3767
        %v3904 = vadd.f32 %v3840, %v3768
        %v3905 = vadd.f32 %v3841, %v3769
        %v3906 = vadd.f32 %v3842, %v3770
        %v3907 = vadd.f32 %v3843, %v3771
        %v3908 = vadd.f32 %v3844, %v3772
        %v3909 = vadd.f32 %v3845, %v3773
        %v3910 = vadd.f32 %v3846, %v3774
        %v3911 = vadd.f32 %v3847, %v3775
        %v3912 = vadd.f32 %v3848, %v3776
        %v3913 = vadd.f32 %v3849, %v3777
        %v3914 = vadd.f32 %v3850, %v3778
        %v3915 = vadd.f32 %v3851, %v3779
        %v3916 = vadd.f32 %v3852, %v3780
        %v3917 = vadd.f32 %v3853, %v3781
        %v3918 = vadd.f32 %v3854, %v3782
        %v3919 = vadd.f32 %v3855, %v3783
        %v3920 = vadd.f32 %v3856, %v3784
        %v3921 = vadd.f32 %v3857, %v3785
        %v3922 = vadd.f32 %v3858, %v3786
        %v3923 = vadd.f32 %v3859, %v3787
        %v3924 = vadd.f32 %v3860, %v3788
        %v3925 = vadd.f32 %v3861, %v3789
        %v3926 = vadd.f32 %v3862, %v3790
        %v3927 = vadd.f32 %v3863, %v3791
        %v3928 = vadd.f32 %v3864, %v3792
        %v3929 = vadd.f32 %v3865, %v3793
        %v3930 = vadd.f32 %v3866, %v3794
        %v3931 = vadd.f32 %v3867, %v3795
        %v3932 = vadd.f32 %v3868, %v3796
        %v3933 = vadd.f32 %v3869, %v3797
        %v3934 = vadd.f32 %v3870, %v3798
        %v3935 = vadd.f32 %v3871, %v3799
        %v3936 = vadd.f32 %v3872, %v3800
        %v3937 = vadd.f32 %v3873, %v3801
        %v3938 = vadd.f32 %v3874, %v3802
        %v3939 = vadd.f32 %v3875, %v3803
        %v3940 = vmax.f32 %v3876, 0.0
        %v3941 = vmax.f32 %v3877, 0.0
        %v3942 = vmax.f32 %v3878, 0.0
        %v3943 = vmax.f32 %v3879, 0.0
        %v3944 = vmax.f32 %v3880, 0.0
        %v3945 = vmax.f32 %v3881, 0.0
        %v3946 = vmax.f32 %v3882, 0.0
        %v3947 = vmax.f32 %v3883, 0.0
        %v3948 = vmax.f32 %v3884, 0.0
        %v3949 = vmax.f32 %v3885, 0.0
        %v3950 = vmax.f32 %v3886, 0.0
        %v3951 = vmax.f32 %v3887, 0.0
        %v3952 = vmax.f32 %v3888, 0.0
        %v3953 = vmax.f32 %v3889, 0.0
        %v3954 = vmax.f32 %v3890, 0.0
        %v3955 = vmax.f32 %v3891, 0.0
        %v3956 = vmax.f32 %v3892, 0.0
        %v3957 = vmax.f32 %v3893, 0.0
        %v3958 = vmax.f32 %v3894, 0.0
        %v3959 = vmax.f32 %v3895, 0.0
        %v3960 = vmax.f32 %v3896, 0.0
        %v3961 = vmax.f32 %v3897, 0.0
        %v3962 = vmax.f32 %v3898, 0.0
        %v3963 = vmax.f32 %v3899, 0.0
        %v3964 = vmax.f32 %v3900, 0.0
        %v3965 = vmax.f32 %v3901, 0.0
        %v3966 = vmax.f32 %v3902, 0.0
        %v3967 = vmax.f32 %v3903, 0.0
        %v3968 = vmax.f32 %v3904, 0.0
        %v3969 = vmax.f32 %v3905, 0.0
        %v3970 = vmax.f32 %v3906, 0.0
        %v3971 = vmax.f32 %v3907, 0.0
        %v3972 = vmax.f32 %v3908, 0.0
        %v3973 = vmax.f32 %v3909, 0.0
        %v3974 = vmax.f32 %v3910, 0.0
        %v3975 = vmax.f32 %v3911, 0.0
        %v3976 = vmax.f32 %v3912, 0.0
        %v3977 = vmax.f32 %v3913, 0.0
        %v3978 = vmax.f32 %v3914, 0.0
        %v3979 = vmax.f32 %v3915, 0.0
        %v3980 = vmax.f32 %v3916, 0.0
        %v3981 = vmax.f32 %v3917, 0.0
        %v3982 = vmax.f32 %v3918, 0.0
        %v3983 = vmax.f32 %v3919, 0.0
        %v3984 = vmax.f32 %v3920, 0.0
        %v3985 = vmax.f32 %v3921, 0.0
        %v3986 = vmax.f32 %v3922, 0.0
        %v3987 = vmax.f32 %v3923, 0.0
        %v3988 = vmax.f32 %v3924, 0.0
        %v3989 = vmax.f32 %v3925, 0.0
        %v3990 = vmax.f32 %v3926, 0.0
        %v3991 = vmax.f32 %v3927, 0.0
        %v3992 = vmax.f32 %v3928, 0.0
        %v3993 = vmax.f32 %v3929, 0.0
        %v3994 = vmax.f32 %v3930, 0.0
        %v3995 = vmax.f32 %v3931, 0.0
        %v3996 = vmax.f32 %v3932, 0.0
        %v3997 = vmax.f32 %v3933, 0.0
        %v3998 = vmax.f32 %v3934, 0.0
        %v3999 = vmax.f32 %v3935, 0.0
        %v4000 = vmax.f32 %v3936, 0.0
        %v4001 = vmax.f32 %v3937, 0.0
        %v4002 = vmax.f32 %v3938, 0.0
        %v4003 = vmax.f32 %v3939, 0.0
        %4004 = vst [vmem:[%s485] sm:$0xff] %v3940
        %4005 = vst [vmem:[%s485 + $0x8] sm:$0xff] %v3941
        %4006 = vst [vmem:[%s485 + $0x10] sm:$0xff] %v3942
        %4007 = vst [vmem:[%s485 + $0x18] sm:$0xff] %v3943
        %4008 = vst [vmem:[%s485 + $0x20] sm:$0xff] %v3944
        %4009 = vst [vmem:[%s485 + $0x28] sm:$0xff] %v3945
        %4010 = vst [vmem:[%s485 + $0x30] sm:$0xff] %v3946
        %4011 = vst [vmem:[%s485 + $0x38] sm:$0xff] %v3947
        %4012 = vst [vmem:[%s485 + $0x40] sm:$0xff] %v3948
        %4013 = vst [vmem:[%s485 + $0x48] sm:$0xff] %v3949
        %4014 = vst [vmem:[%s485 + $0x50] sm:$0xff] %v3950
        %4015 = vst [vmem:[%s485 + $0x58] sm:$0xff] %v3951
        %4016 = vst [vmem:[%s485 + $0x60] sm:$0xff] %v3952
        %4017 = vst [vmem:[%s485 + $0x68] sm:$0xff] %v3953
        %4018 = vst [vmem:[%s485 + $0x70] sm:$0xff] %v3954
        %4019 = vst [vmem:[%s485 + $0x78] sm:$0xff] %v3955
        %4020 = vst [vmem:[%s485 + $0x80] sm:$0xff] %v3956
        %4021 = vst [vmem:[%s485 + $0x88] sm:$0xff] %v3957
        %4022 = vst [vmem:[%s485 + $0x90] sm:$0xff] %v3958
        %4023 = vst [vmem:[%s485 + $0x98] sm:$0xff] %v3959
        %4024 = vst [vmem:[%s485 + $0xa0] sm:$0xff] %v3960
        %4025 = vst [vmem:[%s485 + $0xa8] sm:$0xff] %v3961
        %4026 = vst [vmem:[%s485 + $0xb0] sm:$0xff] %v3962
        %4027 = vst [vmem:[%s485 + $0xb8] sm:$0xff] %v3963
        %4028 = vst [vmem:[%s485 + $0xc0] sm:$0xff] %v3964
        %4029 = vst [vmem:[%s485 + $0xc8] sm:$0xff] %v3965
        %4030 = vst [vmem:[%s485 + $0xd0] sm:$0xff] %v3966
        %4031 = vst [vmem:[%s485 + $0xd8] sm:$0xff] %v3967
        %4032 = vst [vmem:[%s485 + $0xe0] sm:$0xff] %v3968
        %4033 = vst [vmem:[%s485 + $0xe8] sm:$0xff] %v3969
        %4034 = vst [vmem:[%s485 + $0xf0] sm:$0xff] %v3970
        %4035 = vst [vmem:[%s485 + $0xf8] sm:$0xff] %v3971
        %4036 = vst [vmem:[%s485 + $0x100] sm:$0xff] %v3972
        %4037 = vst [vmem:[%s485 + $0x108] sm:$0xff] %v3973
        %4038 = vst [vmem:[%s485 + $0x110] sm:$0xff] %v3974
        %4039 = vst [vmem:[%s485 + $0x118] sm:$0xff] %v3975
        %4040 = vst [vmem:[%s485 + $0x120] sm:$0xff] %v3976
        %4041 = vst [vmem:[%s485 + $0x128] sm:$0xff] %v3977
        %4042 = vst [vmem:[%s485 + $0x130] sm:$0xff] %v3978
        %4043 = vst [vmem:[%s485 + $0x138] sm:$0xff] %v3979
        %4044 = vst [vmem:[%s485 + $0x140] sm:$0xff] %v3980
        %4045 = vst [vmem:[%s485 + $0x148] sm:$0xff] %v3981
        %4046 = vst [vmem:[%s485 + $0x150] sm:$0xff] %v3982
        %4047 = vst [vmem:[%s485 + $0x158] sm:$0xff] %v3983
        %4048 = vst [vmem:[%s485 + $0x160] sm:$0xff] %v3984
        %4049 = vst [vmem:[%s485 + $0x168] sm:$0xff] %v3985
        %4050 = vst [vmem:[%s485 + $0x170] sm:$0xff] %v3986
        %4051 = vst [vmem:[%s485 + $0x178] sm:$0xff] %v3987
        %4052 = vst [vmem:[%s485 + $0x180] sm:$0xff] %v3988
        %4053 = vst [vmem:[%s485 + $0x188] sm:$0xff] %v3989
        %4054 = vst [vmem:[%s485 + $0x190] sm:$0xff] %v3990
        %4055 = vst [vmem:[%s485 + $0x198] sm:$0xff] %v3991
        %4056 = vst [vmem:[%s485 + $0x1a0] sm:$0xff] %v3992
        %4057 = vst [vmem:[%s485 + $0x1a8] sm:$0xff] %v3993
        %4058 = vst [vmem:[%s485 + $0x1b0] sm:$0xff] %v3994
        %4059 = vst [vmem:[%s485 + $0x1b8] sm:$0xff] %v3995
        %4060 = vst [vmem:[%s485 + $0x1c0] sm:$0xff] %v3996
        %4061 = vst [vmem:[%s485 + $0x1c8] sm:$0xff] %v3997
        %4062 = vst [vmem:[%s485 + $0x1d0] sm:$0xff] %v3998
        %4063 = vst [vmem:[%s485 + $0x1d8] sm:$0xff] %v3999
        %4064 = vst [vmem:[%s485 + $0x1e0] sm:$0xff] %v4000
        %4065 = vst [vmem:[%s485 + $0x1e8] sm:$0xff] %v4001
        %4066 = vst [vmem:[%s485 + $0x1f0] sm:$0xff] %v4002
        %4067 = vst [vmem:[%s485 + $0x1f8] sm:$0xff] %v4003
        %s4068 = sand.u32 %s338, 1
        %s4069 = scalar_lea.sflag [#allocation5], %s4068
        %s4070 = sand.u32 %s338, 1
        %s4071 = smul.addr %s4070, 512
        %s4072 = scalar_lea.vmem [#allocation6], %s4071
        // Predicated region
        $region81: #{tpu_custom_call.1} parent=75 // pred_check
          %p4073 = pneg %p348
        $region82: #{tpu_custom_call.1} parent=75 // pred_check_branch
          %4075 = sbr.rel (%p4073) target = $region84
        $region83: #{tpu_custom_call.1} parent=75 // pred_region
          %s4077 = ssub.s32 8192, 8192
          %4078 = vsyncadd %s4069, %s4077
          %s4079 = smul.addr %s31, 64
          %s4080 = smul.addr %s4079, 128
          %s4081 = scalar_lea.hbm %s14, %s4080
          %s4082 = sshll.u32 %s4072, 4
          %s4083 = int_to_ptr.vmem [resolvable:$true] %s4082
          %4088 = dma.vmem_to_hbm [thread:$0]  %s4083, 8192, %s4081, %s4069, 256, 256, 16
        $region84: #{tpu_custom_call.1} parent=75 // pred_fallthru
          _
      $region76: #{tpu_custom_call.1} parent=5 // pred_fallthru
        _
      %p4089 = scmp.le.s32.totalorder 2, %s26
      // Predicated region
      $region85: #{tpu_custom_call.1} parent=5 // pred_check
        %p4090 = pneg %p4089
      $region86: #{tpu_custom_call.1} parent=5 // pred_check_branch
        %4092 = sbr.rel (%p4090) target = $region88
      $region87: #{tpu_custom_call.1} parent=5 // pred_region
        %s4093 = ssub.s32 %s26, 2
        // Predicated region
        $region89: #{tpu_custom_call.1} parent=87 // pred_check
          %p4094 = pneg %p354
        $region90: #{tpu_custom_call.1} parent=87 // pred_check_branch
          %4096 = sbr.rel (%p4094) target = $region92
        $region91: #{tpu_custom_call.1} parent=87 // pred_region
          %s4097 = sand.u32 %s339, 1
          %s4098 = scalar_lea.sflag [#allocation5], %s4097
          %s4099 = sand.u32 %s339, 1
          %s4100 = smul.addr %s4099, 512
          %s4101 = scalar_lea.vmem [#allocation6], %s4100
          %4102 = dma.done %s4098, 8192
        $region92: #{tpu_custom_call.1} parent=87 // pred_fallthru
          _
      $region88: #{tpu_custom_call.1} parent=5 // pred_fallthru
        _
    $region6: #{tpu_custom_call.1} parent=1 // loop_footer
      %s30 = sadd.s32 1, %s26
    $region7: #{tpu_custom_call.1} parent=1 // loop_footer_branch
      %25 = sbr.rel target = $region3
    $region8: #{tpu_custom_call.1} parent=1 // loop_exit
      _
    %4103 = vsyncpa [#allocation4], 1
    %s4104 = scalar_lea.sflag [#allocation4], 1
    %4105 = vsyncpa %s4104, 1
    %4106 = vsyncpa [#allocation5], 1
    %s4107 = scalar_lea.sflag [#allocation5], 1
    %4108 = vsyncpa %s4107, 1

</llo_original>
